<compile_context>
chip_gen: v7x
topology: tpu7x:2x2x1
jax: 0.10.0
libtpu: 0.0.40
codegen_flags: <defaults>
</compile_context>

<pallas_src>
import jax
import jax.numpy as jnp
import numpy as np
from jax.experimental import pallas as pl
from jax.experimental.pallas import tpu as pltpu


# ------------------------------ Pallas kernel --------------------------------

def _make_fused_kernel(num_levels):
    """Fused FuseLayer1 kernel for a static number of pyramid levels.

    Ref layout per grid step j (lane tile of size T of the H*W axis):
      tb_ref  [K]   SMEM f32   trans biases
      fw_ref  [K]   SMEM f32   fuse 1x1-conv weights
      fb_ref  [1]   SMEM f32   fuse bias
      per level i:
        x_ref [N, C_i*h_i*w_i]      VMEM bf16   (constant across the grid)
        a_ref [C_i*h_i*w_i, T]      VMEM bf16   folded (trans-weight x upsample) tile
      outputs:
        fuse_ref [N, T]  f32,  up_ref_i [N, T]  f32
    """

    def kernel(*refs):
        tb_ref, fw_ref, fb_ref = refs[0:3]                # SMEM scalars
        lvl_refs = refs[3:3 + 2 * num_levels]             # (x_flat, A_tile) per level
        out_refs = refs[3 + 2 * num_levels:]
        fuse_ref = out_refs[0]                            # [N, T]
        up_refs = out_refs[1:]                            # K x [N, T]

        acc = None
        for i in range(num_levels):                       # static unroll over K levels
            x_ref = lvl_refs[2 * i + 0]
            a_ref = lvl_refs[2 * i + 1]

            # trans 1x1-conv + bilinear upsample fused into ONE MXU matmul
            # (bf16 operands, f32 accumulation).
            up = jnp.dot(x_ref[...], a_ref[...],
                         preferred_element_type=jnp.float32)       # [N, T] f32
            # bias commutes through align_corners=True interpolation (rows sum to 1);
            # keep all elementwise math in f32 (v5e VPU has no bf16 path).
            up = up + tb_ref[i]
            up_refs[i][...] = up.astype(up_refs[i].dtype)

            # fuse 1x1 conv: accumulate fuse_w[i] * up_i in f32 registers.
            term = up * fw_ref[i]
            acc = term if acc is None else acc + term

        fuse_ref[...] = (acc + fb_ref[0]).astype(fuse_ref.dtype)

    return kernel


# ------------------------------ JAX wrapper -----------------------------------

def _bilinear_matrix_np(out_size, in_size):
    """[out, in] interpolation matrix, PyTorch align_corners=True. numpy constant."""
    if out_size == 1:
        m = np.zeros((1, in_size), np.float32)
        m[0, 0] = 1.0
        return m
    scale = (in_size - 1) / (out_size - 1)
    src = np.arange(out_size, dtype=np.float64) * scale
    i0 = np.clip(np.floor(src).astype(np.int64), 0, in_size - 1)
    i1 = np.minimum(i0 + 1, in_size - 1)
    frac = (src - i0).astype(np.float32)
    m = np.zeros((out_size, in_size), np.float32)
    rows = np.arange(out_size)
    m[rows, i0] += 1.0 - frac
    m[rows, i1] += frac
    return m


def _pick_lane_tile(hw):
    """Largest multiple-of-128 divisor of hw (capped) that still yields >=2 grid
    steps; otherwise the full axis in one step (always a legal full-dim block)."""
    for t in (4096, 2048, 1024, 512, 256, 128):
        if hw % t == 0 and hw // t >= 2:
            return t
    return hw


def fuse_layer1_forward(list_x, x_size, trans_w, trans_b, fuse_w, fuse_b):
    """Mirrors FuseLayer1.forward; x_size ~ (N, C, H, W), only x_size[2:] used."""
    H, W = int(x_size[2]), int(x_size[3])
    HW = H * W
    K = len(list_x)
    N = list_x[0].shape[0]

    lane_tile = _pick_lane_tile(HW)
    n_tiles = HW // lane_tile

    smem = pl.BlockSpec(memory_space=pltpu.MemorySpace.SMEM)

    operands = []
    in_specs = [smem, smem, smem]
    vmem_bytes = 0
    for i, xi in enumerate(list_x):
        n, c, h, w = xi.shape
        chw = c * h * w

        # activations: contiguous flatten, bf16 for the MXU (free in XLA).
        x_flat = xi.reshape(n, chw).astype(jnp.bfloat16)                  # [N, C*h*w]

        # shape-only constants built with numpy at trace time (no per-call XLA ops).
        u_t = np.kron(_bilinear_matrix_np(H, h),
                      _bilinear_matrix_np(W, w)).T.astype(np.float32)     # [h*w, H*W]
        # TODO(synk): for large H,W switch to separable Rh/Rw matmuls with H-row tiling
        # instead of materializing this dense kron operand.

        # fold the 1x1-conv weight into the upsample operand:
        #   A_i[(c,p), q] = w_c * U[p, q]   ->   up = x_flat @ A_i   (one matmul/level)
        a_i = (trans_w[i].reshape(c, 1, 1).astype(jnp.float32)
               * u_t[None]).reshape(chw, HW).astype(jnp.bfloat16)         # [C*h*w, H*W]

        operands += [x_flat, a_i]
        in_specs += [
            pl.BlockSpec((n, chw), lambda j: (0, 0)),            # resident across grid
            pl.BlockSpec((chw, lane_tile), lambda j: (0, j)),    # lane-tiled, pipelined
        ]
        # x (resident once) + double-buffered A tiles, bf16
        vmem_bytes += n * chw * 2 + 2 * chw * lane_tile * 2

    tb = jnp.stack([b.reshape(()) for b in trans_b]).astype(jnp.float32)   # [K]
    fw = fuse_w.reshape(K).astype(jnp.float32)                             # [K]
    fb = fuse_b.reshape(1).astype(jnp.float32)                             # [1]

    out_spec = pl.BlockSpec((N, lane_tile), lambda j: (0, j))
    out_shapes = tuple(jax.ShapeDtypeStruct((N, HW), jnp.float32)
                       for _ in range(K + 1))
    vmem_bytes += (K + 1) * 2 * N * lane_tile * 4            # double-buffered f32 outs

    vmem_limit = int(min(max(2 * vmem_bytes + (1 << 20), 8 << 20), 64 << 20))

    outs = pl.pallas_call(
        _make_fused_kernel(K),
        out_shape=out_shapes,
        grid=(n_tiles,),
        in_specs=in_specs,
        out_specs=tuple(out_spec for _ in range(K + 1)),
        compiler_params=pltpu.CompilerParams(
            dimension_semantics=("parallel",),
            vmem_limit_bytes=vmem_limit),
    )(tb, fw, fb, *operands)

    out_fuse = outs[0].reshape(N, 1, H, W)
    out_all = [o.reshape(N, 1, H, W) for o in outs[1:]]
    return out_fuse, out_all


# ----------------------------- pure-JAX reference -----------------------------

def _ref_upsample_align_corners(img, H, W):
    n, c, h, w = img.shape

    def coords(out, inn):
        if out == 1:
            z = jnp.zeros((1,), jnp.float32)
            zi = jnp.zeros((1,), jnp.int32)
            return z, zi, zi
        src = jnp.arange(out, dtype=jnp.float32) * (inn - 1) / (out - 1)
        i0 = jnp.clip(jnp.floor(src).astype(jnp.int32), 0, inn - 1)
        i1 = jnp.minimum(i0 + 1, inn - 1)
        return src - i0.astype(jnp.float32), i0, i1

    fy, y0, y1 = coords(H, h)
    fx, x0, x1 = coords(W, w)
    r0 = img[:, :, y0, :]
    r1 = img[:, :, y1, :]
    top = r0[:, :, :, x0] * (1.0 - fx) + r0[:, :, :, x1] * fx
    bot = r1[:, :, :, x0] * (1.0 - fx) + r1[:, :, :, x1] * fx
    return top * (1.0 - fy)[:, None] + bot * fy[:, None]


def _ref_forward(list_x, x_size, trans_w, trans_b, fuse_w, fuse_b):
    H_out, W_out = int(x_size[2]), int(x_size[3])
    up_x = []
    for i, xi in enumerate(list_x):
        conv = jnp.einsum("nchw,c->nhw", xi, trans_w[i][0]) + trans_b[i][0, 0]
        up_x.append(_ref_upsample_align_corners(conv[:, None], H_out, W_out))
    cat = jnp.concatenate(up_x, axis=1)
    out_fuse = jnp.einsum("nkhw,k->nhw", cat, fuse_w[0])[:, None] + fuse_b[0, 0]
    return out_fuse, up_x


# ----------------------------------- main -------------------------------------

if __name__ == "__main__":
    key = jax.random.PRNGKey(0)
    # edgeMap = FuseLayer1([16, 16, 16]) in UnetGAN -> 3 pyramid levels, 16 ch each.
    list_k = [16, 16, 16]
    N = 2
    H_out, W_out = 16, 16
    in_spatial = [(16, 16), (8, 8), (4, 4)]
    K = len(list_k)

    ks = jax.random.split(key, 4 + 2 * K)
    list_x = [
        jax.random.normal(ks[4 + i],
                          (N, list_k[i], in_spatial[i][0], in_spatial[i][1]),
                          dtype=jnp.float32)
        for i in range(K)
    ]
    trans_w = [0.1 * jax.random.normal(ks[4 + K + i], (1, list_k[i]), dtype=jnp.float32)
               for i in range(K)]
    trans_b = [0.1 * jax.random.normal(ks[i], (1, 1), dtype=jnp.float32)
               for i in range(K)]
    fuse_w = 0.1 * jax.random.normal(ks[3], (1, K), dtype=jnp.float32)
    fuse_b = 0.1 * jax.random.normal(ks[K], (1, 1), dtype=jnp.float32)

    x_size = (N, 1, H_out, W_out)        # only x_size[2:] is used, like PyTorch

    out_fuse, out_all = fuse_layer1_forward(list_x, x_size,
                                            trans_w, trans_b, fuse_w, fuse_b)
    out_fuse = jax.block_until_ready(out_fuse)
    out_all = [jax.block_until_ready(o) for o in out_all]

    ref_fuse, ref_all = _ref_forward(list_x, x_size,
                                     trans_w, trans_b, fuse_w, fuse_b)

    assert out_fuse.shape == (N, 1, H_out, W_out)
    assert all(o.shape == (N, 1, H_out, W_out) for o in out_all)
    # bf16 matmul operands (f32 accumulation) -> relaxed tolerance vs. f32 reference.
    np.testing.assert_allclose(np.asarray(out_fuse), np.asarray(ref_fuse),
                               rtol=2e-2, atol=2e-2)
    for o, r in zip(out_all, ref_all):
        np.testing.assert_allclose(np.asarray(o), np.asarray(r),
                                   rtol=2e-2, atol=2e-2)

    print("KERNEL_OK")
</pallas_src>

<mosaic_0001>
module attributes {stable_mosaic.version = 11 : i64} {
  func.func @kernel(%arg0: i32, %arg1: memref<3xf32, #tpu.memory_space<smem>>, %arg2: memref<3xf32, #tpu.memory_space<smem>>, %arg3: memref<1xf32, #tpu.memory_space<smem>>, %arg4: memref<2x4096xbf16, #tpu.memory_space<vmem>>, %arg5: memref<4096x128xbf16, #tpu.memory_space<vmem>>, %arg6: memref<2x1024xbf16, #tpu.memory_space<vmem>>, %arg7: memref<1024x128xbf16, #tpu.memory_space<vmem>>, %arg8: memref<2x256xbf16, #tpu.memory_space<vmem>>, %arg9: memref<256x128xbf16, #tpu.memory_space<vmem>>, %arg10: memref<2x128xf32, #tpu.memory_space<vmem>>, %arg11: memref<2x128xf32, #tpu.memory_space<vmem>>, %arg12: memref<2x128xf32, #tpu.memory_space<vmem>>, %arg13: memref<2x128xf32, #tpu.memory_space<vmem>>) attributes {dimension_semantics = [#tpu.dimension_semantics<parallel>], iteration_bounds = array<i64: 2>, scalar_prefetch = 0 : i64, scratch_operands = 0 : i64, tpu.core_type = #tpu.core_type<tc>, window_params = [{transform_indices = @transform_0, window_bounds = array<i64: 3>}, {transform_indices = @transform_1, window_bounds = array<i64: 3>}, {transform_indices = @transform_2, window_bounds = array<i64: 1>}, {pipeline_mode = #tpu.pipeline_mode<synchronous>, transform_indices = @transform_3, window_bounds = array<i64: 2, 4096>}, {transform_indices = @transform_4, window_bounds = array<i64: 4096, 128>}, {pipeline_mode = #tpu.pipeline_mode<synchronous>, transform_indices = @transform_5, window_bounds = array<i64: 2, 1024>}, {transform_indices = @transform_6, window_bounds = array<i64: 1024, 128>}, {pipeline_mode = #tpu.pipeline_mode<synchronous>, transform_indices = @transform_7, window_bounds = array<i64: 2, 256>}, {transform_indices = @transform_8, window_bounds = array<i64: 256, 128>}, {transform_indices = @transform_9, window_bounds = array<i64: 2, 128>}, {transform_indices = @transform_10, window_bounds = array<i64: 2, 128>}, {transform_indices = @transform_11, window_bounds = array<i64: 2, 128>}, {transform_indices = @transform_12, window_bounds = array<i64: 2, 128>}]} {
    %c0 = arith.constant 0 : index
    %c0_0 = arith.constant 0 : index
    %0 = vector.load %arg4[%c0, %c0_0] : memref<2x4096xbf16, #tpu.memory_space<vmem>>, vector<2x4096xbf16>
    %c0_1 = arith.constant 0 : index
    %c0_2 = arith.constant 0 : index
    %1 = vector.load %arg5[%c0_1, %c0_2] : memref<4096x128xbf16, #tpu.memory_space<vmem>>, vector<4096x128xbf16>
    %cst = arith.constant dense<0.000000e+00> : vector<2x128xf32>
    %2 = tpu.matmul %0, %1, %cst {dimension_numbers = #tpu.dot_dimension_numbers<[1], [0], [0], [1], [0, 0, 1, 1], [], []>} : vector<2x4096xbf16>, vector<4096x128xbf16>, vector<2x128xf32> -> vector<2x128xf32>
    %c0_3 = arith.constant 0 : index
    %3 = memref.load %arg1[%c0_3] : memref<3xf32, #tpu.memory_space<smem>>
    %4 = vector.broadcast %3 : f32 to vector<2x128xf32>
    %5 = arith.addf %2, %4 : vector<2x128xf32>
    %c0_4 = arith.constant 0 : index
    %c0_5 = arith.constant 0 : index
    %6 = vector.load %arg11[%c0_4, %c0_5] : memref<2x128xf32, #tpu.memory_space<vmem>>, vector<2x128xf32>
    tpu.vector_store %arg11[%c0_4, %c0_5], %5 {strides = array<i32>} : memref<2x128xf32, #tpu.memory_space<vmem>>, vector<2x128xf32>,
    %c0_6 = arith.constant 0 : index
    %7 = memref.load %arg2[%c0_6] : memref<3xf32, #tpu.memory_space<smem>>
    %8 = vector.broadcast %7 : f32 to vector<2x128xf32>
    %9 = arith.mulf %5, %8 : vector<2x128xf32>
    %c0_7 = arith.constant 0 : index
    %c0_8 = arith.constant 0 : index
    %10 = vector.load %arg6[%c0_7, %c0_8] : memref<2x1024xbf16, #tpu.memory_space<vmem>>, vector<2x1024xbf16>
    %c0_9 = arith.constant 0 : index
    %c0_10 = arith.constant 0 : index
    %11 = vector.load %arg7[%c0_9, %c0_10] : memref<1024x128xbf16, #tpu.memory_space<vmem>>, vector<1024x128xbf16>
    %cst_11 = arith.constant dense<0.000000e+00> : vector<2x128xf32>
    %12 = tpu.matmul %10, %11, %cst_11 {dimension_numbers = #tpu.dot_dimension_numbers<[1], [0], [0], [1], [0, 0, 1, 1], [], []>} : vector<2x1024xbf16>, vector<1024x128xbf16>, vector<2x128xf32> -> vector<2x128xf32>
    %c1 = arith.constant 1 : index
    %13 = memref.load %arg1[%c1] : memref<3xf32, #tpu.memory_space<smem>>
    %14 = vector.broadcast %13 : f32 to vector<2x128xf32>
    %15 = arith.addf %12, %14 : vector<2x128xf32>
    %c0_12 = arith.constant 0 : index
    %c0_13 = arith.constant 0 : index
    %16 = vector.load %arg12[%c0_12, %c0_13] : memref<2x128xf32, #tpu.memory_space<vmem>>, vector<2x128xf32>
    tpu.vector_store %arg12[%c0_12, %c0_13], %15 {strides = array<i32>} : memref<2x128xf32, #tpu.memory_space<vmem>>, vector<2x128xf32>,
    %c1_14 = arith.constant 1 : index
    %17 = memref.load %arg2[%c1_14] : memref<3xf32, #tpu.memory_space<smem>>
    %18 = vector.broadcast %17 : f32 to vector<2x128xf32>
    %19 = arith.mulf %15, %18 : vector<2x128xf32>
    %20 = arith.addf %9, %19 : vector<2x128xf32>
    %c0_15 = arith.constant 0 : index
    %c0_16 = arith.constant 0 : index
    %21 = vector.load %arg8[%c0_15, %c0_16] : memref<2x256xbf16, #tpu.memory_space<vmem>>, vector<2x256xbf16>
    %c0_17 = arith.constant 0 : index
    %c0_18 = arith.constant 0 : index
    %22 = vector.load %arg9[%c0_17, %c0_18] : memref<256x128xbf16, #tpu.memory_space<vmem>>, vector<256x128xbf16>
    %cst_19 = arith.constant dense<0.000000e+00> : vector<2x128xf32>
    %23 = tpu.matmul %21, %22, %cst_19 {dimension_numbers = #tpu.dot_dimension_numbers<[1], [0], [0], [1], [0, 0, 1, 1], [], []>} : vector<2x256xbf16>, vector<256x128xbf16>, vector<2x128xf32> -> vector<2x128xf32>
    %c2 = arith.constant 2 : index
    %24 = memref.load %arg1[%c2] : memref<3xf32, #tpu.memory_space<smem>>
    %25 = vector.broadcast %24 : f32 to vector<2x128xf32>
    %26 = arith.addf %23, %25 : vector<2x128xf32>
    %c0_20 = arith.constant 0 : index
    %c0_21 = arith.constant 0 : index
    %27 = vector.load %arg13[%c0_20, %c0_21] : memref<2x128xf32, #tpu.memory_space<vmem>>, vector<2x128xf32>
    tpu.vector_store %arg13[%c0_20, %c0_21], %26 {strides = array<i32>} : memref<2x128xf32, #tpu.memory_space<vmem>>, vector<2x128xf32>,
    %c2_22 = arith.constant 2 : index
    %28 = memref.load %arg2[%c2_22] : memref<3xf32, #tpu.memory_space<smem>>
    %29 = vector.broadcast %28 : f32 to vector<2x128xf32>
    %30 = arith.mulf %26, %29 : vector<2x128xf32>
    %31 = arith.addf %20, %30 : vector<2x128xf32>
    %c0_23 = arith.constant 0 : index
    %32 = memref.load %arg3[%c0_23] : memref<1xf32, #tpu.memory_space<smem>>
    %33 = vector.broadcast %32 : f32 to vector<2x128xf32>
    %34 = arith.addf %31, %33 : vector<2x128xf32>
    %c0_24 = arith.constant 0 : index
    %c0_25 = arith.constant 0 : index
    %35 = vector.load %arg10[%c0_24, %c0_25] : memref<2x128xf32, #tpu.memory_space<vmem>>, vector<2x128xf32>
    tpu.vector_store %arg10[%c0_24, %c0_25], %34 {strides = array<i32>} : memref<2x128xf32, #tpu.memory_space<vmem>>, vector<2x128xf32>,
    return
  }
  func.func @transform_0(%arg0: i32) -> i32 {
    %c0_i32 = arith.constant 0 : i32
    %c0_i32_0 = arith.constant 0 : i32
    return %c0_i32 : i32
  }
  func.func @transform_1(%arg0: i32) -> i32 {
    %c0_i32 = arith.constant 0 : i32
    %c0_i32_0 = arith.constant 0 : i32
    return %c0_i32 : i32
  }
  func.func @transform_2(%arg0: i32) -> i32 {
    %c0_i32 = arith.constant 0 : i32
    %c0_i32_0 = arith.constant 0 : i32
    return %c0_i32 : i32
  }
  func.func @transform_3(%arg0: i32) -> (i32, i32) {
    %c0_i32 = arith.constant 0 : i32
    %c0_i32_0 = arith.constant 0 : i32
    %c0_i32_1 = arith.constant 0 : i32
    return %c0_i32, %c0_i32_0 : i32, i32
  }
  func.func @transform_4(%arg0: i32) -> (i32, i32) {
    %c0_i32 = arith.constant 0 : i32
    %c0_i32_0 = arith.constant 0 : i32
    return %c0_i32, %arg0 : i32, i32
  }
  func.func @transform_5(%arg0: i32) -> (i32, i32) {
    %c0_i32 = arith.constant 0 : i32
    %c0_i32_0 = arith.constant 0 : i32
    %c0_i32_1 = arith.constant 0 : i32
    return %c0_i32, %c0_i32_0 : i32, i32
  }
  func.func @transform_6(%arg0: i32) -> (i32, i32) {
    %c0_i32 = arith.constant 0 : i32
    %c0_i32_0 = arith.constant 0 : i32
    return %c0_i32, %arg0 : i32, i32
  }
  func.func @transform_7(%arg0: i32) -> (i32, i32) {
    %c0_i32 = arith.constant 0 : i32
    %c0_i32_0 = arith.constant 0 : i32
    %c0_i32_1 = arith.constant 0 : i32
    return %c0_i32, %c0_i32_0 : i32, i32
  }
  func.func @transform_8(%arg0: i32) -> (i32, i32) {
    %c0_i32 = arith.constant 0 : i32
    %c0_i32_0 = arith.constant 0 : i32
    return %c0_i32, %arg0 : i32, i32
  }
  func.func @transform_9(%arg0: i32) -> (i32, i32) {
    %c0_i32 = arith.constant 0 : i32
    %c0_i32_0 = arith.constant 0 : i32
    return %c0_i32, %arg0 : i32, i32
  }
  func.func @transform_10(%arg0: i32) -> (i32, i32) {
    %c0_i32 = arith.constant 0 : i32
    %c0_i32_0 = arith.constant 0 : i32
    return %c0_i32, %arg0 : i32, i32
  }
  func.func @transform_11(%arg0: i32) -> (i32, i32) {
    %c0_i32 = arith.constant 0 : i32
    %c0_i32_0 = arith.constant 0 : i32
    return %c0_i32, %arg0 : i32, i32
  }
  func.func @transform_12(%arg0: i32) -> (i32, i32) {
    %c0_i32 = arith.constant 0 : i32
    %c0_i32_0 = arith.constant 0 : i32
    return %c0_i32, %arg0 : i32, i32
  }
}

</mosaic_0001>

<llo_original>
// kernel: tpu_custom_call.1
$region0: #{tpu_custom_call.1}
  #allocation0 [shape = 'u32[]', space=smem, size = 0x4, offset = 0x4, fixed_abs, tag = 'smem constant byte address 0x4 - core index']
  #allocation1 [shape = 'u32[144,128]{1,0:T(1,128)}', space=vmem, size = 0x12000, scoped, tag = 'internal scratch']
  #allocation2 [shape = 'f32[1]{0:T(128)S(6)}', space=smem, size = 0x200, scoped, tag = 'scoped memory for tpu_custom_call.1']
  %s0 = inlined_call_operand.hbm [shape: f32[3], index: 0, kind: input, shape index: {}]
  %s1 = inlined_call_operand.hbm [shape: f32[3], index: 1, kind: input, shape index: {}]
  %s2 = inlined_call_operand.<no memory space> [shape: f32[1], index: 2, kind: input, shape index: {}]
  %s3 = inlined_call_operand.hbm [shape: bf16[2,4096], index: 3, kind: input, shape index: {}]
  %s4 = inlined_call_operand.hbm [shape: bf16[4096,256], index: 4, kind: input, shape index: {}]
  %s5 = inlined_call_operand.hbm [shape: bf16[2,1024], index: 5, kind: input, shape index: {}]
  %s6 = inlined_call_operand.hbm [shape: bf16[1024,256], index: 6, kind: input, shape index: {}]
  %s7 = inlined_call_operand.hbm [shape: bf16[2,256], index: 7, kind: input, shape index: {}]
  %s8 = inlined_call_operand.hbm [shape: bf16[256,256], index: 8, kind: input, shape index: {}]
  %s9 = inlined_call_operand.hbm [shape: f32[2,256], index: 9, kind: output, shape index: {0}]
  %s10 = inlined_call_operand.hbm [shape: f32[2,256], index: 10, kind: output, shape index: {1}]
  %s11 = inlined_call_operand.hbm [shape: f32[2,256], index: 11, kind: output, shape index: {2}]
  %s12 = inlined_call_operand.hbm [shape: f32[2,256], index: 12, kind: output, shape index: {3}]
  %13 = xla_tuple %s9, %s10, %s11, %s12
  %s14 = sld [smem:[#allocation0]]
  $region125: #{tpu_custom_call.1} parent=0
    _
  %s16 = ssub.s32 1, %s14
  %s17 = scalar_select 0, %s16, %s14
  %18 = sst [smem:[#allocation2]] %s2
  $region1: #{tpu_custom_call.1} parent=0
    #allocation3 [shape = 'u8[512]{0}', space=smem, size = 0x200, scoped, tag = 'input window, operand 0, single buffered']
    #allocation4 [shape = 's32[2]{0}', space=sflag, size = 0x8, scoped, tag = 'scoped memory for tpu_custom_call.1']
    #allocation5 [shape = 's32[2]{0}', space=sflag, size = 0x8, scoped, tag = 'scoped memory for tpu_custom_call.1']
    #allocation6 [shape = 's32[2]{0}', space=sflag, size = 0x8, scoped, tag = 'scoped memory for tpu_custom_call.1']
    #allocation7 [shape = 'u8[512]{0}', space=smem, size = 0x200, scoped, tag = 'input window, operand 1, single buffered']
    #allocation8 [shape = 's32[1]{0}', space=sflag, size = 0x4, scoped, tag = 'scoped memory for tpu_custom_call.1']
    #allocation9 [shape = 'u8[16384]{0}', space=vmem, size = 0x4000, scoped, tag = 'input window, operand 3, single buffered']
    #allocation10 [shape = 'u8[2097152]{0}', space=vmem, size = 0x200000, scoped, tag = 'input window, operand 4']
    #allocation11 [shape = 's32[2]{0}', space=sflag, size = 0x8, scoped, tag = 'scoped memory for tpu_custom_call.1']
    #allocation12 [shape = 'u8[4096]{0}', space=vmem, size = 0x1000, scoped, tag = 'input window, operand 5, single buffered']
    #allocation13 [shape = 'u8[524288]{0}', space=vmem, size = 0x80000, scoped, tag = 'input window, operand 6']
    #allocation14 [shape = 's32[2]{0}', space=sflag, size = 0x8, scoped, tag = 'scoped memory for tpu_custom_call.1']
    #allocation15 [shape = 'u8[1024]{0}', space=vmem, size = 0x400, scoped, tag = 'input window, operand 7, single buffered']
    #allocation16 [shape = 'u8[131072]{0}', space=vmem, size = 0x20000, scoped, tag = 'input window, operand 8']
    #allocation17 [shape = 's32[2]{0}', space=sflag, size = 0x8, scoped, tag = 'scoped memory for tpu_custom_call.1']
    #allocation18 [shape = 'u8[2048]{0}', space=vmem, size = 0x800, scoped, tag = 'output window, operand 0']
    #allocation19 [shape = 'u8[2048]{0}', space=vmem, size = 0x800, scoped, tag = 'output window, operand 1']
    #allocation20 [shape = 's32[2]{0}', space=sflag, size = 0x8, scoped, tag = 'scoped memory for tpu_custom_call.1']
    #allocation21 [shape = 'u8[2048]{0}', space=vmem, size = 0x800, scoped, tag = 'output window, operand 2']
    #allocation22 [shape = 'u8[2048]{0}', space=vmem, size = 0x800, scoped, tag = 'output window, operand 3']
    #allocation23 [shape = 's32[2]{0}', space=sflag, size = 0x8, scoped, tag = 'scoped memory for tpu_custom_call.1']
    %19 = vsyncpa [#allocation6], 0
    %20 = vsyncpa [#allocation8], 0
    %21 = vsyncpa [#allocation4], 0
    %22 = vsyncpa [#allocation11], 0
    %s23 = scalar_lea.sflag [#allocation11], 1
    %24 = vsyncpa %s23, 0
    %25 = vsyncpa [#allocation14], 0
    %s26 = scalar_lea.sflag [#allocation14], 1
    %27 = vsyncpa %s26, 0
    %28 = vsyncpa [#allocation17], 0
    %s29 = scalar_lea.sflag [#allocation17], 1
    %30 = vsyncpa %s29, 0
    %31 = vsyncpa [#allocation5], 0
    %s32 = scalar_lea.sflag [#allocation5], 1
    %33 = vsyncpa %s32, 0
    %34 = vsyncpa [#allocation20], 0
    %s35 = scalar_lea.sflag [#allocation20], 1
    %36 = vsyncpa %s35, 0
    %37 = vsyncpa [#allocation23], 0
    %s38 = scalar_lea.sflag [#allocation23], 1
    %39 = vsyncpa %s38, 0
    loop: start=0, step=1, limit=4
    $region2: #{tpu_custom_call.1} parent=1 // loop_pre_header
      _
    $region3: #{tpu_custom_call.1} parent=1 // loop_header
      %s41 = sphi 0, %s45
      %p42 = scmp.ge.s32.totalorder %s41, 4
      %s49 = sphi 0, %s49
      %s51 = sphi 0, %s49
      %s52 = sphi 0, %s51
      %s66 = sphi 0, %s52
      %s70 = sphi 0, %s70
      %s72 = sphi 0, %s70
      %s73 = sphi 0, %s72
      %s87 = sphi 0, %s73
      %s91 = sphi 0, %s91
      %s93 = sphi 0, %s91
      %s94 = sphi 0, %s93
      %s108 = sphi 0, %s94
      %s112 = sphi 0, %s112
      %s114 = sphi 0, %s112
      %s115 = sphi 0, %s114
      %s129 = sphi 0, %s115
      %s135 = sphi 0, %s137
      %s138 = sphi 0, %s135
      %s139 = sphi 0, %s138
      %s155 = sphi 0, %s139
      %s159 = sphi 0, %s159
      %s161 = sphi 0, %s159
      %s162 = sphi 0, %s161
      %s176 = sphi 0, %s162
      %s182 = sphi 0, %s184
      %s185 = sphi 0, %s182
      %s186 = sphi 0, %s185
      %s202 = sphi 0, %s186
      %s206 = sphi 0, %s206
      %s208 = sphi 0, %s206
      %s209 = sphi 0, %s208
      %s223 = sphi 0, %s209
      %s229 = sphi 0, %s231
      %s232 = sphi 0, %s229
      %s233 = sphi 0, %s232
      %s249 = sphi 0, %s233
      %s255 = sphi 0, %s257
      %s258 = sphi 0, %s255
      %s259 = sphi 0, %s258
      %s275 = sphi 0, %s259
      %s281 = sphi 0, %s283
      %s284 = sphi 0, %s281
      %s285 = sphi 0, %s284
      %s301 = sphi 0, %s285
      %s307 = sphi 0, %s309
      %s310 = sphi 0, %s307
      %s311 = sphi 0, %s310
      %s327 = sphi 0, %s311
      %s333 = sphi 0, %s335
      %s336 = sphi 0, %s333
      %s337 = sphi 0, %s336
      %s353 = sphi 0, %s337
    $region4: #{tpu_custom_call.1} parent=1 // loop_header_branch
      %44 = sbr.rel (%p42) target = $region8
    $region5: #{tpu_custom_call.1} parent=1 // loop_body
      %s46 = ssub.s32 %s41, 1
      %s47 = ssub.s32 %s41, 2
      %s48 = sadd.s32 %s41, 1
      %s50 = sadd.s32 %s49, 1
      %p53 = scmp.eq.s32.totalorder %s41, 1
      %p54 = scmp.ne.s32.totalorder %s49, %s51
      %p55 = scmp.eq.s32.totalorder %s41, 0
      %p56 = por %p54, %p55
      %p57 = scmp.ne.s32.totalorder %s49, %s51
      %p58 = scmp.eq.s32.totalorder %s46, 1
      %p59 = por %p57, %p58
      %p60 = scmp.ne.s32.totalorder %s51, %s52
      %p61 = scmp.eq.s32.totalorder %s46, 0
      %p62 = por %p60, %p61
      %p63 = scmp.ne.s32.totalorder %s51, %s52
      %p64 = scmp.eq.s32.totalorder %s47, 1
      %p65 = por %p63, %p64
      %p67 = scmp.ne.s32.totalorder %s52, %s66
      %p68 = scmp.eq.s32.totalorder %s47, 0
      %p69 = por %p67, %p68
      %s71 = sadd.s32 %s70, 1
      %p74 = scmp.eq.s32.totalorder %s41, 1
      %p75 = scmp.ne.s32.totalorder %s70, %s72
      %p76 = scmp.eq.s32.totalorder %s41, 0
      %p77 = por %p75, %p76
      %p78 = scmp.ne.s32.totalorder %s70, %s72
      %p79 = scmp.eq.s32.totalorder %s46, 1
      %p80 = por %p78, %p79
      %p81 = scmp.ne.s32.totalorder %s72, %s73
      %p82 = scmp.eq.s32.totalorder %s46, 0
      %p83 = por %p81, %p82
      %p84 = scmp.ne.s32.totalorder %s72, %s73
      %p85 = scmp.eq.s32.totalorder %s47, 1
      %p86 = por %p84, %p85
      %p88 = scmp.ne.s32.totalorder %s73, %s87
      %p89 = scmp.eq.s32.totalorder %s47, 0
      %p90 = por %p88, %p89
      %s92 = sadd.s32 %s91, 1
      %p95 = scmp.eq.s32.totalorder %s41, 1
      %p96 = scmp.ne.s32.totalorder %s91, %s93
      %p97 = scmp.eq.s32.totalorder %s41, 0
      %p98 = por %p96, %p97
      %p99 = scmp.ne.s32.totalorder %s91, %s93
      %p100 = scmp.eq.s32.totalorder %s46, 1
      %p101 = por %p99, %p100
      %p102 = scmp.ne.s32.totalorder %s93, %s94
      %p103 = scmp.eq.s32.totalorder %s46, 0
      %p104 = por %p102, %p103
      %p105 = scmp.ne.s32.totalorder %s93, %s94
      %p106 = scmp.eq.s32.totalorder %s47, 1
      %p107 = por %p105, %p106
      %p109 = scmp.ne.s32.totalorder %s94, %s108
      %p110 = scmp.eq.s32.totalorder %s47, 0
      %p111 = por %p109, %p110
      %s113 = sadd.s32 %s112, 1
      %p116 = scmp.eq.s32.totalorder %s41, 1
      %p117 = scmp.ne.s32.totalorder %s112, %s114
      %p118 = scmp.eq.s32.totalorder %s41, 0
      %p119 = por %p117, %p118
      %p120 = scmp.ne.s32.totalorder %s112, %s114
      %p121 = scmp.eq.s32.totalorder %s46, 1
      %p122 = por %p120, %p121
      %p123 = scmp.ne.s32.totalorder %s114, %s115
      %p124 = scmp.eq.s32.totalorder %s46, 0
      %p125 = por %p123, %p124
      %p126 = scmp.ne.s32.totalorder %s114, %s115
      %p127 = scmp.eq.s32.totalorder %s47, 1
      %p128 = por %p126, %p127
      %p130 = scmp.ne.s32.totalorder %s115, %s129
      %p131 = scmp.eq.s32.totalorder %s47, 0
      %p132 = por %p130, %p131
      %s133 = ssub.s32 %s41, %s48
      %p134 = scmp.eq.s32.totalorder %s133, 0
      %s136 = sadd.s32 %s135, 1
      %s137 = scalar_select %p134, %s135, %s136
      %p140 = pneg %p134
      %p141 = scmp.eq.s32.totalorder %s41, 1
      %p142 = por %p140, %p141
      %p143 = scmp.ne.s32.totalorder %s135, %s138
      %p144 = scmp.eq.s32.totalorder %s41, 0
      %p145 = por %p143, %p144
      %p146 = scmp.ne.s32.totalorder %s135, %s138
      %p147 = scmp.eq.s32.totalorder %s46, 1
      %p148 = por %p146, %p147
      %p149 = scmp.ne.s32.totalorder %s138, %s139
      %p150 = scmp.eq.s32.totalorder %s46, 0
      %p151 = por %p149, %p150
      %p152 = scmp.ne.s32.totalorder %s138, %s139
      %p153 = scmp.eq.s32.totalorder %s47, 1
      %p154 = por %p152, %p153
      %p156 = scmp.ne.s32.totalorder %s139, %s155
      %p157 = scmp.eq.s32.totalorder %s47, 0
      %p158 = por %p156, %p157
      %s160 = sadd.s32 %s159, 1
      %p163 = scmp.eq.s32.totalorder %s41, 1
      %p164 = scmp.ne.s32.totalorder %s159, %s161
      %p165 = scmp.eq.s32.totalorder %s41, 0
      %p166 = por %p164, %p165
      %p167 = scmp.ne.s32.totalorder %s159, %s161
      %p168 = scmp.eq.s32.totalorder %s46, 1
      %p169 = por %p167, %p168
      %p170 = scmp.ne.s32.totalorder %s161, %s162
      %p171 = scmp.eq.s32.totalorder %s46, 0
      %p172 = por %p170, %p171
      %p173 = scmp.ne.s32.totalorder %s161, %s162
      %p174 = scmp.eq.s32.totalorder %s47, 1
      %p175 = por %p173, %p174
      %p177 = scmp.ne.s32.totalorder %s162, %s176
      %p178 = scmp.eq.s32.totalorder %s47, 0
      %p179 = por %p177, %p178
      %s180 = ssub.s32 %s41, %s48
      %p181 = scmp.eq.s32.totalorder %s180, 0
      %s183 = sadd.s32 %s182, 1
      %s184 = scalar_select %p181, %s182, %s183
      %p187 = pneg %p181
      %p188 = scmp.eq.s32.totalorder %s41, 1
      %p189 = por %p187, %p188
      %p190 = scmp.ne.s32.totalorder %s182, %s185
      %p191 = scmp.eq.s32.totalorder %s41, 0
      %p192 = por %p190, %p191
      %p193 = scmp.ne.s32.totalorder %s182, %s185
      %p194 = scmp.eq.s32.totalorder %s46, 1
      %p195 = por %p193, %p194
      %p196 = scmp.ne.s32.totalorder %s185, %s186
      %p197 = scmp.eq.s32.totalorder %s46, 0
      %p198 = por %p196, %p197
      %p199 = scmp.ne.s32.totalorder %s185, %s186
      %p200 = scmp.eq.s32.totalorder %s47, 1
      %p201 = por %p199, %p200
      %p203 = scmp.ne.s32.totalorder %s186, %s202
      %p204 = scmp.eq.s32.totalorder %s47, 0
      %p205 = por %p203, %p204
      %s207 = sadd.s32 %s206, 1
      %p210 = scmp.eq.s32.totalorder %s41, 1
      %p211 = scmp.ne.s32.totalorder %s206, %s208
      %p212 = scmp.eq.s32.totalorder %s41, 0
      %p213 = por %p211, %p212
      %p214 = scmp.ne.s32.totalorder %s206, %s208
      %p215 = scmp.eq.s32.totalorder %s46, 1
      %p216 = por %p214, %p215
      %p217 = scmp.ne.s32.totalorder %s208, %s209
      %p218 = scmp.eq.s32.totalorder %s46, 0
      %p219 = por %p217, %p218
      %p220 = scmp.ne.s32.totalorder %s208, %s209
      %p221 = scmp.eq.s32.totalorder %s47, 1
      %p222 = por %p220, %p221
      %p224 = scmp.ne.s32.totalorder %s209, %s223
      %p225 = scmp.eq.s32.totalorder %s47, 0
      %p226 = por %p224, %p225
      %s227 = ssub.s32 %s41, %s48
      %p228 = scmp.eq.s32.totalorder %s227, 0
      %s230 = sadd.s32 %s229, 1
      %s231 = scalar_select %p228, %s229, %s230
      %p234 = pneg %p228
      %p235 = scmp.eq.s32.totalorder %s41, 1
      %p236 = por %p234, %p235
      %p237 = scmp.ne.s32.totalorder %s229, %s232
      %p238 = scmp.eq.s32.totalorder %s41, 0
      %p239 = por %p237, %p238
      %p240 = scmp.ne.s32.totalorder %s229, %s232
      %p241 = scmp.eq.s32.totalorder %s46, 1
      %p242 = por %p240, %p241
      %p243 = scmp.ne.s32.totalorder %s232, %s233
      %p244 = scmp.eq.s32.totalorder %s46, 0
      %p245 = por %p243, %p244
      %p246 = scmp.ne.s32.totalorder %s232, %s233
      %p247 = scmp.eq.s32.totalorder %s47, 1
      %p248 = por %p246, %p247
      %p250 = scmp.ne.s32.totalorder %s233, %s249
      %p251 = scmp.eq.s32.totalorder %s47, 0
      %p252 = por %p250, %p251
      %s253 = ssub.s32 %s41, %s48
      %p254 = scmp.eq.s32.totalorder %s253, 0
      %s256 = sadd.s32 %s255, 1
      %s257 = scalar_select %p254, %s255, %s256
      %p260 = pneg %p254
      %p261 = scmp.eq.s32.totalorder %s41, 1
      %p262 = por %p260, %p261
      %p263 = scmp.ne.s32.totalorder %s255, %s258
      %p264 = scmp.eq.s32.totalorder %s41, 0
      %p265 = por %p263, %p264
      %p266 = scmp.ne.s32.totalorder %s255, %s258
      %p267 = scmp.eq.s32.totalorder %s46, 1
      %p268 = por %p266, %p267
      %p269 = scmp.ne.s32.totalorder %s258, %s259
      %p270 = scmp.eq.s32.totalorder %s46, 0
      %p271 = por %p269, %p270
      %p272 = scmp.ne.s32.totalorder %s258, %s259
      %p273 = scmp.eq.s32.totalorder %s47, 1
      %p274 = por %p272, %p273
      %p276 = scmp.ne.s32.totalorder %s259, %s275
      %p277 = scmp.eq.s32.totalorder %s47, 0
      %p278 = por %p276, %p277
      %s279 = ssub.s32 %s41, %s48
      %p280 = scmp.eq.s32.totalorder %s279, 0
      %s282 = sadd.s32 %s281, 1
      %s283 = scalar_select %p280, %s281, %s282
      %p286 = pneg %p280
      %p287 = scmp.eq.s32.totalorder %s41, 1
      %p288 = por %p286, %p287
      %p289 = scmp.ne.s32.totalorder %s281, %s284
      %p290 = scmp.eq.s32.totalorder %s41, 0
      %p291 = por %p289, %p290
      %p292 = scmp.ne.s32.totalorder %s281, %s284
      %p293 = scmp.eq.s32.totalorder %s46, 1
      %p294 = por %p292, %p293
      %p295 = scmp.ne.s32.totalorder %s284, %s285
      %p296 = scmp.eq.s32.totalorder %s46, 0
      %p297 = por %p295, %p296
      %p298 = scmp.ne.s32.totalorder %s284, %s285
      %p299 = scmp.eq.s32.totalorder %s47, 1
      %p300 = por %p298, %p299
      %p302 = scmp.ne.s32.totalorder %s285, %s301
      %p303 = scmp.eq.s32.totalorder %s47, 0
      %p304 = por %p302, %p303
      %s305 = ssub.s32 %s41, %s48
      %p306 = scmp.eq.s32.totalorder %s305, 0
      %s308 = sadd.s32 %s307, 1
      %s309 = scalar_select %p306, %s307, %s308
      %p312 = pneg %p306
      %p313 = scmp.eq.s32.totalorder %s41, 1
      %p314 = por %p312, %p313
      %p315 = scmp.ne.s32.totalorder %s307, %s310
      %p316 = scmp.eq.s32.totalorder %s41, 0
      %p317 = por %p315, %p316
      %p318 = scmp.ne.s32.totalorder %s307, %s310
      %p319 = scmp.eq.s32.totalorder %s46, 1
      %p320 = por %p318, %p319
      %p321 = scmp.ne.s32.totalorder %s310, %s311
      %p322 = scmp.eq.s32.totalorder %s46, 0
      %p323 = por %p321, %p322
      %p324 = scmp.ne.s32.totalorder %s310, %s311
      %p325 = scmp.eq.s32.totalorder %s47, 1
      %p326 = por %p324, %p325
      %p328 = scmp.ne.s32.totalorder %s311, %s327
      %p329 = scmp.eq.s32.totalorder %s47, 0
      %p330 = por %p328, %p329
      %s331 = ssub.s32 %s41, %s48
      %p332 = scmp.eq.s32.totalorder %s331, 0
      %s334 = sadd.s32 %s333, 1
      %s335 = scalar_select %p332, %s333, %s334
      %p338 = pneg %p332
      %p339 = scmp.eq.s32.totalorder %s41, 1
      %p340 = por %p338, %p339
      %p341 = scmp.ne.s32.totalorder %s333, %s336
      %p342 = scmp.eq.s32.totalorder %s41, 0
      %p343 = por %p341, %p342
      %p344 = scmp.ne.s32.totalorder %s333, %s336
      %p345 = scmp.eq.s32.totalorder %s46, 1
      %p346 = por %p344, %p345
      %p347 = scmp.ne.s32.totalorder %s336, %s337
      %p348 = scmp.eq.s32.totalorder %s46, 0
      %p349 = por %p347, %p348
      %p350 = scmp.ne.s32.totalorder %s336, %s337
      %p351 = scmp.eq.s32.totalorder %s47, 1
      %p352 = por %p350, %p351
      %p354 = scmp.ne.s32.totalorder %s337, %s353
      %p355 = scmp.eq.s32.totalorder %s47, 0
      %p356 = por %p354, %p355
      %p357 = scmp.le.s32.totalorder 1, %s41
      %p358 = scmp.lt.s32.totalorder %s41, 3
      %p359 = pnand %p357, %p358
      %p360 = pneg %p359
      // Predicated region
      $region9: #{tpu_custom_call.1} parent=5 // pred_check
        _
      $region10: #{tpu_custom_call.1} parent=5 // pred_check_branch
        %362 = sbr.rel (%p359) target = $region12
      $region11: #{tpu_custom_call.1} parent=5 // pred_region
        %s363 = ssub.s32 %s41, 1
        // Predicated region
        $region13: #{tpu_custom_call.1} parent=11 // pred_check
          %p364 = pneg %p62
        $region14: #{tpu_custom_call.1} parent=11 // pred_check_branch
          %366 = sbr.rel (%p364) target = $region16
        $region15: #{tpu_custom_call.1} parent=11 // pred_region
          %s368 = ssub.s32 16, 16
          %369 = vsyncadd [#allocation6], %s368
          %372 = dma.hbm_to_smem %s0, 16, [#allocation3], [#allocation6]
        $region16: #{tpu_custom_call.1} parent=11 // pred_fallthru
          _
        // Predicated region
        $region17: #{tpu_custom_call.1} parent=11 // pred_check
          %p373 = pneg %p83
        $region18: #{tpu_custom_call.1} parent=11 // pred_check_branch
          %375 = sbr.rel (%p373) target = $region20
        $region19: #{tpu_custom_call.1} parent=11 // pred_region
          %s377 = ssub.s32 16, 16
          %378 = vsyncadd [#allocation8], %s377
          %381 = dma.hbm_to_smem %s1, 16, [#allocation7], [#allocation8]
        $region20: #{tpu_custom_call.1} parent=11 // pred_fallthru
          _
        // Predicated region
        $region21: #{tpu_custom_call.1} parent=11 // pred_check
          %p382 = pneg %p104
        $region22: #{tpu_custom_call.1} parent=11 // pred_check_branch
          %384 = sbr.rel (%p382) target = $region24
        $region23: #{tpu_custom_call.1} parent=11 // pred_region
          _
        $region24: #{tpu_custom_call.1} parent=11 // pred_fallthru
          _
        // Predicated region
        $region25: #{tpu_custom_call.1} parent=11 // pred_check
          %p385 = pneg %p125
        $region26: #{tpu_custom_call.1} parent=11 // pred_check_branch
          %387 = sbr.rel (%p385) target = $region28
        $region27: #{tpu_custom_call.1} parent=11 // pred_region
          %s389 = ssub.s32 512, 512
          %390 = vsyncadd [#allocation4], %s389
          %s392 = sshll.u32 [#allocation9], 4
          %s393 = int_to_ptr.vmem [resolvable:$true] %s392
          %395 = dma.hbm_to_vmem [thread:$0]  %s3, 512, %s393, [#allocation4]
        $region28: #{tpu_custom_call.1} parent=11 // pred_fallthru
          _
        // Predicated region
        $region29: #{tpu_custom_call.1} parent=11 // pred_check
          %p396 = pneg %p172
        $region30: #{tpu_custom_call.1} parent=11 // pred_check_branch
          %398 = sbr.rel (%p396) target = $region32
        $region31: #{tpu_custom_call.1} parent=11 // pred_region
          %s400 = ssub.s32 128, 128
          %401 = vsyncadd [#allocation11], %s400
          %s403 = sshll.u32 [#allocation12], 4
          %s404 = int_to_ptr.vmem [resolvable:$true] %s403
          %406 = dma.hbm_to_vmem [thread:$0]  %s5, 128, %s404, [#allocation11]
        $region32: #{tpu_custom_call.1} parent=11 // pred_fallthru
          _
        // Predicated region
        $region33: #{tpu_custom_call.1} parent=11 // pred_check
          %p407 = pneg %p219
        $region34: #{tpu_custom_call.1} parent=11 // pred_check_branch
          %409 = sbr.rel (%p407) target = $region36
        $region35: #{tpu_custom_call.1} parent=11 // pred_region
          %s411 = ssub.s32 32, 32
          %412 = vsyncadd [#allocation14], %s411
          %s414 = sshll.u32 [#allocation15], 4
          %s415 = int_to_ptr.vmem [resolvable:$true] %s414
          %417 = dma.hbm_to_vmem [thread:$0]  %s7, 32, %s415, [#allocation14]
        $region36: #{tpu_custom_call.1} parent=11 // pred_fallthru
          _
      $region12: #{tpu_custom_call.1} parent=5 // pred_fallthru
        _
      %p418 = scmp.lt.s32.totalorder %s41, 2
      // Predicated region
      $region37: #{tpu_custom_call.1} parent=5 // pred_check
        %p419 = pneg %p418
      $region38: #{tpu_custom_call.1} parent=5 // pred_check_branch
        %421 = sbr.rel (%p419) target = $region40
      $region39: #{tpu_custom_call.1} parent=5 // pred_region
        // Predicated region
        $region41: #{tpu_custom_call.1} parent=39 // pred_check
          %p422 = pneg %p145
        $region42: #{tpu_custom_call.1} parent=39 // pred_check_branch
          %424 = sbr.rel (%p422) target = $region44
        $region43: #{tpu_custom_call.1} parent=39 // pred_region
          %s425 = sand.u32 %s41, 1
          %s426 = scalar_lea.sflag [#allocation11], %s425
          %s427 = sand.u32 %s135, 1
          %s428 = smul.addr %s427, 2048
          %s429 = scalar_lea.vmem [#allocation10], %s428
          %s431 = ssub.s32 32768, 32768
          %432 = vsyncadd %s426, %s431
          %s433 = smul.addr %s41, 64
          %s434 = scalar_lea.hbm %s4, %s433
          %s435 = sshll.u32 %s429, 4
          %s436 = int_to_ptr.vmem [resolvable:$true] %s435
          %441 = dma.hbm_to_vmem [thread:$0]  %s434, 32768, %s436, %s426, 128, 64, 4
        $region44: #{tpu_custom_call.1} parent=39 // pred_fallthru
          _
        // Predicated region
        $region45: #{tpu_custom_call.1} parent=39 // pred_check
          %p442 = pneg %p192
        $region46: #{tpu_custom_call.1} parent=39 // pred_check_branch
          %444 = sbr.rel (%p442) target = $region48
        $region47: #{tpu_custom_call.1} parent=39 // pred_region
          %s445 = sand.u32 %s41, 1
          %s446 = scalar_lea.sflag [#allocation14], %s445
          %s447 = sand.u32 %s182, 1
          %s448 = smul.addr %s447, 512
          %s449 = scalar_lea.vmem [#allocation13], %s448
          %s451 = ssub.s32 8192, 8192
          %452 = vsyncadd %s446, %s451
          %s453 = smul.addr %s41, 64
          %s454 = scalar_lea.hbm %s6, %s453
          %s455 = sshll.u32 %s449, 4
          %s456 = int_to_ptr.vmem [resolvable:$true] %s455
          %461 = dma.hbm_to_vmem [thread:$0]  %s454, 8192, %s456, %s446, 128, 64, 4
        $region48: #{tpu_custom_call.1} parent=39 // pred_fallthru
          _
        // Predicated region
        $region49: #{tpu_custom_call.1} parent=39 // pred_check
          %p462 = pneg %p239
        $region50: #{tpu_custom_call.1} parent=39 // pred_check_branch
          %464 = sbr.rel (%p462) target = $region52
        $region51: #{tpu_custom_call.1} parent=39 // pred_region
          %s465 = sand.u32 %s229, 1
          %s466 = scalar_lea.sflag [#allocation17], %s465
          %s467 = sand.u32 %s229, 1
          %s468 = smul.addr %s467, 128
          %s469 = scalar_lea.vmem [#allocation16], %s468
          %s471 = ssub.s32 2048, 2048
          %472 = vsyncadd %s466, %s471
          %s473 = smul.addr %s41, 64
          %s474 = scalar_lea.hbm %s8, %s473
          %s475 = sshll.u32 %s469, 4
          %s476 = int_to_ptr.vmem [resolvable:$true] %s475
          %481 = dma.hbm_to_vmem [thread:$0]  %s474, 2048, %s476, %s466, 128, 64, 4
        $region52: #{tpu_custom_call.1} parent=39 // pred_fallthru
          _
      $region40: #{tpu_custom_call.1} parent=5 // pred_fallthru
        _
      %p482 = scmp.le.s32.totalorder 1, %s41
      %p483 = scmp.lt.s32.totalorder %s41, 3
      %p484 = pnand %p482, %p483
      %p485 = pneg %p484
      // Predicated region
      $region53: #{tpu_custom_call.1} parent=5 // pred_check
        _
      $region54: #{tpu_custom_call.1} parent=5 // pred_check_branch
        %487 = sbr.rel (%p484) target = $region56
      $region55: #{tpu_custom_call.1} parent=5 // pred_region
        %s488 = ssub.s32 %s41, 1
        // Predicated region
        $region57: #{tpu_custom_call.1} parent=55 // pred_check
          %p489 = pneg %p62
        $region58: #{tpu_custom_call.1} parent=55 // pred_check_branch
          %491 = sbr.rel (%p489) target = $region60
        $region59: #{tpu_custom_call.1} parent=55 // pred_region
          %492 = dma.done [#allocation6], 16
        $region60: #{tpu_custom_call.1} parent=55 // pred_fallthru
          _
        // Predicated region
        $region61: #{tpu_custom_call.1} parent=55 // pred_check
          %p493 = pneg %p83
        $region62: #{tpu_custom_call.1} parent=55 // pred_check_branch
          %495 = sbr.rel (%p493) target = $region64
        $region63: #{tpu_custom_call.1} parent=55 // pred_region
          %496 = dma.done [#allocation8], 16
        $region64: #{tpu_custom_call.1} parent=55 // pred_fallthru
          _
        // Predicated region
        $region65: #{tpu_custom_call.1} parent=55 // pred_check
          %p497 = pneg %p125
        $region66: #{tpu_custom_call.1} parent=55 // pred_check_branch
          %499 = sbr.rel (%p497) target = $region68
        $region67: #{tpu_custom_call.1} parent=55 // pred_region
          %500 = dma.done [#allocation4], 512
        $region68: #{tpu_custom_call.1} parent=55 // pred_fallthru
          _
        %s501 = sand.u32 %s46, 1
        %s502 = scalar_lea.sflag [#allocation11], %s501
        %s503 = sand.u32 %s138, 1
        %s504 = smul.addr %s503, 2048
        %s505 = scalar_lea.vmem [#allocation10], %s504
        // Predicated region
        $region69: #{tpu_custom_call.1} parent=55 // pred_check
          %p506 = pneg %p151
        $region70: #{tpu_custom_call.1} parent=55 // pred_check_branch
          %508 = sbr.rel (%p506) target = $region72
        $region71: #{tpu_custom_call.1} parent=55 // pred_region
          %509 = dma.done %s502, 32768
        $region72: #{tpu_custom_call.1} parent=55 // pred_fallthru
          _
        // Predicated region
        $region73: #{tpu_custom_call.1} parent=55 // pred_check
          %p510 = pneg %p172
        $region74: #{tpu_custom_call.1} parent=55 // pred_check_branch
          %512 = sbr.rel (%p510) target = $region76
        $region75: #{tpu_custom_call.1} parent=55 // pred_region
          %513 = dma.done [#allocation11], 128
        $region76: #{tpu_custom_call.1} parent=55 // pred_fallthru
          _
        %s514 = sand.u32 %s46, 1
        %s515 = scalar_lea.sflag [#allocation14], %s514
        %s516 = sand.u32 %s185, 1
        %s517 = smul.addr %s516, 512
        %s518 = scalar_lea.vmem [#allocation13], %s517
        // Predicated region
        $region77: #{tpu_custom_call.1} parent=55 // pred_check
          %p519 = pneg %p198
        $region78: #{tpu_custom_call.1} parent=55 // pred_check_branch
          %521 = sbr.rel (%p519) target = $region80
        $region79: #{tpu_custom_call.1} parent=55 // pred_region
          %522 = dma.done %s515, 8192
        $region80: #{tpu_custom_call.1} parent=55 // pred_fallthru
          _
        // Predicated region
        $region81: #{tpu_custom_call.1} parent=55 // pred_check
          %p523 = pneg %p219
        $region82: #{tpu_custom_call.1} parent=55 // pred_check_branch
          %525 = sbr.rel (%p523) target = $region84
        $region83: #{tpu_custom_call.1} parent=55 // pred_region
          %526 = dma.done [#allocation14], 32
        $region84: #{tpu_custom_call.1} parent=55 // pred_fallthru
          _
        %s527 = sand.u32 %s232, 1
        %s528 = scalar_lea.sflag [#allocation17], %s527
        %s529 = sand.u32 %s232, 1
        %s530 = smul.addr %s529, 128
        %s531 = scalar_lea.vmem [#allocation16], %s530
        // Predicated region
        $region85: #{tpu_custom_call.1} parent=55 // pred_check
          %p532 = pneg %p245
        $region86: #{tpu_custom_call.1} parent=55 // pred_check_branch
          %534 = sbr.rel (%p532) target = $region88
        $region87: #{tpu_custom_call.1} parent=55 // pred_region
          %535 = dma.done %s528, 2048
        $region88: #{tpu_custom_call.1} parent=55 // pred_fallthru
          _
        %536 = sfence
        %p537 = pneg %p62
        %p538 = pneg %p59
        %p539 = pneg %p83
        %p540 = pneg %p80
        %p541 = pneg %p104
        %p542 = pneg %p101
        %p543 = pneg %p125
        %p544 = pneg %p122
        %s545 = sand.u32 %s46, 1
        %s546 = scalar_lea.sflag [#allocation11], %s545
        %s547 = sand.u32 %s138, 1
        %s548 = smul.addr %s547, 2048
        %s549 = scalar_lea.vmem [#allocation10], %s548
        %p550 = pneg %p151
        %p551 = pneg %p148
        %p552 = pneg %p172
        %p553 = pneg %p169
        %s554 = sand.u32 %s46, 1
        %s555 = scalar_lea.sflag [#allocation14], %s554
        %s556 = sand.u32 %s185, 1
        %s557 = smul.addr %s556, 512
        %s558 = scalar_lea.vmem [#allocation13], %s557
        %p559 = pneg %p198
        %p560 = pneg %p195
        %p561 = pneg %p219
        %p562 = pneg %p216
        %s563 = sand.u32 %s232, 1
        %s564 = scalar_lea.sflag [#allocation17], %s563
        %s565 = sand.u32 %s232, 1
        %s566 = smul.addr %s565, 128
        %s567 = scalar_lea.vmem [#allocation16], %s566
        %p568 = pneg %p245
        %p569 = pneg %p242
        %p570 = pneg %p271
        %p571 = pneg %p268
        %s572 = sand.u32 %s258, 1
        %s573 = scalar_lea.sflag [#allocation5], %s572
        %s574 = sand.u32 %s258, 1
        %s575 = smul.addr %s574, 2
        %s576 = scalar_lea.vmem [#allocation18], %s575
        %p577 = pneg %p297
        %p578 = pneg %p294
        %s579 = sand.u32 %s46, 1
        %s580 = scalar_lea.sflag [#allocation20], %s579
        %s581 = sand.u32 %s284, 1
        %s582 = smul.addr %s581, 2
        %s583 = scalar_lea.vmem [#allocation19], %s582
        %p584 = pneg %p323
        %p585 = pneg %p320
        %s586 = sand.u32 %s46, 1
        %s587 = scalar_lea.sflag [#allocation20], %s586
        %s588 = sand.u32 %s310, 1
        %s589 = smul.addr %s588, 2
        %s590 = scalar_lea.vmem [#allocation21], %s589
        %p591 = pneg %p349
        %p592 = pneg %p346
        %s593 = sand.u32 %s336, 1
        %s594 = scalar_lea.sflag [#allocation23], %s593
        %s595 = sand.u32 %s336, 1
        %s596 = smul.addr %s595, 2
        %s597 = scalar_lea.vmem [#allocation22], %s596
        %v599 = vld [vmem:[#allocation9] sm:$0xff]
        %v600 = vld [vmem:[#allocation9 + $0x8] sm:$0xff]
        %v601 = vld [vmem:[#allocation9 + $0x10] sm:$0xff]
        %v602 = vld [vmem:[#allocation9 + $0x18] sm:$0xff]
        %v603 = vld [vmem:[%s505] sm:$0xf]
        %v604 = vld [vmem:[%s505 + $0x4] sm:$0xf]
        %v605 = vld [vmem:[%s505 + $0x8] sm:$0xf]
        %v606 = vld [vmem:[%s505 + $0xc] sm:$0xf]
        %v607 = vld [vmem:[%s505 + $0x10] sm:$0xf]
        %v608 = vld [vmem:[%s505 + $0x14] sm:$0xf]
        %v609 = vld [vmem:[%s505 + $0x18] sm:$0xf]
        %v610 = vld [vmem:[%s505 + $0x1c] sm:$0xf]
        %v611 = vld [vmem:[%s505 + $0x20] sm:$0xf]
        %v612 = vld [vmem:[%s505 + $0x24] sm:$0xf]
        %v613 = vld [vmem:[%s505 + $0x28] sm:$0xf]
        %v614 = vld [vmem:[%s505 + $0x2c] sm:$0xf]
        %v615 = vld [vmem:[%s505 + $0x30] sm:$0xf]
        %v616 = vld [vmem:[%s505 + $0x34] sm:$0xf]
        %v617 = vld [vmem:[%s505 + $0x38] sm:$0xf]
        %v618 = vld [vmem:[%s505 + $0x3c] sm:$0xf]
        %v619 = vld [vmem:[%s505 + $0x40] sm:$0xf]
        %v620 = vld [vmem:[%s505 + $0x44] sm:$0xf]
        %v621 = vld [vmem:[%s505 + $0x48] sm:$0xf]
        %v622 = vld [vmem:[%s505 + $0x4c] sm:$0xf]
        %v623 = vld [vmem:[%s505 + $0x50] sm:$0xf]
        %v624 = vld [vmem:[%s505 + $0x54] sm:$0xf]
        %v625 = vld [vmem:[%s505 + $0x58] sm:$0xf]
        %v626 = vld [vmem:[%s505 + $0x5c] sm:$0xf]
        %v627 = vld [vmem:[%s505 + $0x60] sm:$0xf]
        %v628 = vld [vmem:[%s505 + $0x64] sm:$0xf]
        %v629 = vld [vmem:[%s505 + $0x68] sm:$0xf]
        %v630 = vld [vmem:[%s505 + $0x6c] sm:$0xf]
        %v631 = vld [vmem:[%s505 + $0x70] sm:$0xf]
        %v632 = vld [vmem:[%s505 + $0x74] sm:$0xf]
        %v633 = vld [vmem:[%s505 + $0x78] sm:$0xf]
        %v634 = vld [vmem:[%s505 + $0x7c] sm:$0xf]
        %v635 = vld [vmem:[%s505 + $0x80] sm:$0xf]
        %v636 = vld [vmem:[%s505 + $0x84] sm:$0xf]
        %v637 = vld [vmem:[%s505 + $0x88] sm:$0xf]
        %v638 = vld [vmem:[%s505 + $0x8c] sm:$0xf]
        %v639 = vld [vmem:[%s505 + $0x90] sm:$0xf]
        %v640 = vld [vmem:[%s505 + $0x94] sm:$0xf]
        %v641 = vld [vmem:[%s505 + $0x98] sm:$0xf]
        %v642 = vld [vmem:[%s505 + $0x9c] sm:$0xf]
        %v643 = vld [vmem:[%s505 + $0xa0] sm:$0xf]
        %v644 = vld [vmem:[%s505 + $0xa4] sm:$0xf]
        %v645 = vld [vmem:[%s505 + $0xa8] sm:$0xf]
        %v646 = vld [vmem:[%s505 + $0xac] sm:$0xf]
        %v647 = vld [vmem:[%s505 + $0xb0] sm:$0xf]
        %v648 = vld [vmem:[%s505 + $0xb4] sm:$0xf]
        %v649 = vld [vmem:[%s505 + $0xb8] sm:$0xf]
        %v650 = vld [vmem:[%s505 + $0xbc] sm:$0xf]
        %v651 = vld [vmem:[%s505 + $0xc0] sm:$0xf]
        %v652 = vld [vmem:[%s505 + $0xc4] sm:$0xf]
        %v653 = vld [vmem:[%s505 + $0xc8] sm:$0xf]
        %v654 = vld [vmem:[%s505 + $0xcc] sm:$0xf]
        %v655 = vld [vmem:[%s505 + $0xd0] sm:$0xf]
        %v656 = vld [vmem:[%s505 + $0xd4] sm:$0xf]
        %v657 = vld [vmem:[%s505 + $0xd8] sm:$0xf]
        %v658 = vld [vmem:[%s505 + $0xdc] sm:$0xf]
        %v659 = vld [vmem:[%s505 + $0xe0] sm:$0xf]
        %v660 = vld [vmem:[%s505 + $0xe4] sm:$0xf]
        %v661 = vld [vmem:[%s505 + $0xe8] sm:$0xf]
        %v662 = vld [vmem:[%s505 + $0xec] sm:$0xf]
        %v663 = vld [vmem:[%s505 + $0xf0] sm:$0xf]
        %v664 = vld [vmem:[%s505 + $0xf4] sm:$0xf]
        %v665 = vld [vmem:[%s505 + $0xf8] sm:$0xf]
        %v666 = vld [vmem:[%s505 + $0xfc] sm:$0xf]
        %v667 = vld [vmem:[%s505 + $0x100] sm:$0xf]
        %v668 = vld [vmem:[%s505 + $0x104] sm:$0xf]
        %v669 = vld [vmem:[%s505 + $0x108] sm:$0xf]
        %v670 = vld [vmem:[%s505 + $0x10c] sm:$0xf]
        %v671 = vld [vmem:[%s505 + $0x110] sm:$0xf]
        %v672 = vld [vmem:[%s505 + $0x114] sm:$0xf]
        %v673 = vld [vmem:[%s505 + $0x118] sm:$0xf]
        %v674 = vld [vmem:[%s505 + $0x11c] sm:$0xf]
        %v675 = vld [vmem:[%s505 + $0x120] sm:$0xf]
        %v676 = vld [vmem:[%s505 + $0x124] sm:$0xf]
        %v677 = vld [vmem:[%s505 + $0x128] sm:$0xf]
        %v678 = vld [vmem:[%s505 + $0x12c] sm:$0xf]
        %v679 = vld [vmem:[%s505 + $0x130] sm:$0xf]
        %v680 = vld [vmem:[%s505 + $0x134] sm:$0xf]
        %v681 = vld [vmem:[%s505 + $0x138] sm:$0xf]
        %v682 = vld [vmem:[%s505 + $0x13c] sm:$0xf]
        %v683 = vld [vmem:[%s505 + $0x140] sm:$0xf]
        %v684 = vld [vmem:[%s505 + $0x144] sm:$0xf]
        %v685 = vld [vmem:[%s505 + $0x148] sm:$0xf]
        %v686 = vld [vmem:[%s505 + $0x14c] sm:$0xf]
        %v687 = vld [vmem:[%s505 + $0x150] sm:$0xf]
        %v688 = vld [vmem:[%s505 + $0x154] sm:$0xf]
        %v689 = vld [vmem:[%s505 + $0x158] sm:$0xf]
        %v690 = vld [vmem:[%s505 + $0x15c] sm:$0xf]
        %v691 = vld [vmem:[%s505 + $0x160] sm:$0xf]
        %v692 = vld [vmem:[%s505 + $0x164] sm:$0xf]
        %v693 = vld [vmem:[%s505 + $0x168] sm:$0xf]
        %v694 = vld [vmem:[%s505 + $0x16c] sm:$0xf]
        %v695 = vld [vmem:[%s505 + $0x170] sm:$0xf]
        %v696 = vld [vmem:[%s505 + $0x174] sm:$0xf]
        %v697 = vld [vmem:[%s505 + $0x178] sm:$0xf]
        %v698 = vld [vmem:[%s505 + $0x17c] sm:$0xf]
        %v699 = vld [vmem:[%s505 + $0x180] sm:$0xf]
        %v700 = vld [vmem:[%s505 + $0x184] sm:$0xf]
        %v701 = vld [vmem:[%s505 + $0x188] sm:$0xf]
        %v702 = vld [vmem:[%s505 + $0x18c] sm:$0xf]
        %v703 = vld [vmem:[%s505 + $0x190] sm:$0xf]
        %v704 = vld [vmem:[%s505 + $0x194] sm:$0xf]
        %v705 = vld [vmem:[%s505 + $0x198] sm:$0xf]
        %v706 = vld [vmem:[%s505 + $0x19c] sm:$0xf]
        %v707 = vld [vmem:[%s505 + $0x1a0] sm:$0xf]
        %v708 = vld [vmem:[%s505 + $0x1a4] sm:$0xf]
        %v709 = vld [vmem:[%s505 + $0x1a8] sm:$0xf]
        %v710 = vld [vmem:[%s505 + $0x1ac] sm:$0xf]
        %v711 = vld [vmem:[%s505 + $0x1b0] sm:$0xf]
        %v712 = vld [vmem:[%s505 + $0x1b4] sm:$0xf]
        %v713 = vld [vmem:[%s505 + $0x1b8] sm:$0xf]
        %v714 = vld [vmem:[%s505 + $0x1bc] sm:$0xf]
        %v715 = vld [vmem:[%s505 + $0x1c0] sm:$0xf]
        %v716 = vld [vmem:[%s505 + $0x1c4] sm:$0xf]
        %v717 = vld [vmem:[%s505 + $0x1c8] sm:$0xf]
        %v718 = vld [vmem:[%s505 + $0x1cc] sm:$0xf]
        %v719 = vld [vmem:[%s505 + $0x1d0] sm:$0xf]
        %v720 = vld [vmem:[%s505 + $0x1d4] sm:$0xf]
        %v721 = vld [vmem:[%s505 + $0x1d8] sm:$0xf]
        %v722 = vld [vmem:[%s505 + $0x1dc] sm:$0xf]
        %v723 = vld [vmem:[%s505 + $0x1e0] sm:$0xf]
        %v724 = vld [vmem:[%s505 + $0x1e4] sm:$0xf]
        %v725 = vld [vmem:[%s505 + $0x1e8] sm:$0xf]
        %v726 = vld [vmem:[%s505 + $0x1ec] sm:$0xf]
        %v727 = vld [vmem:[%s505 + $0x1f0] sm:$0xf]
        %v728 = vld [vmem:[%s505 + $0x1f4] sm:$0xf]
        %v729 = vld [vmem:[%s505 + $0x1f8] sm:$0xf]
        %v730 = vld [vmem:[%s505 + $0x1fc] sm:$0xf]
        %v731 = vld [vmem:[%s505 + $0x200] sm:$0xf]
        %v732 = vld [vmem:[%s505 + $0x204] sm:$0xf]
        %v733 = vld [vmem:[%s505 + $0x208] sm:$0xf]
        %v734 = vld [vmem:[%s505 + $0x20c] sm:$0xf]
        %v735 = vld [vmem:[%s505 + $0x210] sm:$0xf]
        %v736 = vld [vmem:[%s505 + $0x214] sm:$0xf]
        %v737 = vld [vmem:[%s505 + $0x218] sm:$0xf]
        %v738 = vld [vmem:[%s505 + $0x21c] sm:$0xf]
        %v739 = vld [vmem:[%s505 + $0x220] sm:$0xf]
        %v740 = vld [vmem:[%s505 + $0x224] sm:$0xf]
        %v741 = vld [vmem:[%s505 + $0x228] sm:$0xf]
        %v742 = vld [vmem:[%s505 + $0x22c] sm:$0xf]
        %v743 = vld [vmem:[%s505 + $0x230] sm:$0xf]
        %v744 = vld [vmem:[%s505 + $0x234] sm:$0xf]
        %v745 = vld [vmem:[%s505 + $0x238] sm:$0xf]
        %v746 = vld [vmem:[%s505 + $0x23c] sm:$0xf]
        %v747 = vld [vmem:[%s505 + $0x240] sm:$0xf]
        %v748 = vld [vmem:[%s505 + $0x244] sm:$0xf]
        %v749 = vld [vmem:[%s505 + $0x248] sm:$0xf]
        %v750 = vld [vmem:[%s505 + $0x24c] sm:$0xf]
        %v751 = vld [vmem:[%s505 + $0x250] sm:$0xf]
        %v752 = vld [vmem:[%s505 + $0x254] sm:$0xf]
        %v753 = vld [vmem:[%s505 + $0x258] sm:$0xf]
        %v754 = vld [vmem:[%s505 + $0x25c] sm:$0xf]
        %v755 = vld [vmem:[%s505 + $0x260] sm:$0xf]
        %v756 = vld [vmem:[%s505 + $0x264] sm:$0xf]
        %v757 = vld [vmem:[%s505 + $0x268] sm:$0xf]
        %v758 = vld [vmem:[%s505 + $0x26c] sm:$0xf]
        %v759 = vld [vmem:[%s505 + $0x270] sm:$0xf]
        %v760 = vld [vmem:[%s505 + $0x274] sm:$0xf]
        %v761 = vld [vmem:[%s505 + $0x278] sm:$0xf]
        %v762 = vld [vmem:[%s505 + $0x27c] sm:$0xf]
        %v763 = vld [vmem:[%s505 + $0x280] sm:$0xf]
        %v764 = vld [vmem:[%s505 + $0x284] sm:$0xf]
        %v765 = vld [vmem:[%s505 + $0x288] sm:$0xf]
        %v766 = vld [vmem:[%s505 + $0x28c] sm:$0xf]
        %v767 = vld [vmem:[%s505 + $0x290] sm:$0xf]
        %v768 = vld [vmem:[%s505 + $0x294] sm:$0xf]
        %v769 = vld [vmem:[%s505 + $0x298] sm:$0xf]
        %v770 = vld [vmem:[%s505 + $0x29c] sm:$0xf]
        %v771 = vld [vmem:[%s505 + $0x2a0] sm:$0xf]
        %v772 = vld [vmem:[%s505 + $0x2a4] sm:$0xf]
        %v773 = vld [vmem:[%s505 + $0x2a8] sm:$0xf]
        %v774 = vld [vmem:[%s505 + $0x2ac] sm:$0xf]
        %v775 = vld [vmem:[%s505 + $0x2b0] sm:$0xf]
        %v776 = vld [vmem:[%s505 + $0x2b4] sm:$0xf]
        %v777 = vld [vmem:[%s505 + $0x2b8] sm:$0xf]
        %v778 = vld [vmem:[%s505 + $0x2bc] sm:$0xf]
        %v779 = vld [vmem:[%s505 + $0x2c0] sm:$0xf]
        %v780 = vld [vmem:[%s505 + $0x2c4] sm:$0xf]
        %v781 = vld [vmem:[%s505 + $0x2c8] sm:$0xf]
        %v782 = vld [vmem:[%s505 + $0x2cc] sm:$0xf]
        %v783 = vld [vmem:[%s505 + $0x2d0] sm:$0xf]
        %v784 = vld [vmem:[%s505 + $0x2d4] sm:$0xf]
        %v785 = vld [vmem:[%s505 + $0x2d8] sm:$0xf]
        %v786 = vld [vmem:[%s505 + $0x2dc] sm:$0xf]
        %v787 = vld [vmem:[%s505 + $0x2e0] sm:$0xf]
        %v788 = vld [vmem:[%s505 + $0x2e4] sm:$0xf]
        %v789 = vld [vmem:[%s505 + $0x2e8] sm:$0xf]
        %v790 = vld [vmem:[%s505 + $0x2ec] sm:$0xf]
        %v791 = vld [vmem:[%s505 + $0x2f0] sm:$0xf]
        %v792 = vld [vmem:[%s505 + $0x2f4] sm:$0xf]
        %v793 = vld [vmem:[%s505 + $0x2f8] sm:$0xf]
        %v794 = vld [vmem:[%s505 + $0x2fc] sm:$0xf]
        %v795 = vld [vmem:[%s505 + $0x300] sm:$0xf]
        %v796 = vld [vmem:[%s505 + $0x304] sm:$0xf]
        %v797 = vld [vmem:[%s505 + $0x308] sm:$0xf]
        %v798 = vld [vmem:[%s505 + $0x30c] sm:$0xf]
        %v799 = vld [vmem:[%s505 + $0x310] sm:$0xf]
        %v800 = vld [vmem:[%s505 + $0x314] sm:$0xf]
        %v801 = vld [vmem:[%s505 + $0x318] sm:$0xf]
        %v802 = vld [vmem:[%s505 + $0x31c] sm:$0xf]
        %v803 = vld [vmem:[%s505 + $0x320] sm:$0xf]
        %v804 = vld [vmem:[%s505 + $0x324] sm:$0xf]
        %v805 = vld [vmem:[%s505 + $0x328] sm:$0xf]
        %v806 = vld [vmem:[%s505 + $0x32c] sm:$0xf]
        %v807 = vld [vmem:[%s505 + $0x330] sm:$0xf]
        %v808 = vld [vmem:[%s505 + $0x334] sm:$0xf]
        %v809 = vld [vmem:[%s505 + $0x338] sm:$0xf]
        %v810 = vld [vmem:[%s505 + $0x33c] sm:$0xf]
        %v811 = vld [vmem:[%s505 + $0x340] sm:$0xf]
        %v812 = vld [vmem:[%s505 + $0x344] sm:$0xf]
        %v813 = vld [vmem:[%s505 + $0x348] sm:$0xf]
        %v814 = vld [vmem:[%s505 + $0x34c] sm:$0xf]
        %v815 = vld [vmem:[%s505 + $0x350] sm:$0xf]
        %v816 = vld [vmem:[%s505 + $0x354] sm:$0xf]
        %v817 = vld [vmem:[%s505 + $0x358] sm:$0xf]
        %v818 = vld [vmem:[%s505 + $0x35c] sm:$0xf]
        %v819 = vld [vmem:[%s505 + $0x360] sm:$0xf]
        %v820 = vld [vmem:[%s505 + $0x364] sm:$0xf]
        %v821 = vld [vmem:[%s505 + $0x368] sm:$0xf]
        %v822 = vld [vmem:[%s505 + $0x36c] sm:$0xf]
        %v823 = vld [vmem:[%s505 + $0x370] sm:$0xf]
        %v824 = vld [vmem:[%s505 + $0x374] sm:$0xf]
        %v825 = vld [vmem:[%s505 + $0x378] sm:$0xf]
        %v826 = vld [vmem:[%s505 + $0x37c] sm:$0xf]
        %v827 = vld [vmem:[%s505 + $0x380] sm:$0xf]
        %v828 = vld [vmem:[%s505 + $0x384] sm:$0xf]
        %v829 = vld [vmem:[%s505 + $0x388] sm:$0xf]
        %v830 = vld [vmem:[%s505 + $0x38c] sm:$0xf]
        %v831 = vld [vmem:[%s505 + $0x390] sm:$0xf]
        %v832 = vld [vmem:[%s505 + $0x394] sm:$0xf]
        %v833 = vld [vmem:[%s505 + $0x398] sm:$0xf]
        %v834 = vld [vmem:[%s505 + $0x39c] sm:$0xf]
        %v835 = vld [vmem:[%s505 + $0x3a0] sm:$0xf]
        %v836 = vld [vmem:[%s505 + $0x3a4] sm:$0xf]
        %v837 = vld [vmem:[%s505 + $0x3a8] sm:$0xf]
        %v838 = vld [vmem:[%s505 + $0x3ac] sm:$0xf]
        %v839 = vld [vmem:[%s505 + $0x3b0] sm:$0xf]
        %v840 = vld [vmem:[%s505 + $0x3b4] sm:$0xf]
        %v841 = vld [vmem:[%s505 + $0x3b8] sm:$0xf]
        %v842 = vld [vmem:[%s505 + $0x3bc] sm:$0xf]
        %v843 = vld [vmem:[%s505 + $0x3c0] sm:$0xf]
        %v844 = vld [vmem:[%s505 + $0x3c4] sm:$0xf]
        %v845 = vld [vmem:[%s505 + $0x3c8] sm:$0xf]
        %v846 = vld [vmem:[%s505 + $0x3cc] sm:$0xf]
        %v847 = vld [vmem:[%s505 + $0x3d0] sm:$0xf]
        %v848 = vld [vmem:[%s505 + $0x3d4] sm:$0xf]
        %v849 = vld [vmem:[%s505 + $0x3d8] sm:$0xf]
        %v850 = vld [vmem:[%s505 + $0x3dc] sm:$0xf]
        %v851 = vld [vmem:[%s505 + $0x3e0] sm:$0xf]
        %v852 = vld [vmem:[%s505 + $0x3e4] sm:$0xf]
        %v853 = vld [vmem:[%s505 + $0x3e8] sm:$0xf]
        %v854 = vld [vmem:[%s505 + $0x3ec] sm:$0xf]
        %v855 = vld [vmem:[%s505 + $0x3f0] sm:$0xf]
        %v856 = vld [vmem:[%s505 + $0x3f4] sm:$0xf]
        %v857 = vld [vmem:[%s505 + $0x3f8] sm:$0xf]
        %v858 = vld [vmem:[%s505 + $0x3fc] sm:$0xf]
        %v859 = vld [vmem:[%s505 + $0x400] sm:$0xf]
        %v860 = vld [vmem:[%s505 + $0x404] sm:$0xf]
        %v861 = vld [vmem:[%s505 + $0x408] sm:$0xf]
        %v862 = vld [vmem:[%s505 + $0x40c] sm:$0xf]
        %v863 = vld [vmem:[%s505 + $0x410] sm:$0xf]
        %v864 = vld [vmem:[%s505 + $0x414] sm:$0xf]
        %v865 = vld [vmem:[%s505 + $0x418] sm:$0xf]
        %v866 = vld [vmem:[%s505 + $0x41c] sm:$0xf]
        %v867 = vld [vmem:[%s505 + $0x420] sm:$0xf]
        %v868 = vld [vmem:[%s505 + $0x424] sm:$0xf]
        %v869 = vld [vmem:[%s505 + $0x428] sm:$0xf]
        %v870 = vld [vmem:[%s505 + $0x42c] sm:$0xf]
        %v871 = vld [vmem:[%s505 + $0x430] sm:$0xf]
        %v872 = vld [vmem:[%s505 + $0x434] sm:$0xf]
        %v873 = vld [vmem:[%s505 + $0x438] sm:$0xf]
        %v874 = vld [vmem:[%s505 + $0x43c] sm:$0xf]
        %v875 = vld [vmem:[%s505 + $0x440] sm:$0xf]
        %v876 = vld [vmem:[%s505 + $0x444] sm:$0xf]
        %v877 = vld [vmem:[%s505 + $0x448] sm:$0xf]
        %v878 = vld [vmem:[%s505 + $0x44c] sm:$0xf]
        %v879 = vld [vmem:[%s505 + $0x450] sm:$0xf]
        %v880 = vld [vmem:[%s505 + $0x454] sm:$0xf]
        %v881 = vld [vmem:[%s505 + $0x458] sm:$0xf]
        %v882 = vld [vmem:[%s505 + $0x45c] sm:$0xf]
        %v883 = vld [vmem:[%s505 + $0x460] sm:$0xf]
        %v884 = vld [vmem:[%s505 + $0x464] sm:$0xf]
        %v885 = vld [vmem:[%s505 + $0x468] sm:$0xf]
        %v886 = vld [vmem:[%s505 + $0x46c] sm:$0xf]
        %v887 = vld [vmem:[%s505 + $0x470] sm:$0xf]
        %v888 = vld [vmem:[%s505 + $0x474] sm:$0xf]
        %v889 = vld [vmem:[%s505 + $0x478] sm:$0xf]
        %v890 = vld [vmem:[%s505 + $0x47c] sm:$0xf]
        %v891 = vld [vmem:[%s505 + $0x480] sm:$0xf]
        %v892 = vld [vmem:[%s505 + $0x484] sm:$0xf]
        %v893 = vld [vmem:[%s505 + $0x488] sm:$0xf]
        %v894 = vld [vmem:[%s505 + $0x48c] sm:$0xf]
        %v895 = vld [vmem:[%s505 + $0x490] sm:$0xf]
        %v896 = vld [vmem:[%s505 + $0x494] sm:$0xf]
        %v897 = vld [vmem:[%s505 + $0x498] sm:$0xf]
        %v898 = vld [vmem:[%s505 + $0x49c] sm:$0xf]
        %v899 = vld [vmem:[%s505 + $0x4a0] sm:$0xf]
        %v900 = vld [vmem:[%s505 + $0x4a4] sm:$0xf]
        %v901 = vld [vmem:[%s505 + $0x4a8] sm:$0xf]
        %v902 = vld [vmem:[%s505 + $0x4ac] sm:$0xf]
        %v903 = vld [vmem:[%s505 + $0x4b0] sm:$0xf]
        %v904 = vld [vmem:[%s505 + $0x4b4] sm:$0xf]
        %v905 = vld [vmem:[%s505 + $0x4b8] sm:$0xf]
        %v906 = vld [vmem:[%s505 + $0x4bc] sm:$0xf]
        %v907 = vld [vmem:[%s505 + $0x4c0] sm:$0xf]
        %v908 = vld [vmem:[%s505 + $0x4c4] sm:$0xf]
        %v909 = vld [vmem:[%s505 + $0x4c8] sm:$0xf]
        %v910 = vld [vmem:[%s505 + $0x4cc] sm:$0xf]
        %v911 = vld [vmem:[%s505 + $0x4d0] sm:$0xf]
        %v912 = vld [vmem:[%s505 + $0x4d4] sm:$0xf]
        %v913 = vld [vmem:[%s505 + $0x4d8] sm:$0xf]
        %v914 = vld [vmem:[%s505 + $0x4dc] sm:$0xf]
        %v915 = vld [vmem:[%s505 + $0x4e0] sm:$0xf]
        %v916 = vld [vmem:[%s505 + $0x4e4] sm:$0xf]
        %v917 = vld [vmem:[%s505 + $0x4e8] sm:$0xf]
        %v918 = vld [vmem:[%s505 + $0x4ec] sm:$0xf]
        %v919 = vld [vmem:[%s505 + $0x4f0] sm:$0xf]
        %v920 = vld [vmem:[%s505 + $0x4f4] sm:$0xf]
        %v921 = vld [vmem:[%s505 + $0x4f8] sm:$0xf]
        %v922 = vld [vmem:[%s505 + $0x4fc] sm:$0xf]
        %v923 = vld [vmem:[%s505 + $0x500] sm:$0xf]
        %v924 = vld [vmem:[%s505 + $0x504] sm:$0xf]
        %v925 = vld [vmem:[%s505 + $0x508] sm:$0xf]
        %v926 = vld [vmem:[%s505 + $0x50c] sm:$0xf]
        %v927 = vld [vmem:[%s505 + $0x510] sm:$0xf]
        %v928 = vld [vmem:[%s505 + $0x514] sm:$0xf]
        %v929 = vld [vmem:[%s505 + $0x518] sm:$0xf]
        %v930 = vld [vmem:[%s505 + $0x51c] sm:$0xf]
        %v931 = vld [vmem:[%s505 + $0x520] sm:$0xf]
        %v932 = vld [vmem:[%s505 + $0x524] sm:$0xf]
        %v933 = vld [vmem:[%s505 + $0x528] sm:$0xf]
        %v934 = vld [vmem:[%s505 + $0x52c] sm:$0xf]
        %v935 = vld [vmem:[%s505 + $0x530] sm:$0xf]
        %v936 = vld [vmem:[%s505 + $0x534] sm:$0xf]
        %v937 = vld [vmem:[%s505 + $0x538] sm:$0xf]
        %v938 = vld [vmem:[%s505 + $0x53c] sm:$0xf]
        %v939 = vld [vmem:[%s505 + $0x540] sm:$0xf]
        %v940 = vld [vmem:[%s505 + $0x544] sm:$0xf]
        %v941 = vld [vmem:[%s505 + $0x548] sm:$0xf]
        %v942 = vld [vmem:[%s505 + $0x54c] sm:$0xf]
        %v943 = vld [vmem:[%s505 + $0x550] sm:$0xf]
        %v944 = vld [vmem:[%s505 + $0x554] sm:$0xf]
        %v945 = vld [vmem:[%s505 + $0x558] sm:$0xf]
        %v946 = vld [vmem:[%s505 + $0x55c] sm:$0xf]
        %v947 = vld [vmem:[%s505 + $0x560] sm:$0xf]
        %v948 = vld [vmem:[%s505 + $0x564] sm:$0xf]
        %v949 = vld [vmem:[%s505 + $0x568] sm:$0xf]
        %v950 = vld [vmem:[%s505 + $0x56c] sm:$0xf]
        %v951 = vld [vmem:[%s505 + $0x570] sm:$0xf]
        %v952 = vld [vmem:[%s505 + $0x574] sm:$0xf]
        %v953 = vld [vmem:[%s505 + $0x578] sm:$0xf]
        %v954 = vld [vmem:[%s505 + $0x57c] sm:$0xf]
        %v955 = vld [vmem:[%s505 + $0x580] sm:$0xf]
        %v956 = vld [vmem:[%s505 + $0x584] sm:$0xf]
        %v957 = vld [vmem:[%s505 + $0x588] sm:$0xf]
        %v958 = vld [vmem:[%s505 + $0x58c] sm:$0xf]
        %v959 = vld [vmem:[%s505 + $0x590] sm:$0xf]
        %v960 = vld [vmem:[%s505 + $0x594] sm:$0xf]
        %v961 = vld [vmem:[%s505 + $0x598] sm:$0xf]
        %v962 = vld [vmem:[%s505 + $0x59c] sm:$0xf]
        %v963 = vld [vmem:[%s505 + $0x5a0] sm:$0xf]
        %v964 = vld [vmem:[%s505 + $0x5a4] sm:$0xf]
        %v965 = vld [vmem:[%s505 + $0x5a8] sm:$0xf]
        %v966 = vld [vmem:[%s505 + $0x5ac] sm:$0xf]
        %v967 = vld [vmem:[%s505 + $0x5b0] sm:$0xf]
        %v968 = vld [vmem:[%s505 + $0x5b4] sm:$0xf]
        %v969 = vld [vmem:[%s505 + $0x5b8] sm:$0xf]
        %v970 = vld [vmem:[%s505 + $0x5bc] sm:$0xf]
        %v971 = vld [vmem:[%s505 + $0x5c0] sm:$0xf]
        %v972 = vld [vmem:[%s505 + $0x5c4] sm:$0xf]
        %v973 = vld [vmem:[%s505 + $0x5c8] sm:$0xf]
        %v974 = vld [vmem:[%s505 + $0x5cc] sm:$0xf]
        %v975 = vld [vmem:[%s505 + $0x5d0] sm:$0xf]
        %v976 = vld [vmem:[%s505 + $0x5d4] sm:$0xf]
        %v977 = vld [vmem:[%s505 + $0x5d8] sm:$0xf]
        %v978 = vld [vmem:[%s505 + $0x5dc] sm:$0xf]
        %v979 = vld [vmem:[%s505 + $0x5e0] sm:$0xf]
        %v980 = vld [vmem:[%s505 + $0x5e4] sm:$0xf]
        %v981 = vld [vmem:[%s505 + $0x5e8] sm:$0xf]
        %v982 = vld [vmem:[%s505 + $0x5ec] sm:$0xf]
        %v983 = vld [vmem:[%s505 + $0x5f0] sm:$0xf]
        %v984 = vld [vmem:[%s505 + $0x5f4] sm:$0xf]
        %v985 = vld [vmem:[%s505 + $0x5f8] sm:$0xf]
        %v986 = vld [vmem:[%s505 + $0x5fc] sm:$0xf]
        %v987 = vld [vmem:[%s505 + $0x600] sm:$0xf]
        %v988 = vld [vmem:[%s505 + $0x604] sm:$0xf]
        %v989 = vld [vmem:[%s505 + $0x608] sm:$0xf]
        %v990 = vld [vmem:[%s505 + $0x60c] sm:$0xf]
        %v991 = vld [vmem:[%s505 + $0x610] sm:$0xf]
        %v992 = vld [vmem:[%s505 + $0x614] sm:$0xf]
        %v993 = vld [vmem:[%s505 + $0x618] sm:$0xf]
        %v994 = vld [vmem:[%s505 + $0x61c] sm:$0xf]
        %v995 = vld [vmem:[%s505 + $0x620] sm:$0xf]
        %v996 = vld [vmem:[%s505 + $0x624] sm:$0xf]
        %v997 = vld [vmem:[%s505 + $0x628] sm:$0xf]
        %v998 = vld [vmem:[%s505 + $0x62c] sm:$0xf]
        %v999 = vld [vmem:[%s505 + $0x630] sm:$0xf]
        %v1000 = vld [vmem:[%s505 + $0x634] sm:$0xf]
        %v1001 = vld [vmem:[%s505 + $0x638] sm:$0xf]
        %v1002 = vld [vmem:[%s505 + $0x63c] sm:$0xf]
        %v1003 = vld [vmem:[%s505 + $0x640] sm:$0xf]
        %v1004 = vld [vmem:[%s505 + $0x644] sm:$0xf]
        %v1005 = vld [vmem:[%s505 + $0x648] sm:$0xf]
        %v1006 = vld [vmem:[%s505 + $0x64c] sm:$0xf]
        %v1007 = vld [vmem:[%s505 + $0x650] sm:$0xf]
        %v1008 = vld [vmem:[%s505 + $0x654] sm:$0xf]
        %v1009 = vld [vmem:[%s505 + $0x658] sm:$0xf]
        %v1010 = vld [vmem:[%s505 + $0x65c] sm:$0xf]
        %v1011 = vld [vmem:[%s505 + $0x660] sm:$0xf]
        %v1012 = vld [vmem:[%s505 + $0x664] sm:$0xf]
        %v1013 = vld [vmem:[%s505 + $0x668] sm:$0xf]
        %v1014 = vld [vmem:[%s505 + $0x66c] sm:$0xf]
        %v1015 = vld [vmem:[%s505 + $0x670] sm:$0xf]
        %v1016 = vld [vmem:[%s505 + $0x674] sm:$0xf]
        %v1017 = vld [vmem:[%s505 + $0x678] sm:$0xf]
        %v1018 = vld [vmem:[%s505 + $0x67c] sm:$0xf]
        %v1019 = vld [vmem:[%s505 + $0x680] sm:$0xf]
        %v1020 = vld [vmem:[%s505 + $0x684] sm:$0xf]
        %v1021 = vld [vmem:[%s505 + $0x688] sm:$0xf]
        %v1022 = vld [vmem:[%s505 + $0x68c] sm:$0xf]
        %v1023 = vld [vmem:[%s505 + $0x690] sm:$0xf]
        %v1024 = vld [vmem:[%s505 + $0x694] sm:$0xf]
        %v1025 = vld [vmem:[%s505 + $0x698] sm:$0xf]
        %v1026 = vld [vmem:[%s505 + $0x69c] sm:$0xf]
        %v1027 = vld [vmem:[%s505 + $0x6a0] sm:$0xf]
        %v1028 = vld [vmem:[%s505 + $0x6a4] sm:$0xf]
        %v1029 = vld [vmem:[%s505 + $0x6a8] sm:$0xf]
        %v1030 = vld [vmem:[%s505 + $0x6ac] sm:$0xf]
        %v1031 = vld [vmem:[%s505 + $0x6b0] sm:$0xf]
        %v1032 = vld [vmem:[%s505 + $0x6b4] sm:$0xf]
        %v1033 = vld [vmem:[%s505 + $0x6b8] sm:$0xf]
        %v1034 = vld [vmem:[%s505 + $0x6bc] sm:$0xf]
        %v1035 = vld [vmem:[%s505 + $0x6c0] sm:$0xf]
        %v1036 = vld [vmem:[%s505 + $0x6c4] sm:$0xf]
        %v1037 = vld [vmem:[%s505 + $0x6c8] sm:$0xf]
        %v1038 = vld [vmem:[%s505 + $0x6cc] sm:$0xf]
        %v1039 = vld [vmem:[%s505 + $0x6d0] sm:$0xf]
        %v1040 = vld [vmem:[%s505 + $0x6d4] sm:$0xf]
        %v1041 = vld [vmem:[%s505 + $0x6d8] sm:$0xf]
        %v1042 = vld [vmem:[%s505 + $0x6dc] sm:$0xf]
        %v1043 = vld [vmem:[%s505 + $0x6e0] sm:$0xf]
        %v1044 = vld [vmem:[%s505 + $0x6e4] sm:$0xf]
        %v1045 = vld [vmem:[%s505 + $0x6e8] sm:$0xf]
        %v1046 = vld [vmem:[%s505 + $0x6ec] sm:$0xf]
        %v1047 = vld [vmem:[%s505 + $0x6f0] sm:$0xf]
        %v1048 = vld [vmem:[%s505 + $0x6f4] sm:$0xf]
        %v1049 = vld [vmem:[%s505 + $0x6f8] sm:$0xf]
        %v1050 = vld [vmem:[%s505 + $0x6fc] sm:$0xf]
        %v1051 = vld [vmem:[%s505 + $0x700] sm:$0xf]
        %v1052 = vld [vmem:[%s505 + $0x704] sm:$0xf]
        %v1053 = vld [vmem:[%s505 + $0x708] sm:$0xf]
        %v1054 = vld [vmem:[%s505 + $0x70c] sm:$0xf]
        %v1055 = vld [vmem:[%s505 + $0x710] sm:$0xf]
        %v1056 = vld [vmem:[%s505 + $0x714] sm:$0xf]
        %v1057 = vld [vmem:[%s505 + $0x718] sm:$0xf]
        %v1058 = vld [vmem:[%s505 + $0x71c] sm:$0xf]
        %v1059 = vld [vmem:[%s505 + $0x720] sm:$0xf]
        %v1060 = vld [vmem:[%s505 + $0x724] sm:$0xf]
        %v1061 = vld [vmem:[%s505 + $0x728] sm:$0xf]
        %v1062 = vld [vmem:[%s505 + $0x72c] sm:$0xf]
        %v1063 = vld [vmem:[%s505 + $0x730] sm:$0xf]
        %v1064 = vld [vmem:[%s505 + $0x734] sm:$0xf]
        %v1065 = vld [vmem:[%s505 + $0x738] sm:$0xf]
        %v1066 = vld [vmem:[%s505 + $0x73c] sm:$0xf]
        %v1067 = vld [vmem:[%s505 + $0x740] sm:$0xf]
        %v1068 = vld [vmem:[%s505 + $0x744] sm:$0xf]
        %v1069 = vld [vmem:[%s505 + $0x748] sm:$0xf]
        %v1070 = vld [vmem:[%s505 + $0x74c] sm:$0xf]
        %v1071 = vld [vmem:[%s505 + $0x750] sm:$0xf]
        %v1072 = vld [vmem:[%s505 + $0x754] sm:$0xf]
        %v1073 = vld [vmem:[%s505 + $0x758] sm:$0xf]
        %v1074 = vld [vmem:[%s505 + $0x75c] sm:$0xf]
        %v1075 = vld [vmem:[%s505 + $0x760] sm:$0xf]
        %v1076 = vld [vmem:[%s505 + $0x764] sm:$0xf]
        %v1077 = vld [vmem:[%s505 + $0x768] sm:$0xf]
        %v1078 = vld [vmem:[%s505 + $0x76c] sm:$0xf]
        %v1079 = vld [vmem:[%s505 + $0x770] sm:$0xf]
        %v1080 = vld [vmem:[%s505 + $0x774] sm:$0xf]
        %v1081 = vld [vmem:[%s505 + $0x778] sm:$0xf]
        %v1082 = vld [vmem:[%s505 + $0x77c] sm:$0xf]
        %v1083 = vld [vmem:[%s505 + $0x780] sm:$0xf]
        %v1084 = vld [vmem:[%s505 + $0x784] sm:$0xf]
        %v1085 = vld [vmem:[%s505 + $0x788] sm:$0xf]
        %v1086 = vld [vmem:[%s505 + $0x78c] sm:$0xf]
        %v1087 = vld [vmem:[%s505 + $0x790] sm:$0xf]
        %v1088 = vld [vmem:[%s505 + $0x794] sm:$0xf]
        %v1089 = vld [vmem:[%s505 + $0x798] sm:$0xf]
        %v1090 = vld [vmem:[%s505 + $0x79c] sm:$0xf]
        %v1091 = vld [vmem:[%s505 + $0x7a0] sm:$0xf]
        %v1092 = vld [vmem:[%s505 + $0x7a4] sm:$0xf]
        %v1093 = vld [vmem:[%s505 + $0x7a8] sm:$0xf]
        %v1094 = vld [vmem:[%s505 + $0x7ac] sm:$0xf]
        %v1095 = vld [vmem:[%s505 + $0x7b0] sm:$0xf]
        %v1096 = vld [vmem:[%s505 + $0x7b4] sm:$0xf]
        %v1097 = vld [vmem:[%s505 + $0x7b8] sm:$0xf]
        %v1098 = vld [vmem:[%s505 + $0x7bc] sm:$0xf]
        %v1099 = vld [vmem:[%s505 + $0x7c0] sm:$0xf]
        %v1100 = vld [vmem:[%s505 + $0x7c4] sm:$0xf]
        %v1101 = vld [vmem:[%s505 + $0x7c8] sm:$0xf]
        %v1102 = vld [vmem:[%s505 + $0x7cc] sm:$0xf]
        %v1103 = vld [vmem:[%s505 + $0x7d0] sm:$0xf]
        %v1104 = vld [vmem:[%s505 + $0x7d4] sm:$0xf]
        %v1105 = vld [vmem:[%s505 + $0x7d8] sm:$0xf]
        %v1106 = vld [vmem:[%s505 + $0x7dc] sm:$0xf]
        %v1107 = vld [vmem:[%s505 + $0x7e0] sm:$0xf]
        %v1108 = vld [vmem:[%s505 + $0x7e4] sm:$0xf]
        %v1109 = vld [vmem:[%s505 + $0x7e8] sm:$0xf]
        %v1110 = vld [vmem:[%s505 + $0x7ec] sm:$0xf]
        %v1111 = vld [vmem:[%s505 + $0x7f0] sm:$0xf]
        %v1112 = vld [vmem:[%s505 + $0x7f4] sm:$0xf]
        %v1113 = vld [vmem:[%s505 + $0x7f8] sm:$0xf]
        %v1114 = vld [vmem:[%s505 + $0x7fc] sm:$0xf]
        %s1115 = sld [smem:[#allocation3]]
        %v1116 = vstv %s1115
        %v1121 = vcombine.high %v599, %v599
        %v1123 = vunpack.c.l.s4 1966171168
        %v1124 = vunpack.c.0.s8 %v1123
        %v1125 = vlaneseq
        %v1126 = vshrl.u32 %v1125, 7
        %v1127 = vsub.s32 %v1124, %v1126
        %v1128 = vrot.slane %v599, %v1127
        %v1130 = vunpack.c.l.s4 1966171168
        %v1131 = vunpack.c.0.s8 %v1130
        %v1132 = vlaneseq
        %v1133 = vshrl.u32 %v1132, 7
        %v1134 = vsub.s32 %v1131, %v1133
        %v1135 = vrot.slane %v1121, %v1134
        %v1136 = vcombine.high %v1128, %v1128
        %v1137 = vcombine.high %v1135, %v1135
        %v1139 = vunpack.c.l.s4 1966171168
        %v1140 = vunpack.c.0.s8 %v1139
        %v1141 = vlaneseq
        %v1142 = vshrl.u32 %v1141, 7
        %v1143 = vsub.s32 %v1140, %v1142
        %v1144 = vrot.slane %v1128, %v1143
        %v1146 = vunpack.c.l.s4 1966171168
        %v1147 = vunpack.c.0.s8 %v1146
        %v1148 = vlaneseq
        %v1149 = vshrl.u32 %v1148, 7
        %v1150 = vsub.s32 %v1147, %v1149
        %v1151 = vrot.slane %v1135, %v1150
        %v1153 = vunpack.c.l.s4 1966171168
        %v1154 = vunpack.c.0.s8 %v1153
        %v1155 = vlaneseq
        %v1156 = vshrl.u32 %v1155, 7
        %v1157 = vsub.s32 %v1154, %v1156
        %v1158 = vrot.slane %v1136, %v1157
        %v1160 = vunpack.c.l.s4 1966171168
        %v1161 = vunpack.c.0.s8 %v1160
        %v1162 = vlaneseq
        %v1163 = vshrl.u32 %v1162, 7
        %v1164 = vsub.s32 %v1161, %v1163
        %v1165 = vrot.slane %v1137, %v1164
        %v1166 = vcombine.high %v1144, %v1144
        %v1167 = vcombine.high %v1151, %v1151
        %v1168 = vcombine.high %v1158, %v1158
        %v1169 = vcombine.high %v1165, %v1165
        %v1170 = vcombine.high %v600, %v600
        %v1172 = vunpack.c.l.s4 1966171168
        %v1173 = vunpack.c.0.s8 %v1172
        %v1174 = vlaneseq
        %v1175 = vshrl.u32 %v1174, 7
        %v1176 = vsub.s32 %v1173, %v1175
        %v1177 = vrot.slane %v600, %v1176
        %v1179 = vunpack.c.l.s4 1966171168
        %v1180 = vunpack.c.0.s8 %v1179
        %v1181 = vlaneseq
        %v1182 = vshrl.u32 %v1181, 7
        %v1183 = vsub.s32 %v1180, %v1182
        %v1184 = vrot.slane %v1170, %v1183
        %v1185 = vcombine.high %v1177, %v1177
        %v1186 = vcombine.high %v1184, %v1184
        %v1188 = vunpack.c.l.s4 1966171168
        %v1189 = vunpack.c.0.s8 %v1188
        %v1190 = vlaneseq
        %v1191 = vshrl.u32 %v1190, 7
        %v1192 = vsub.s32 %v1189, %v1191
        %v1193 = vrot.slane %v1177, %v1192
        %v1195 = vunpack.c.l.s4 1966171168
        %v1196 = vunpack.c.0.s8 %v1195
        %v1197 = vlaneseq
        %v1198 = vshrl.u32 %v1197, 7
        %v1199 = vsub.s32 %v1196, %v1198
        %v1200 = vrot.slane %v1184, %v1199
        %v1202 = vunpack.c.l.s4 1966171168
        %v1203 = vunpack.c.0.s8 %v1202
        %v1204 = vlaneseq
        %v1205 = vshrl.u32 %v1204, 7
        %v1206 = vsub.s32 %v1203, %v1205
        %v1207 = vrot.slane %v1185, %v1206
        %v1209 = vunpack.c.l.s4 1966171168
        %v1210 = vunpack.c.0.s8 %v1209
        %v1211 = vlaneseq
        %v1212 = vshrl.u32 %v1211, 7
        %v1213 = vsub.s32 %v1210, %v1212
        %v1214 = vrot.slane %v1186, %v1213
        %v1215 = vcombine.high %v1193, %v1193
        %v1216 = vcombine.high %v1200, %v1200
        %v1217 = vcombine.high %v1207, %v1207
        %v1218 = vcombine.high %v1214, %v1214
        %v1219 = vcombine.high %v601, %v601
        %v1221 = vunpack.c.l.s4 1966171168
        %v1222 = vunpack.c.0.s8 %v1221
        %v1223 = vlaneseq
        %v1224 = vshrl.u32 %v1223, 7
        %v1225 = vsub.s32 %v1222, %v1224
        %v1226 = vrot.slane %v601, %v1225
        %v1228 = vunpack.c.l.s4 1966171168
        %v1229 = vunpack.c.0.s8 %v1228
        %v1230 = vlaneseq
        %v1231 = vshrl.u32 %v1230, 7
        %v1232 = vsub.s32 %v1229, %v1231
        %v1233 = vrot.slane %v1219, %v1232
        %v1234 = vcombine.high %v1226, %v1226
        %v1235 = vcombine.high %v1233, %v1233
        %v1237 = vunpack.c.l.s4 1966171168
        %v1238 = vunpack.c.0.s8 %v1237
        %v1239 = vlaneseq
        %v1240 = vshrl.u32 %v1239, 7
        %v1241 = vsub.s32 %v1238, %v1240
        %v1242 = vrot.slane %v1226, %v1241
        %v1244 = vunpack.c.l.s4 1966171168
        %v1245 = vunpack.c.0.s8 %v1244
        %v1246 = vlaneseq
        %v1247 = vshrl.u32 %v1246, 7
        %v1248 = vsub.s32 %v1245, %v1247
        %v1249 = vrot.slane %v1233, %v1248
        %v1251 = vunpack.c.l.s4 1966171168
        %v1252 = vunpack.c.0.s8 %v1251
        %v1253 = vlaneseq
        %v1254 = vshrl.u32 %v1253, 7
        %v1255 = vsub.s32 %v1252, %v1254
        %v1256 = vrot.slane %v1234, %v1255
        %v1258 = vunpack.c.l.s4 1966171168
        %v1259 = vunpack.c.0.s8 %v1258
        %v1260 = vlaneseq
        %v1261 = vshrl.u32 %v1260, 7
        %v1262 = vsub.s32 %v1259, %v1261
        %v1263 = vrot.slane %v1235, %v1262
        %v1264 = vcombine.high %v1242, %v1242
        %v1265 = vcombine.high %v1249, %v1249
        %v1266 = vcombine.high %v1256, %v1256
        %v1267 = vcombine.high %v1263, %v1263
        %v1268 = vcombine.high %v602, %v602
        %v1270 = vunpack.c.l.s4 1966171168
        %v1271 = vunpack.c.0.s8 %v1270
        %v1272 = vlaneseq
        %v1273 = vshrl.u32 %v1272, 7
        %v1274 = vsub.s32 %v1271, %v1273
        %v1275 = vrot.slane %v602, %v1274
        %v1277 = vunpack.c.l.s4 1966171168
        %v1278 = vunpack.c.0.s8 %v1277
        %v1279 = vlaneseq
        %v1280 = vshrl.u32 %v1279, 7
        %v1281 = vsub.s32 %v1278, %v1280
        %v1282 = vrot.slane %v1268, %v1281
        %v1283 = vcombine.high %v1275, %v1275
        %v1284 = vcombine.high %v1282, %v1282
        %v1286 = vunpack.c.l.s4 1966171168
        %v1287 = vunpack.c.0.s8 %v1286
        %v1288 = vlaneseq
        %v1289 = vshrl.u32 %v1288, 7
        %v1290 = vsub.s32 %v1287, %v1289
        %v1291 = vrot.slane %v1275, %v1290
        %v1293 = vunpack.c.l.s4 1966171168
        %v1294 = vunpack.c.0.s8 %v1293
        %v1295 = vlaneseq
        %v1296 = vshrl.u32 %v1295, 7
        %v1297 = vsub.s32 %v1294, %v1296
        %v1298 = vrot.slane %v1282, %v1297
        %v1300 = vunpack.c.l.s4 1966171168
        %v1301 = vunpack.c.0.s8 %v1300
        %v1302 = vlaneseq
        %v1303 = vshrl.u32 %v1302, 7
        %v1304 = vsub.s32 %v1301, %v1303
        %v1305 = vrot.slane %v1283, %v1304
        %v1307 = vunpack.c.l.s4 1966171168
        %v1308 = vunpack.c.0.s8 %v1307
        %v1309 = vlaneseq
        %v1310 = vshrl.u32 %v1309, 7
        %v1311 = vsub.s32 %v1308, %v1310
        %v1312 = vrot.slane %v1284, %v1311
        %v1313 = vcombine.high %v1291, %v1291
        %v1314 = vcombine.high %v1298, %v1298
        %v1315 = vcombine.high %v1305, %v1305
        %v1316 = vcombine.high %v1312, %v1312
        %v1861 = vunpack.c.l.b16 %v603
        %v1862 = vunpack.c.l.b16 %v604
        %v1863 = vunpack.c.l.b16 %v605
        %v1864 = vunpack.c.l.b16 %v606
        %v1865 = vunpack.c.l.b16 %v607
        %v1866 = vunpack.c.l.b16 %v608
        %v1867 = vunpack.c.l.b16 %v609
        %v1868 = vunpack.c.l.b16 %v610
        %v1869 = vunpack.c.l.b16 %v611
        %v1870 = vunpack.c.l.b16 %v612
        %v1871 = vunpack.c.l.b16 %v613
        %v1872 = vunpack.c.l.b16 %v614
        %v1873 = vunpack.c.l.b16 %v615
        %v1874 = vunpack.c.l.b16 %v616
        %v1875 = vunpack.c.l.b16 %v617
        %v1876 = vunpack.c.l.b16 %v618
        %v1877 = vunpack.c.l.b16 %v619
        %v1878 = vunpack.c.l.b16 %v620
        %v1879 = vunpack.c.l.b16 %v621
        %v1880 = vunpack.c.l.b16 %v622
        %v1881 = vunpack.c.l.b16 %v623
        %v1882 = vunpack.c.l.b16 %v624
        %v1883 = vunpack.c.l.b16 %v625
        %v1884 = vunpack.c.l.b16 %v626
        %v1885 = vunpack.c.l.b16 %v627
        %v1886 = vunpack.c.l.b16 %v628
        %v1887 = vunpack.c.l.b16 %v629
        %v1888 = vunpack.c.l.b16 %v630
        %v1889 = vunpack.c.l.b16 %v631
        %v1890 = vunpack.c.l.b16 %v632
        %v1891 = vunpack.c.l.b16 %v633
        %v1892 = vunpack.c.l.b16 %v634
        %v1893 = vunpack.c.l.b16 %v635
        %v1894 = vunpack.c.l.b16 %v636
        %v1895 = vunpack.c.l.b16 %v637
        %v1896 = vunpack.c.l.b16 %v638
        %v1897 = vunpack.c.l.b16 %v639
        %v1898 = vunpack.c.l.b16 %v640
        %v1899 = vunpack.c.l.b16 %v641
        %v1900 = vunpack.c.l.b16 %v642
        %v1901 = vunpack.c.l.b16 %v643
        %v1902 = vunpack.c.l.b16 %v644
        %v1903 = vunpack.c.l.b16 %v645
        %v1904 = vunpack.c.l.b16 %v646
        %v1905 = vunpack.c.l.b16 %v647
        %v1906 = vunpack.c.l.b16 %v648
        %v1907 = vunpack.c.l.b16 %v649
        %v1908 = vunpack.c.l.b16 %v650
        %v1909 = vunpack.c.l.b16 %v651
        %v1910 = vunpack.c.l.b16 %v652
        %v1911 = vunpack.c.l.b16 %v653
        %v1912 = vunpack.c.l.b16 %v654
        %v1913 = vunpack.c.l.b16 %v655
        %v1914 = vunpack.c.l.b16 %v656
        %v1915 = vunpack.c.l.b16 %v657
        %v1916 = vunpack.c.l.b16 %v658
        %v1917 = vunpack.c.l.b16 %v659
        %v1918 = vunpack.c.l.b16 %v660
        %v1919 = vunpack.c.l.b16 %v661
        %v1920 = vunpack.c.l.b16 %v662
        %v1921 = vunpack.c.l.b16 %v663
        %v1922 = vunpack.c.l.b16 %v664
        %v1923 = vunpack.c.l.b16 %v665
        %v1924 = vunpack.c.l.b16 %v666
        %v1925 = vunpack.c.l.b16 %v667
        %v1926 = vunpack.c.l.b16 %v668
        %v1927 = vunpack.c.l.b16 %v669
        %v1928 = vunpack.c.l.b16 %v670
        %v1929 = vunpack.c.l.b16 %v671
        %v1930 = vunpack.c.l.b16 %v672
        %v1931 = vunpack.c.l.b16 %v673
        %v1932 = vunpack.c.l.b16 %v674
        %v1933 = vunpack.c.l.b16 %v675
        %v1934 = vunpack.c.l.b16 %v676
        %v1935 = vunpack.c.l.b16 %v677
        %v1936 = vunpack.c.l.b16 %v678
        %v1937 = vunpack.c.l.b16 %v679
        %v1938 = vunpack.c.l.b16 %v680
        %v1939 = vunpack.c.l.b16 %v681
        %v1940 = vunpack.c.l.b16 %v682
        %v1941 = vunpack.c.l.b16 %v683
        %v1942 = vunpack.c.l.b16 %v684
        %v1943 = vunpack.c.l.b16 %v685
        %v1944 = vunpack.c.l.b16 %v686
        %v1945 = vunpack.c.l.b16 %v687
        %v1946 = vunpack.c.l.b16 %v688
        %v1947 = vunpack.c.l.b16 %v689
        %v1948 = vunpack.c.l.b16 %v690
        %v1949 = vunpack.c.l.b16 %v691
        %v1950 = vunpack.c.l.b16 %v692
        %v1951 = vunpack.c.l.b16 %v693
        %v1952 = vunpack.c.l.b16 %v694
        %v1953 = vunpack.c.l.b16 %v695
        %v1954 = vunpack.c.l.b16 %v696
        %v1955 = vunpack.c.l.b16 %v697
        %v1956 = vunpack.c.l.b16 %v698
        %v1957 = vunpack.c.l.b16 %v699
        %v1958 = vunpack.c.l.b16 %v700
        %v1959 = vunpack.c.l.b16 %v701
        %v1960 = vunpack.c.l.b16 %v702
        %v1961 = vunpack.c.l.b16 %v703
        %v1962 = vunpack.c.l.b16 %v704
        %v1963 = vunpack.c.l.b16 %v705
        %v1964 = vunpack.c.l.b16 %v706
        %v1965 = vunpack.c.l.b16 %v707
        %v1966 = vunpack.c.l.b16 %v708
        %v1967 = vunpack.c.l.b16 %v709
        %v1968 = vunpack.c.l.b16 %v710
        %v1969 = vunpack.c.l.b16 %v711
        %v1970 = vunpack.c.l.b16 %v712
        %v1971 = vunpack.c.l.b16 %v713
        %v1972 = vunpack.c.l.b16 %v714
        %v1973 = vunpack.c.l.b16 %v715
        %v1974 = vunpack.c.l.b16 %v716
        %v1975 = vunpack.c.l.b16 %v717
        %v1976 = vunpack.c.l.b16 %v718
        %v1977 = vunpack.c.l.b16 %v719
        %v1978 = vunpack.c.l.b16 %v720
        %v1979 = vunpack.c.l.b16 %v721
        %v1980 = vunpack.c.l.b16 %v722
        %v1981 = vunpack.c.l.b16 %v723
        %v1982 = vunpack.c.l.b16 %v724
        %v1983 = vunpack.c.l.b16 %v725
        %v1984 = vunpack.c.l.b16 %v726
        %v1985 = vunpack.c.l.b16 %v727
        %v1986 = vunpack.c.l.b16 %v728
        %v1987 = vunpack.c.l.b16 %v729
        %v1988 = vunpack.c.l.b16 %v730
        %v1989 = vunpack.c.l.b16 %v731
        %v1990 = vunpack.c.l.b16 %v732
        %v1991 = vunpack.c.l.b16 %v733
        %v1992 = vunpack.c.l.b16 %v734
        %v1993 = vunpack.c.l.b16 %v735
        %v1994 = vunpack.c.l.b16 %v736
        %v1995 = vunpack.c.l.b16 %v737
        %v1996 = vunpack.c.l.b16 %v738
        %v1997 = vunpack.c.l.b16 %v739
        %v1998 = vunpack.c.l.b16 %v740
        %v1999 = vunpack.c.l.b16 %v741
        %v2000 = vunpack.c.l.b16 %v742
        %v2001 = vunpack.c.l.b16 %v743
        %v2002 = vunpack.c.l.b16 %v744
        %v2003 = vunpack.c.l.b16 %v745
        %v2004 = vunpack.c.l.b16 %v746
        %v2005 = vunpack.c.l.b16 %v747
        %v2006 = vunpack.c.l.b16 %v748
        %v2007 = vunpack.c.l.b16 %v749
        %v2008 = vunpack.c.l.b16 %v750
        %v2009 = vunpack.c.l.b16 %v751
        %v2010 = vunpack.c.l.b16 %v752
        %v2011 = vunpack.c.l.b16 %v753
        %v2012 = vunpack.c.l.b16 %v754
        %v2013 = vunpack.c.l.b16 %v755
        %v2014 = vunpack.c.l.b16 %v756
        %v2015 = vunpack.c.l.b16 %v757
        %v2016 = vunpack.c.l.b16 %v758
        %v2017 = vunpack.c.l.b16 %v759
        %v2018 = vunpack.c.l.b16 %v760
        %v2019 = vunpack.c.l.b16 %v761
        %v2020 = vunpack.c.l.b16 %v762
        %v2021 = vunpack.c.l.b16 %v763
        %v2022 = vunpack.c.l.b16 %v764
        %v2023 = vunpack.c.l.b16 %v765
        %v2024 = vunpack.c.l.b16 %v766
        %v2025 = vunpack.c.l.b16 %v767
        %v2026 = vunpack.c.l.b16 %v768
        %v2027 = vunpack.c.l.b16 %v769
        %v2028 = vunpack.c.l.b16 %v770
        %v2029 = vunpack.c.l.b16 %v771
        %v2030 = vunpack.c.l.b16 %v772
        %v2031 = vunpack.c.l.b16 %v773
        %v2032 = vunpack.c.l.b16 %v774
        %v2033 = vunpack.c.l.b16 %v775
        %v2034 = vunpack.c.l.b16 %v776
        %v2035 = vunpack.c.l.b16 %v777
        %v2036 = vunpack.c.l.b16 %v778
        %v2037 = vunpack.c.l.b16 %v779
        %v2038 = vunpack.c.l.b16 %v780
        %v2039 = vunpack.c.l.b16 %v781
        %v2040 = vunpack.c.l.b16 %v782
        %v2041 = vunpack.c.l.b16 %v783
        %v2042 = vunpack.c.l.b16 %v784
        %v2043 = vunpack.c.l.b16 %v785
        %v2044 = vunpack.c.l.b16 %v786
        %v2045 = vunpack.c.l.b16 %v787
        %v2046 = vunpack.c.l.b16 %v788
        %v2047 = vunpack.c.l.b16 %v789
        %v2048 = vunpack.c.l.b16 %v790
        %v2049 = vunpack.c.l.b16 %v791
        %v2050 = vunpack.c.l.b16 %v792
        %v2051 = vunpack.c.l.b16 %v793
        %v2052 = vunpack.c.l.b16 %v794
        %v2053 = vunpack.c.l.b16 %v795
        %v2054 = vunpack.c.l.b16 %v796
        %v2055 = vunpack.c.l.b16 %v797
        %v2056 = vunpack.c.l.b16 %v798
        %v2057 = vunpack.c.l.b16 %v799
        %v2058 = vunpack.c.l.b16 %v800
        %v2059 = vunpack.c.l.b16 %v801
        %v2060 = vunpack.c.l.b16 %v802
        %v2061 = vunpack.c.l.b16 %v803
        %v2062 = vunpack.c.l.b16 %v804
        %v2063 = vunpack.c.l.b16 %v805
        %v2064 = vunpack.c.l.b16 %v806
        %v2065 = vunpack.c.l.b16 %v807
        %v2066 = vunpack.c.l.b16 %v808
        %v2067 = vunpack.c.l.b16 %v809
        %v2068 = vunpack.c.l.b16 %v810
        %v2069 = vunpack.c.l.b16 %v811
        %v2070 = vunpack.c.l.b16 %v812
        %v2071 = vunpack.c.l.b16 %v813
        %v2072 = vunpack.c.l.b16 %v814
        %v2073 = vunpack.c.l.b16 %v815
        %v2074 = vunpack.c.l.b16 %v816
        %v2075 = vunpack.c.l.b16 %v817
        %v2076 = vunpack.c.l.b16 %v818
        %v2077 = vunpack.c.l.b16 %v819
        %v2078 = vunpack.c.l.b16 %v820
        %v2079 = vunpack.c.l.b16 %v821
        %v2080 = vunpack.c.l.b16 %v822
        %v2081 = vunpack.c.l.b16 %v823
        %v2082 = vunpack.c.l.b16 %v824
        %v2083 = vunpack.c.l.b16 %v825
        %v2084 = vunpack.c.l.b16 %v826
        %v2085 = vunpack.c.l.b16 %v827
        %v2086 = vunpack.c.l.b16 %v828
        %v2087 = vunpack.c.l.b16 %v829
        %v2088 = vunpack.c.l.b16 %v830
        %v2089 = vunpack.c.l.b16 %v831
        %v2090 = vunpack.c.l.b16 %v832
        %v2091 = vunpack.c.l.b16 %v833
        %v2092 = vunpack.c.l.b16 %v834
        %v2093 = vunpack.c.l.b16 %v835
        %v2094 = vunpack.c.l.b16 %v836
        %v2095 = vunpack.c.l.b16 %v837
        %v2096 = vunpack.c.l.b16 %v838
        %v2097 = vunpack.c.l.b16 %v839
        %v2098 = vunpack.c.l.b16 %v840
        %v2099 = vunpack.c.l.b16 %v841
        %v2100 = vunpack.c.l.b16 %v842
        %v2101 = vunpack.c.l.b16 %v843
        %v2102 = vunpack.c.l.b16 %v844
        %v2103 = vunpack.c.l.b16 %v845
        %v2104 = vunpack.c.l.b16 %v846
        %v2105 = vunpack.c.l.b16 %v847
        %v2106 = vunpack.c.l.b16 %v848
        %v2107 = vunpack.c.l.b16 %v849
        %v2108 = vunpack.c.l.b16 %v850
        %v2109 = vunpack.c.l.b16 %v851
        %v2110 = vunpack.c.l.b16 %v852
        %v2111 = vunpack.c.l.b16 %v853
        %v2112 = vunpack.c.l.b16 %v854
        %v2113 = vunpack.c.l.b16 %v855
        %v2114 = vunpack.c.l.b16 %v856
        %v2115 = vunpack.c.l.b16 %v857
        %v2116 = vunpack.c.l.b16 %v858
        %v2117 = vunpack.c.l.b16 %v859
        %v2118 = vunpack.c.l.b16 %v860
        %v2119 = vunpack.c.l.b16 %v861
        %v2120 = vunpack.c.l.b16 %v862
        %v2121 = vunpack.c.l.b16 %v863
        %v2122 = vunpack.c.l.b16 %v864
        %v2123 = vunpack.c.l.b16 %v865
        %v2124 = vunpack.c.l.b16 %v866
        %v2125 = vunpack.c.l.b16 %v867
        %v2126 = vunpack.c.l.b16 %v868
        %v2127 = vunpack.c.l.b16 %v869
        %v2128 = vunpack.c.l.b16 %v870
        %v2129 = vunpack.c.l.b16 %v871
        %v2130 = vunpack.c.l.b16 %v872
        %v2131 = vunpack.c.l.b16 %v873
        %v2132 = vunpack.c.l.b16 %v874
        %v2133 = vunpack.c.l.b16 %v875
        %v2134 = vunpack.c.l.b16 %v876
        %v2135 = vunpack.c.l.b16 %v877
        %v2136 = vunpack.c.l.b16 %v878
        %v2137 = vunpack.c.l.b16 %v879
        %v2138 = vunpack.c.l.b16 %v880
        %v2139 = vunpack.c.l.b16 %v881
        %v2140 = vunpack.c.l.b16 %v882
        %v2141 = vunpack.c.l.b16 %v883
        %v2142 = vunpack.c.l.b16 %v884
        %v2143 = vunpack.c.l.b16 %v885
        %v2144 = vunpack.c.l.b16 %v886
        %v2145 = vunpack.c.l.b16 %v887
        %v2146 = vunpack.c.l.b16 %v888
        %v2147 = vunpack.c.l.b16 %v889
        %v2148 = vunpack.c.l.b16 %v890
        %v2149 = vunpack.c.l.b16 %v891
        %v2150 = vunpack.c.l.b16 %v892
        %v2151 = vunpack.c.l.b16 %v893
        %v2152 = vunpack.c.l.b16 %v894
        %v2153 = vunpack.c.l.b16 %v895
        %v2154 = vunpack.c.l.b16 %v896
        %v2155 = vunpack.c.l.b16 %v897
        %v2156 = vunpack.c.l.b16 %v898
        %v2157 = vunpack.c.l.b16 %v899
        %v2158 = vunpack.c.l.b16 %v900
        %v2159 = vunpack.c.l.b16 %v901
        %v2160 = vunpack.c.l.b16 %v902
        %v2161 = vunpack.c.l.b16 %v903
        %v2162 = vunpack.c.l.b16 %v904
        %v2163 = vunpack.c.l.b16 %v905
        %v2164 = vunpack.c.l.b16 %v906
        %v2165 = vunpack.c.l.b16 %v907
        %v2166 = vunpack.c.l.b16 %v908
        %v2167 = vunpack.c.l.b16 %v909
        %v2168 = vunpack.c.l.b16 %v910
        %v2169 = vunpack.c.l.b16 %v911
        %v2170 = vunpack.c.l.b16 %v912
        %v2171 = vunpack.c.l.b16 %v913
        %v2172 = vunpack.c.l.b16 %v914
        %v2173 = vunpack.c.l.b16 %v915
        %v2174 = vunpack.c.l.b16 %v916
        %v2175 = vunpack.c.l.b16 %v917
        %v2176 = vunpack.c.l.b16 %v918
        %v2177 = vunpack.c.l.b16 %v919
        %v2178 = vunpack.c.l.b16 %v920
        %v2179 = vunpack.c.l.b16 %v921
        %v2180 = vunpack.c.l.b16 %v922
        %v2181 = vunpack.c.l.b16 %v923
        %v2182 = vunpack.c.l.b16 %v924
        %v2183 = vunpack.c.l.b16 %v925
        %v2184 = vunpack.c.l.b16 %v926
        %v2185 = vunpack.c.l.b16 %v927
        %v2186 = vunpack.c.l.b16 %v928
        %v2187 = vunpack.c.l.b16 %v929
        %v2188 = vunpack.c.l.b16 %v930
        %v2189 = vunpack.c.l.b16 %v931
        %v2190 = vunpack.c.l.b16 %v932
        %v2191 = vunpack.c.l.b16 %v933
        %v2192 = vunpack.c.l.b16 %v934
        %v2193 = vunpack.c.l.b16 %v935
        %v2194 = vunpack.c.l.b16 %v936
        %v2195 = vunpack.c.l.b16 %v937
        %v2196 = vunpack.c.l.b16 %v938
        %v2197 = vunpack.c.l.b16 %v939
        %v2198 = vunpack.c.l.b16 %v940
        %v2199 = vunpack.c.l.b16 %v941
        %v2200 = vunpack.c.l.b16 %v942
        %v2201 = vunpack.c.l.b16 %v943
        %v2202 = vunpack.c.l.b16 %v944
        %v2203 = vunpack.c.l.b16 %v945
        %v2204 = vunpack.c.l.b16 %v946
        %v2205 = vunpack.c.l.b16 %v947
        %v2206 = vunpack.c.l.b16 %v948
        %v2207 = vunpack.c.l.b16 %v949
        %v2208 = vunpack.c.l.b16 %v950
        %v2209 = vunpack.c.l.b16 %v951
        %v2210 = vunpack.c.l.b16 %v952
        %v2211 = vunpack.c.l.b16 %v953
        %v2212 = vunpack.c.l.b16 %v954
        %v2213 = vunpack.c.l.b16 %v955
        %v2214 = vunpack.c.l.b16 %v956
        %v2215 = vunpack.c.l.b16 %v957
        %v2216 = vunpack.c.l.b16 %v958
        %v2217 = vunpack.c.l.b16 %v959
        %v2218 = vunpack.c.l.b16 %v960
        %v2219 = vunpack.c.l.b16 %v961
        %v2220 = vunpack.c.l.b16 %v962
        %v2221 = vunpack.c.l.b16 %v963
        %v2222 = vunpack.c.l.b16 %v964
        %v2223 = vunpack.c.l.b16 %v965
        %v2224 = vunpack.c.l.b16 %v966
        %v2225 = vunpack.c.l.b16 %v967
        %v2226 = vunpack.c.l.b16 %v968
        %v2227 = vunpack.c.l.b16 %v969
        %v2228 = vunpack.c.l.b16 %v970
        %v2229 = vunpack.c.l.b16 %v971
        %v2230 = vunpack.c.l.b16 %v972
        %v2231 = vunpack.c.l.b16 %v973
        %v2232 = vunpack.c.l.b16 %v974
        %v2233 = vunpack.c.l.b16 %v975
        %v2234 = vunpack.c.l.b16 %v976
        %v2235 = vunpack.c.l.b16 %v977
        %v2236 = vunpack.c.l.b16 %v978
        %v2237 = vunpack.c.l.b16 %v979
        %v2238 = vunpack.c.l.b16 %v980
        %v2239 = vunpack.c.l.b16 %v981
        %v2240 = vunpack.c.l.b16 %v982
        %v2241 = vunpack.c.l.b16 %v983
        %v2242 = vunpack.c.l.b16 %v984
        %v2243 = vunpack.c.l.b16 %v985
        %v2244 = vunpack.c.l.b16 %v986
        %v2245 = vunpack.c.l.b16 %v987
        %v2246 = vunpack.c.l.b16 %v988
        %v2247 = vunpack.c.l.b16 %v989
        %v2248 = vunpack.c.l.b16 %v990
        %v2249 = vunpack.c.l.b16 %v991
        %v2250 = vunpack.c.l.b16 %v992
        %v2251 = vunpack.c.l.b16 %v993
        %v2252 = vunpack.c.l.b16 %v994
        %v2253 = vunpack.c.l.b16 %v995
        %v2254 = vunpack.c.l.b16 %v996
        %v2255 = vunpack.c.l.b16 %v997
        %v2256 = vunpack.c.l.b16 %v998
        %v2257 = vunpack.c.l.b16 %v999
        %v2258 = vunpack.c.l.b16 %v1000
        %v2259 = vunpack.c.l.b16 %v1001
        %v2260 = vunpack.c.l.b16 %v1002
        %v2261 = vunpack.c.l.b16 %v1003
        %v2262 = vunpack.c.l.b16 %v1004
        %v2263 = vunpack.c.l.b16 %v1005
        %v2264 = vunpack.c.l.b16 %v1006
        %v2265 = vunpack.c.l.b16 %v1007
        %v2266 = vunpack.c.l.b16 %v1008
        %v2267 = vunpack.c.l.b16 %v1009
        %v2268 = vunpack.c.l.b16 %v1010
        %v2269 = vunpack.c.l.b16 %v1011
        %v2270 = vunpack.c.l.b16 %v1012
        %v2271 = vunpack.c.l.b16 %v1013
        %v2272 = vunpack.c.l.b16 %v1014
        %v2273 = vunpack.c.l.b16 %v1015
        %v2274 = vunpack.c.l.b16 %v1016
        %v2275 = vunpack.c.l.b16 %v1017
        %v2276 = vunpack.c.l.b16 %v1018
        %v2277 = vunpack.c.l.b16 %v1019
        %v2278 = vunpack.c.l.b16 %v1020
        %v2279 = vunpack.c.l.b16 %v1021
        %v2280 = vunpack.c.l.b16 %v1022
        %v2281 = vunpack.c.l.b16 %v1023
        %v2282 = vunpack.c.l.b16 %v1024
        %v2283 = vunpack.c.l.b16 %v1025
        %v2284 = vunpack.c.l.b16 %v1026
        %v2285 = vunpack.c.l.b16 %v1027
        %v2286 = vunpack.c.l.b16 %v1028
        %v2287 = vunpack.c.l.b16 %v1029
        %v2288 = vunpack.c.l.b16 %v1030
        %v2289 = vunpack.c.l.b16 %v1031
        %v2290 = vunpack.c.l.b16 %v1032
        %v2291 = vunpack.c.l.b16 %v1033
        %v2292 = vunpack.c.l.b16 %v1034
        %v2293 = vunpack.c.l.b16 %v1035
        %v2294 = vunpack.c.l.b16 %v1036
        %v2295 = vunpack.c.l.b16 %v1037
        %v2296 = vunpack.c.l.b16 %v1038
        %v2297 = vunpack.c.l.b16 %v1039
        %v2298 = vunpack.c.l.b16 %v1040
        %v2299 = vunpack.c.l.b16 %v1041
        %v2300 = vunpack.c.l.b16 %v1042
        %v2301 = vunpack.c.l.b16 %v1043
        %v2302 = vunpack.c.l.b16 %v1044
        %v2303 = vunpack.c.l.b16 %v1045
        %v2304 = vunpack.c.l.b16 %v1046
        %v2305 = vunpack.c.l.b16 %v1047
        %v2306 = vunpack.c.l.b16 %v1048
        %v2307 = vunpack.c.l.b16 %v1049
        %v2308 = vunpack.c.l.b16 %v1050
        %v2309 = vunpack.c.l.b16 %v1051
        %v2310 = vunpack.c.l.b16 %v1052
        %v2311 = vunpack.c.l.b16 %v1053
        %v2312 = vunpack.c.l.b16 %v1054
        %v2313 = vunpack.c.l.b16 %v1055
        %v2314 = vunpack.c.l.b16 %v1056
        %v2315 = vunpack.c.l.b16 %v1057
        %v2316 = vunpack.c.l.b16 %v1058
        %v2317 = vunpack.c.l.b16 %v1059
        %v2318 = vunpack.c.l.b16 %v1060
        %v2319 = vunpack.c.l.b16 %v1061
        %v2320 = vunpack.c.l.b16 %v1062
        %v2321 = vunpack.c.l.b16 %v1063
        %v2322 = vunpack.c.l.b16 %v1064
        %v2323 = vunpack.c.l.b16 %v1065
        %v2324 = vunpack.c.l.b16 %v1066
        %v2325 = vunpack.c.l.b16 %v1067
        %v2326 = vunpack.c.l.b16 %v1068
        %v2327 = vunpack.c.l.b16 %v1069
        %v2328 = vunpack.c.l.b16 %v1070
        %v2329 = vunpack.c.l.b16 %v1071
        %v2330 = vunpack.c.l.b16 %v1072
        %v2331 = vunpack.c.l.b16 %v1073
        %v2332 = vunpack.c.l.b16 %v1074
        %v2333 = vunpack.c.l.b16 %v1075
        %v2334 = vunpack.c.l.b16 %v1076
        %v2335 = vunpack.c.l.b16 %v1077
        %v2336 = vunpack.c.l.b16 %v1078
        %v2337 = vunpack.c.l.b16 %v1079
        %v2338 = vunpack.c.l.b16 %v1080
        %v2339 = vunpack.c.l.b16 %v1081
        %v2340 = vunpack.c.l.b16 %v1082
        %v2341 = vunpack.c.l.b16 %v1083
        %v2342 = vunpack.c.l.b16 %v1084
        %v2343 = vunpack.c.l.b16 %v1085
        %v2344 = vunpack.c.l.b16 %v1086
        %v2345 = vunpack.c.l.b16 %v1087
        %v2346 = vunpack.c.l.b16 %v1088
        %v2347 = vunpack.c.l.b16 %v1089
        %v2348 = vunpack.c.l.b16 %v1090
        %v2349 = vunpack.c.l.b16 %v1091
        %v2350 = vunpack.c.l.b16 %v1092
        %v2351 = vunpack.c.l.b16 %v1093
        %v2352 = vunpack.c.l.b16 %v1094
        %v2353 = vunpack.c.l.b16 %v1095
        %v2354 = vunpack.c.l.b16 %v1096
        %v2355 = vunpack.c.l.b16 %v1097
        %v2356 = vunpack.c.l.b16 %v1098
        %v2357 = vunpack.c.l.b16 %v1099
        %v2358 = vunpack.c.l.b16 %v1100
        %v2359 = vunpack.c.l.b16 %v1101
        %v2360 = vunpack.c.l.b16 %v1102
        %v2361 = vunpack.c.l.b16 %v1103
        %v2362 = vunpack.c.l.b16 %v1104
        %v2363 = vunpack.c.l.b16 %v1105
        %v2364 = vunpack.c.l.b16 %v1106
        %v2365 = vunpack.c.l.b16 %v1107
        %v2366 = vunpack.c.l.b16 %v1108
        %v2367 = vunpack.c.l.b16 %v1109
        %v2368 = vunpack.c.l.b16 %v1110
        %v2369 = vunpack.c.l.b16 %v1111
        %v2370 = vunpack.c.l.b16 %v1112
        %v2371 = vunpack.c.l.b16 %v1113
        %v2372 = vunpack.c.l.b16 %v1114
        %v2373 = vpack.c.b16 %v1862, %v1861
        %v2374 = vpack.c.b16 %v1864, %v1863
        %v2375 = vpack.c.b16 %v1866, %v1865
        %v2376 = vpack.c.b16 %v1868, %v1867
        %v2377 = vpack.c.b16 %v1870, %v1869
        %v2378 = vpack.c.b16 %v1872, %v1871
        %v2379 = vpack.c.b16 %v1874, %v1873
        %v2380 = vpack.c.b16 %v1876, %v1875
        %v2381 = vpack.c.b16 %v1878, %v1877
        %v2382 = vpack.c.b16 %v1880, %v1879
        %v2383 = vpack.c.b16 %v1882, %v1881
        %v2384 = vpack.c.b16 %v1884, %v1883
        %v2385 = vpack.c.b16 %v1886, %v1885
        %v2386 = vpack.c.b16 %v1888, %v1887
        %v2387 = vpack.c.b16 %v1890, %v1889
        %v2388 = vpack.c.b16 %v1892, %v1891
        %v2389 = vpack.c.b16 %v1894, %v1893
        %v2390 = vpack.c.b16 %v1896, %v1895
        %v2391 = vpack.c.b16 %v1898, %v1897
        %v2392 = vpack.c.b16 %v1900, %v1899
        %v2393 = vpack.c.b16 %v1902, %v1901
        %v2394 = vpack.c.b16 %v1904, %v1903
        %v2395 = vpack.c.b16 %v1906, %v1905
        %v2396 = vpack.c.b16 %v1908, %v1907
        %v2397 = vpack.c.b16 %v1910, %v1909
        %v2398 = vpack.c.b16 %v1912, %v1911
        %v2399 = vpack.c.b16 %v1914, %v1913
        %v2400 = vpack.c.b16 %v1916, %v1915
        %v2401 = vpack.c.b16 %v1918, %v1917
        %v2402 = vpack.c.b16 %v1920, %v1919
        %v2403 = vpack.c.b16 %v1922, %v1921
        %v2404 = vpack.c.b16 %v1924, %v1923
        %v2405 = vpack.c.b16 %v1926, %v1925
        %v2406 = vpack.c.b16 %v1928, %v1927
        %v2407 = vpack.c.b16 %v1930, %v1929
        %v2408 = vpack.c.b16 %v1932, %v1931
        %v2409 = vpack.c.b16 %v1934, %v1933
        %v2410 = vpack.c.b16 %v1936, %v1935
        %v2411 = vpack.c.b16 %v1938, %v1937
        %v2412 = vpack.c.b16 %v1940, %v1939
        %v2413 = vpack.c.b16 %v1942, %v1941
        %v2414 = vpack.c.b16 %v1944, %v1943
        %v2415 = vpack.c.b16 %v1946, %v1945
        %v2416 = vpack.c.b16 %v1948, %v1947
        %v2417 = vpack.c.b16 %v1950, %v1949
        %v2418 = vpack.c.b16 %v1952, %v1951
        %v2419 = vpack.c.b16 %v1954, %v1953
        %v2420 = vpack.c.b16 %v1956, %v1955
        %v2421 = vpack.c.b16 %v1958, %v1957
        %v2422 = vpack.c.b16 %v1960, %v1959
        %v2423 = vpack.c.b16 %v1962, %v1961
        %v2424 = vpack.c.b16 %v1964, %v1963
        %v2425 = vpack.c.b16 %v1966, %v1965
        %v2426 = vpack.c.b16 %v1968, %v1967
        %v2427 = vpack.c.b16 %v1970, %v1969
        %v2428 = vpack.c.b16 %v1972, %v1971
        %v2429 = vpack.c.b16 %v1974, %v1973
        %v2430 = vpack.c.b16 %v1976, %v1975
        %v2431 = vpack.c.b16 %v1978, %v1977
        %v2432 = vpack.c.b16 %v1980, %v1979
        %v2433 = vpack.c.b16 %v1982, %v1981
        %v2434 = vpack.c.b16 %v1984, %v1983
        %v2435 = vpack.c.b16 %v1986, %v1985
        %v2436 = vpack.c.b16 %v1988, %v1987
        %v2437 = vpack.c.b16 %v1990, %v1989
        %v2438 = vpack.c.b16 %v1992, %v1991
        %v2439 = vpack.c.b16 %v1994, %v1993
        %v2440 = vpack.c.b16 %v1996, %v1995
        %v2441 = vpack.c.b16 %v1998, %v1997
        %v2442 = vpack.c.b16 %v2000, %v1999
        %v2443 = vpack.c.b16 %v2002, %v2001
        %v2444 = vpack.c.b16 %v2004, %v2003
        %v2445 = vpack.c.b16 %v2006, %v2005
        %v2446 = vpack.c.b16 %v2008, %v2007
        %v2447 = vpack.c.b16 %v2010, %v2009
        %v2448 = vpack.c.b16 %v2012, %v2011
        %v2449 = vpack.c.b16 %v2014, %v2013
        %v2450 = vpack.c.b16 %v2016, %v2015
        %v2451 = vpack.c.b16 %v2018, %v2017
        %v2452 = vpack.c.b16 %v2020, %v2019
        %v2453 = vpack.c.b16 %v2022, %v2021
        %v2454 = vpack.c.b16 %v2024, %v2023
        %v2455 = vpack.c.b16 %v2026, %v2025
        %v2456 = vpack.c.b16 %v2028, %v2027
        %v2457 = vpack.c.b16 %v2030, %v2029
        %v2458 = vpack.c.b16 %v2032, %v2031
        %v2459 = vpack.c.b16 %v2034, %v2033
        %v2460 = vpack.c.b16 %v2036, %v2035
        %v2461 = vpack.c.b16 %v2038, %v2037
        %v2462 = vpack.c.b16 %v2040, %v2039
        %v2463 = vpack.c.b16 %v2042, %v2041
        %v2464 = vpack.c.b16 %v2044, %v2043
        %v2465 = vpack.c.b16 %v2046, %v2045
        %v2466 = vpack.c.b16 %v2048, %v2047
        %v2467 = vpack.c.b16 %v2050, %v2049
        %v2468 = vpack.c.b16 %v2052, %v2051
        %v2469 = vpack.c.b16 %v2054, %v2053
        %v2470 = vpack.c.b16 %v2056, %v2055
        %v2471 = vpack.c.b16 %v2058, %v2057
        %v2472 = vpack.c.b16 %v2060, %v2059
        %v2473 = vpack.c.b16 %v2062, %v2061
        %v2474 = vpack.c.b16 %v2064, %v2063
        %v2475 = vpack.c.b16 %v2066, %v2065
        %v2476 = vpack.c.b16 %v2068, %v2067
        %v2477 = vpack.c.b16 %v2070, %v2069
        %v2478 = vpack.c.b16 %v2072, %v2071
        %v2479 = vpack.c.b16 %v2074, %v2073
        %v2480 = vpack.c.b16 %v2076, %v2075
        %v2481 = vpack.c.b16 %v2078, %v2077
        %v2482 = vpack.c.b16 %v2080, %v2079
        %v2483 = vpack.c.b16 %v2082, %v2081
        %v2484 = vpack.c.b16 %v2084, %v2083
        %v2485 = vpack.c.b16 %v2086, %v2085
        %v2486 = vpack.c.b16 %v2088, %v2087
        %v2487 = vpack.c.b16 %v2090, %v2089
        %v2488 = vpack.c.b16 %v2092, %v2091
        %v2489 = vpack.c.b16 %v2094, %v2093
        %v2490 = vpack.c.b16 %v2096, %v2095
        %v2491 = vpack.c.b16 %v2098, %v2097
        %v2492 = vpack.c.b16 %v2100, %v2099
        %v2493 = vpack.c.b16 %v2102, %v2101
        %v2494 = vpack.c.b16 %v2104, %v2103
        %v2495 = vpack.c.b16 %v2106, %v2105
        %v2496 = vpack.c.b16 %v2108, %v2107
        %v2497 = vpack.c.b16 %v2110, %v2109
        %v2498 = vpack.c.b16 %v2112, %v2111
        %v2499 = vpack.c.b16 %v2114, %v2113
        %v2500 = vpack.c.b16 %v2116, %v2115
        %v2501 = vpack.c.b16 %v2118, %v2117
        %v2502 = vpack.c.b16 %v2120, %v2119
        %v2503 = vpack.c.b16 %v2122, %v2121
        %v2504 = vpack.c.b16 %v2124, %v2123
        %v2505 = vpack.c.b16 %v2126, %v2125
        %v2506 = vpack.c.b16 %v2128, %v2127
        %v2507 = vpack.c.b16 %v2130, %v2129
        %v2508 = vpack.c.b16 %v2132, %v2131
        %v2509 = vpack.c.b16 %v2134, %v2133
        %v2510 = vpack.c.b16 %v2136, %v2135
        %v2511 = vpack.c.b16 %v2138, %v2137
        %v2512 = vpack.c.b16 %v2140, %v2139
        %v2513 = vpack.c.b16 %v2142, %v2141
        %v2514 = vpack.c.b16 %v2144, %v2143
        %v2515 = vpack.c.b16 %v2146, %v2145
        %v2516 = vpack.c.b16 %v2148, %v2147
        %v2517 = vpack.c.b16 %v2150, %v2149
        %v2518 = vpack.c.b16 %v2152, %v2151
        %v2519 = vpack.c.b16 %v2154, %v2153
        %v2520 = vpack.c.b16 %v2156, %v2155
        %v2521 = vpack.c.b16 %v2158, %v2157
        %v2522 = vpack.c.b16 %v2160, %v2159
        %v2523 = vpack.c.b16 %v2162, %v2161
        %v2524 = vpack.c.b16 %v2164, %v2163
        %v2525 = vpack.c.b16 %v2166, %v2165
        %v2526 = vpack.c.b16 %v2168, %v2167
        %v2527 = vpack.c.b16 %v2170, %v2169
        %v2528 = vpack.c.b16 %v2172, %v2171
        %v2529 = vpack.c.b16 %v2174, %v2173
        %v2530 = vpack.c.b16 %v2176, %v2175
        %v2531 = vpack.c.b16 %v2178, %v2177
        %v2532 = vpack.c.b16 %v2180, %v2179
        %v2533 = vpack.c.b16 %v2182, %v2181
        %v2534 = vpack.c.b16 %v2184, %v2183
        %v2535 = vpack.c.b16 %v2186, %v2185
        %v2536 = vpack.c.b16 %v2188, %v2187
        %v2537 = vpack.c.b16 %v2190, %v2189
        %v2538 = vpack.c.b16 %v2192, %v2191
        %v2539 = vpack.c.b16 %v2194, %v2193
        %v2540 = vpack.c.b16 %v2196, %v2195
        %v2541 = vpack.c.b16 %v2198, %v2197
        %v2542 = vpack.c.b16 %v2200, %v2199
        %v2543 = vpack.c.b16 %v2202, %v2201
        %v2544 = vpack.c.b16 %v2204, %v2203
        %v2545 = vpack.c.b16 %v2206, %v2205
        %v2546 = vpack.c.b16 %v2208, %v2207
        %v2547 = vpack.c.b16 %v2210, %v2209
        %v2548 = vpack.c.b16 %v2212, %v2211
        %v2549 = vpack.c.b16 %v2214, %v2213
        %v2550 = vpack.c.b16 %v2216, %v2215
        %v2551 = vpack.c.b16 %v2218, %v2217
        %v2552 = vpack.c.b16 %v2220, %v2219
        %v2553 = vpack.c.b16 %v2222, %v2221
        %v2554 = vpack.c.b16 %v2224, %v2223
        %v2555 = vpack.c.b16 %v2226, %v2225
        %v2556 = vpack.c.b16 %v2228, %v2227
        %v2557 = vpack.c.b16 %v2230, %v2229
        %v2558 = vpack.c.b16 %v2232, %v2231
        %v2559 = vpack.c.b16 %v2234, %v2233
        %v2560 = vpack.c.b16 %v2236, %v2235
        %v2561 = vpack.c.b16 %v2238, %v2237
        %v2562 = vpack.c.b16 %v2240, %v2239
        %v2563 = vpack.c.b16 %v2242, %v2241
        %v2564 = vpack.c.b16 %v2244, %v2243
        %v2565 = vpack.c.b16 %v2246, %v2245
        %v2566 = vpack.c.b16 %v2248, %v2247
        %v2567 = vpack.c.b16 %v2250, %v2249
        %v2568 = vpack.c.b16 %v2252, %v2251
        %v2569 = vpack.c.b16 %v2254, %v2253
        %v2570 = vpack.c.b16 %v2256, %v2255
        %v2571 = vpack.c.b16 %v2258, %v2257
        %v2572 = vpack.c.b16 %v2260, %v2259
        %v2573 = vpack.c.b16 %v2262, %v2261
        %v2574 = vpack.c.b16 %v2264, %v2263
        %v2575 = vpack.c.b16 %v2266, %v2265
        %v2576 = vpack.c.b16 %v2268, %v2267
        %v2577 = vpack.c.b16 %v2270, %v2269
        %v2578 = vpack.c.b16 %v2272, %v2271
        %v2579 = vpack.c.b16 %v2274, %v2273
        %v2580 = vpack.c.b16 %v2276, %v2275
        %v2581 = vpack.c.b16 %v2278, %v2277
        %v2582 = vpack.c.b16 %v2280, %v2279
        %v2583 = vpack.c.b16 %v2282, %v2281
        %v2584 = vpack.c.b16 %v2284, %v2283
        %v2585 = vpack.c.b16 %v2286, %v2285
        %v2586 = vpack.c.b16 %v2288, %v2287
        %v2587 = vpack.c.b16 %v2290, %v2289
        %v2588 = vpack.c.b16 %v2292, %v2291
        %v2589 = vpack.c.b16 %v2294, %v2293
        %v2590 = vpack.c.b16 %v2296, %v2295
        %v2591 = vpack.c.b16 %v2298, %v2297
        %v2592 = vpack.c.b16 %v2300, %v2299
        %v2593 = vpack.c.b16 %v2302, %v2301
        %v2594 = vpack.c.b16 %v2304, %v2303
        %v2595 = vpack.c.b16 %v2306, %v2305
        %v2596 = vpack.c.b16 %v2308, %v2307
        %v2597 = vpack.c.b16 %v2310, %v2309
        %v2598 = vpack.c.b16 %v2312, %v2311
        %v2599 = vpack.c.b16 %v2314, %v2313
        %v2600 = vpack.c.b16 %v2316, %v2315
        %v2601 = vpack.c.b16 %v2318, %v2317
        %v2602 = vpack.c.b16 %v2320, %v2319
        %v2603 = vpack.c.b16 %v2322, %v2321
        %v2604 = vpack.c.b16 %v2324, %v2323
        %v2605 = vpack.c.b16 %v2326, %v2325
        %v2606 = vpack.c.b16 %v2328, %v2327
        %v2607 = vpack.c.b16 %v2330, %v2329
        %v2608 = vpack.c.b16 %v2332, %v2331
        %v2609 = vpack.c.b16 %v2334, %v2333
        %v2610 = vpack.c.b16 %v2336, %v2335
        %v2611 = vpack.c.b16 %v2338, %v2337
        %v2612 = vpack.c.b16 %v2340, %v2339
        %v2613 = vpack.c.b16 %v2342, %v2341
        %v2614 = vpack.c.b16 %v2344, %v2343
        %v2615 = vpack.c.b16 %v2346, %v2345
        %v2616 = vpack.c.b16 %v2348, %v2347
        %v2617 = vpack.c.b16 %v2350, %v2349
        %v2618 = vpack.c.b16 %v2352, %v2351
        %v2619 = vpack.c.b16 %v2354, %v2353
        %v2620 = vpack.c.b16 %v2356, %v2355
        %v2621 = vpack.c.b16 %v2358, %v2357
        %v2622 = vpack.c.b16 %v2360, %v2359
        %v2623 = vpack.c.b16 %v2362, %v2361
        %v2624 = vpack.c.b16 %v2364, %v2363
        %v2625 = vpack.c.b16 %v2366, %v2365
        %v2626 = vpack.c.b16 %v2368, %v2367
        %v2627 = vpack.c.b16 %v2370, %v2369
        %v2628 = vpack.c.b16 %v2372, %v2371
        %2885 = vmatprep.subr.bf16.mxu0 0
        %2886 = vmatpush1.bf16.msra.mxu0 %v2373
        %2887 = vmatprep.subr.bf16.mxu0 0
        %2888 = vmatpush1.bf16.msra.mxu0 %v2374
        %2889 = vmatprep.subr.bf16.mxu0 0
        %2890 = vmatpush1.bf16.msra.mxu0 %v2375
        %2891 = vmatprep.subr.bf16.mxu0 0
        %2892 = vmatpush1.bf16.msra.mxu0 %v2376
        %2893 = vmatprep.subr.bf16.mxu0 0
        %2894 = vmatpush1.bf16.msra.mxu0 %v2377
        %2895 = vmatprep.subr.bf16.mxu0 0
        %2896 = vmatpush1.bf16.msra.mxu0 %v2378
        %2897 = vmatprep.subr.bf16.mxu0 0
        %2898 = vmatpush1.bf16.msra.mxu0 %v2379
        %2899 = vmatprep.subr.bf16.mxu0 0
        %2900 = vmatpush1.bf16.msra.mxu0 %v2380
        %2901 = vmatprep.subr.bf16.mxu0 0
        %2902 = vmatpush1.bf16.msra.mxu0 %v2381
        %2903 = vmatprep.subr.bf16.mxu0 0
        %2904 = vmatpush1.bf16.msra.mxu0 %v2382
        %2905 = vmatprep.subr.bf16.mxu0 0
        %2906 = vmatpush1.bf16.msra.mxu0 %v2383
        %2907 = vmatprep.subr.bf16.mxu0 0
        %2908 = vmatpush1.bf16.msra.mxu0 %v2384
        %2909 = vmatprep.subr.bf16.mxu0 0
        %2910 = vmatpush1.bf16.msra.mxu0 %v2385
        %2911 = vmatprep.subr.bf16.mxu0 0
        %2912 = vmatpush1.bf16.msra.mxu0 %v2386
        %2913 = vmatprep.subr.bf16.mxu0 0
        %2914 = vmatpush1.bf16.msra.mxu0 %v2387
        %2915 = vmatprep.subr.bf16.mxu0 0
        %2916 = vmatpush1.bf16.msra.mxu0 %v2388
        %2917 = vmatprep.mubr.bf16.mxu0 %v1158
        %2918 = vmatmul.mubr.bf16.gmra.mrb[0].mxu0 %v1144
        %v2919 = vpop.f32.mrb[0].mxu0
        %v2920 = vadd.f32 %v1116, %v2919
        %v2921 = vpop.f32.mrb[0].mxu0
        %v2922 = vpop.f32.mrb[0].mxu0
        %v2923 = vpop.f32.mrb[0].mxu0
        %2924 = vdwg.mxu0
        %2925 = vmatprep.subr.bf16.mxu0 0
        %2926 = vmatpush1.bf16.msra.mxu0 %v2389
        %2927 = vmatprep.subr.bf16.mxu0 0
        %2928 = vmatpush1.bf16.msra.mxu0 %v2390
        %2929 = vmatprep.subr.bf16.mxu0 0
        %2930 = vmatpush1.bf16.msra.mxu0 %v2391
        %2931 = vmatprep.subr.bf16.mxu0 0
        %2932 = vmatpush1.bf16.msra.mxu0 %v2392
        %2933 = vmatprep.subr.bf16.mxu0 0
        %2934 = vmatpush1.bf16.msra.mxu0 %v2393
        %2935 = vmatprep.subr.bf16.mxu0 0
        %2936 = vmatpush1.bf16.msra.mxu0 %v2394
        %2937 = vmatprep.subr.bf16.mxu0 0
        %2938 = vmatpush1.bf16.msra.mxu0 %v2395
        %2939 = vmatprep.subr.bf16.mxu0 0
        %2940 = vmatpush1.bf16.msra.mxu0 %v2396
        %2941 = vmatprep.subr.bf16.mxu0 0
        %2942 = vmatpush1.bf16.msra.mxu0 %v2397
        %2943 = vmatprep.subr.bf16.mxu0 0
        %2944 = vmatpush1.bf16.msra.mxu0 %v2398
        %2945 = vmatprep.subr.bf16.mxu0 0
        %2946 = vmatpush1.bf16.msra.mxu0 %v2399
        %2947 = vmatprep.subr.bf16.mxu0 0
        %2948 = vmatpush1.bf16.msra.mxu0 %v2400
        %2949 = vmatprep.subr.bf16.mxu0 0
        %2950 = vmatpush1.bf16.msra.mxu0 %v2401
        %2951 = vmatprep.subr.bf16.mxu0 0
        %2952 = vmatpush1.bf16.msra.mxu0 %v2402
        %2953 = vmatprep.subr.bf16.mxu0 0
        %2954 = vmatpush1.bf16.msra.mxu0 %v2403
        %2955 = vmatprep.subr.bf16.mxu0 0
        %2956 = vmatpush1.bf16.msra.mxu0 %v2404
        %2957 = vmatprep.mubr.bf16.mxu0 %v1168
        %2958 = vmatmul.mubr.bf16.gmra.mrb[0].mxu0 %v1166
        %v2959 = vpop.f32.mrb[0].mxu0
        %v2960 = vadd.f32 %v2920, %v2959
        %v2961 = vpop.f32.mrb[0].mxu0
        %v2962 = vpop.f32.mrb[0].mxu0
        %v2963 = vpop.f32.mrb[0].mxu0
        %2964 = vdwg.mxu0
        %2965 = vmatprep.subr.bf16.mxu0 0
        %2966 = vmatpush1.bf16.msra.mxu0 %v2405
        %2967 = vmatprep.subr.bf16.mxu0 0
        %2968 = vmatpush1.bf16.msra.mxu0 %v2406
        %2969 = vmatprep.subr.bf16.mxu0 0
        %2970 = vmatpush1.bf16.msra.mxu0 %v2407
        %2971 = vmatprep.subr.bf16.mxu0 0
        %2972 = vmatpush1.bf16.msra.mxu0 %v2408
        %2973 = vmatprep.subr.bf16.mxu0 0
        %2974 = vmatpush1.bf16.msra.mxu0 %v2409
        %2975 = vmatprep.subr.bf16.mxu0 0
        %2976 = vmatpush1.bf16.msra.mxu0 %v2410
        %2977 = vmatprep.subr.bf16.mxu0 0
        %2978 = vmatpush1.bf16.msra.mxu0 %v2411
        %2979 = vmatprep.subr.bf16.mxu0 0
        %2980 = vmatpush1.bf16.msra.mxu0 %v2412
        %2981 = vmatprep.subr.bf16.mxu0 0
        %2982 = vmatpush1.bf16.msra.mxu0 %v2413
        %2983 = vmatprep.subr.bf16.mxu0 0
        %2984 = vmatpush1.bf16.msra.mxu0 %v2414
        %2985 = vmatprep.subr.bf16.mxu0 0
        %2986 = vmatpush1.bf16.msra.mxu0 %v2415
        %2987 = vmatprep.subr.bf16.mxu0 0
        %2988 = vmatpush1.bf16.msra.mxu0 %v2416
        %2989 = vmatprep.subr.bf16.mxu0 0
        %2990 = vmatpush1.bf16.msra.mxu0 %v2417
        %2991 = vmatprep.subr.bf16.mxu0 0
        %2992 = vmatpush1.bf16.msra.mxu0 %v2418
        %2993 = vmatprep.subr.bf16.mxu0 0
        %2994 = vmatpush1.bf16.msra.mxu0 %v2419
        %2995 = vmatprep.subr.bf16.mxu0 0
        %2996 = vmatpush1.bf16.msra.mxu0 %v2420
        %2997 = vmatprep.mubr.bf16.mxu0 %v1165
        %2998 = vmatmul.mubr.bf16.gmra.mrb[0].mxu0 %v1151
        %v2999 = vpop.f32.mrb[0].mxu0
        %v3000 = vadd.f32 %v2960, %v2999
        %v3001 = vpop.f32.mrb[0].mxu0
        %v3002 = vpop.f32.mrb[0].mxu0
        %v3003 = vpop.f32.mrb[0].mxu0
        %3004 = vdwg.mxu0
        %3005 = vmatprep.subr.bf16.mxu0 0
        %3006 = vmatpush1.bf16.msra.mxu0 %v2421
        %3007 = vmatprep.subr.bf16.mxu0 0
        %3008 = vmatpush1.bf16.msra.mxu0 %v2422
        %3009 = vmatprep.subr.bf16.mxu0 0
        %3010 = vmatpush1.bf16.msra.mxu0 %v2423
        %3011 = vmatprep.subr.bf16.mxu0 0
        %3012 = vmatpush1.bf16.msra.mxu0 %v2424
        %3013 = vmatprep.subr.bf16.mxu0 0
        %3014 = vmatpush1.bf16.msra.mxu0 %v2425
        %3015 = vmatprep.subr.bf16.mxu0 0
        %3016 = vmatpush1.bf16.msra.mxu0 %v2426
        %3017 = vmatprep.subr.bf16.mxu0 0
        %3018 = vmatpush1.bf16.msra.mxu0 %v2427
        %3019 = vmatprep.subr.bf16.mxu0 0
        %3020 = vmatpush1.bf16.msra.mxu0 %v2428
        %3021 = vmatprep.subr.bf16.mxu0 0
        %3022 = vmatpush1.bf16.msra.mxu0 %v2429
        %3023 = vmatprep.subr.bf16.mxu0 0
        %3024 = vmatpush1.bf16.msra.mxu0 %v2430
        %3025 = vmatprep.subr.bf16.mxu0 0
        %3026 = vmatpush1.bf16.msra.mxu0 %v2431
        %3027 = vmatprep.subr.bf16.mxu0 0
        %3028 = vmatpush1.bf16.msra.mxu0 %v2432
        %3029 = vmatprep.subr.bf16.mxu0 0
        %3030 = vmatpush1.bf16.msra.mxu0 %v2433
        %3031 = vmatprep.subr.bf16.mxu0 0
        %3032 = vmatpush1.bf16.msra.mxu0 %v2434
        %3033 = vmatprep.subr.bf16.mxu0 0
        %3034 = vmatpush1.bf16.msra.mxu0 %v2435
        %3035 = vmatprep.subr.bf16.mxu0 0
        %3036 = vmatpush1.bf16.msra.mxu0 %v2436
        %3037 = vmatprep.mubr.bf16.mxu0 %v1169
        %3038 = vmatmul.mubr.bf16.gmra.mrb[0].mxu0 %v1167
        %v3039 = vpop.f32.mrb[0].mxu0
        %v3040 = vadd.f32 %v3000, %v3039
        %v3041 = vpop.f32.mrb[0].mxu0
        %v3042 = vpop.f32.mrb[0].mxu0
        %v3043 = vpop.f32.mrb[0].mxu0
        %3044 = vdwg.mxu0
        %3045 = vmatprep.subr.bf16.mxu0 0
        %3046 = vmatpush1.bf16.msra.mxu0 %v2437
        %3047 = vmatprep.subr.bf16.mxu0 0
        %3048 = vmatpush1.bf16.msra.mxu0 %v2438
        %3049 = vmatprep.subr.bf16.mxu0 0
        %3050 = vmatpush1.bf16.msra.mxu0 %v2439
        %3051 = vmatprep.subr.bf16.mxu0 0
        %3052 = vmatpush1.bf16.msra.mxu0 %v2440
        %3053 = vmatprep.subr.bf16.mxu0 0
        %3054 = vmatpush1.bf16.msra.mxu0 %v2441
        %3055 = vmatprep.subr.bf16.mxu0 0
        %3056 = vmatpush1.bf16.msra.mxu0 %v2442
        %3057 = vmatprep.subr.bf16.mxu0 0
        %3058 = vmatpush1.bf16.msra.mxu0 %v2443
        %3059 = vmatprep.subr.bf16.mxu0 0
        %3060 = vmatpush1.bf16.msra.mxu0 %v2444
        %3061 = vmatprep.subr.bf16.mxu0 0
        %3062 = vmatpush1.bf16.msra.mxu0 %v2445
        %3063 = vmatprep.subr.bf16.mxu0 0
        %3064 = vmatpush1.bf16.msra.mxu0 %v2446
        %3065 = vmatprep.subr.bf16.mxu0 0
        %3066 = vmatpush1.bf16.msra.mxu0 %v2447
        %3067 = vmatprep.subr.bf16.mxu0 0
        %3068 = vmatpush1.bf16.msra.mxu0 %v2448
        %3069 = vmatprep.subr.bf16.mxu0 0
        %3070 = vmatpush1.bf16.msra.mxu0 %v2449
        %3071 = vmatprep.subr.bf16.mxu0 0
        %3072 = vmatpush1.bf16.msra.mxu0 %v2450
        %3073 = vmatprep.subr.bf16.mxu0 0
        %3074 = vmatpush1.bf16.msra.mxu0 %v2451
        %3075 = vmatprep.subr.bf16.mxu0 0
        %3076 = vmatpush1.bf16.msra.mxu0 %v2452
        %3077 = vmatprep.mubr.bf16.mxu0 %v1207
        %3078 = vmatmul.mubr.bf16.gmra.mrb[0].mxu0 %v1193
        %v3079 = vpop.f32.mrb[0].mxu0
        %v3080 = vadd.f32 %v3040, %v3079
        %v3081 = vpop.f32.mrb[0].mxu0
        %v3082 = vpop.f32.mrb[0].mxu0
        %v3083 = vpop.f32.mrb[0].mxu0
        %3084 = vdwg.mxu0
        %3085 = vmatprep.subr.bf16.mxu0 0
        %3086 = vmatpush1.bf16.msra.mxu0 %v2453
        %3087 = vmatprep.subr.bf16.mxu0 0
        %3088 = vmatpush1.bf16.msra.mxu0 %v2454
        %3089 = vmatprep.subr.bf16.mxu0 0
        %3090 = vmatpush1.bf16.msra.mxu0 %v2455
        %3091 = vmatprep.subr.bf16.mxu0 0
        %3092 = vmatpush1.bf16.msra.mxu0 %v2456
        %3093 = vmatprep.subr.bf16.mxu0 0
        %3094 = vmatpush1.bf16.msra.mxu0 %v2457
        %3095 = vmatprep.subr.bf16.mxu0 0
        %3096 = vmatpush1.bf16.msra.mxu0 %v2458
        %3097 = vmatprep.subr.bf16.mxu0 0
        %3098 = vmatpush1.bf16.msra.mxu0 %v2459
        %3099 = vmatprep.subr.bf16.mxu0 0
        %3100 = vmatpush1.bf16.msra.mxu0 %v2460
        %3101 = vmatprep.subr.bf16.mxu0 0
        %3102 = vmatpush1.bf16.msra.mxu0 %v2461
        %3103 = vmatprep.subr.bf16.mxu0 0
        %3104 = vmatpush1.bf16.msra.mxu0 %v2462
        %3105 = vmatprep.subr.bf16.mxu0 0
        %3106 = vmatpush1.bf16.msra.mxu0 %v2463
        %3107 = vmatprep.subr.bf16.mxu0 0
        %3108 = vmatpush1.bf16.msra.mxu0 %v2464
        %3109 = vmatprep.subr.bf16.mxu0 0
        %3110 = vmatpush1.bf16.msra.mxu0 %v2465
        %3111 = vmatprep.subr.bf16.mxu0 0
        %3112 = vmatpush1.bf16.msra.mxu0 %v2466
        %3113 = vmatprep.subr.bf16.mxu0 0
        %3114 = vmatpush1.bf16.msra.mxu0 %v2467
        %3115 = vmatprep.subr.bf16.mxu0 0
        %3116 = vmatpush1.bf16.msra.mxu0 %v2468
        %3117 = vmatprep.mubr.bf16.mxu0 %v1217
        %3118 = vmatmul.mubr.bf16.gmra.mrb[0].mxu0 %v1215
        %v3119 = vpop.f32.mrb[0].mxu0
        %v3120 = vadd.f32 %v3080, %v3119
        %v3121 = vpop.f32.mrb[0].mxu0
        %v3122 = vpop.f32.mrb[0].mxu0
        %v3123 = vpop.f32.mrb[0].mxu0
        %3124 = vdwg.mxu0
        %3125 = vmatprep.subr.bf16.mxu0 0
        %3126 = vmatpush1.bf16.msra.mxu0 %v2469
        %3127 = vmatprep.subr.bf16.mxu0 0
        %3128 = vmatpush1.bf16.msra.mxu0 %v2470
        %3129 = vmatprep.subr.bf16.mxu0 0
        %3130 = vmatpush1.bf16.msra.mxu0 %v2471
        %3131 = vmatprep.subr.bf16.mxu0 0
        %3132 = vmatpush1.bf16.msra.mxu0 %v2472
        %3133 = vmatprep.subr.bf16.mxu0 0
        %3134 = vmatpush1.bf16.msra.mxu0 %v2473
        %3135 = vmatprep.subr.bf16.mxu0 0
        %3136 = vmatpush1.bf16.msra.mxu0 %v2474
        %3137 = vmatprep.subr.bf16.mxu0 0
        %3138 = vmatpush1.bf16.msra.mxu0 %v2475
        %3139 = vmatprep.subr.bf16.mxu0 0
        %3140 = vmatpush1.bf16.msra.mxu0 %v2476
        %3141 = vmatprep.subr.bf16.mxu0 0
        %3142 = vmatpush1.bf16.msra.mxu0 %v2477
        %3143 = vmatprep.subr.bf16.mxu0 0
        %3144 = vmatpush1.bf16.msra.mxu0 %v2478
        %3145 = vmatprep.subr.bf16.mxu0 0
        %3146 = vmatpush1.bf16.msra.mxu0 %v2479
        %3147 = vmatprep.subr.bf16.mxu0 0
        %3148 = vmatpush1.bf16.msra.mxu0 %v2480
        %3149 = vmatprep.subr.bf16.mxu0 0
        %3150 = vmatpush1.bf16.msra.mxu0 %v2481
        %3151 = vmatprep.subr.bf16.mxu0 0
        %3152 = vmatpush1.bf16.msra.mxu0 %v2482
        %3153 = vmatprep.subr.bf16.mxu0 0
        %3154 = vmatpush1.bf16.msra.mxu0 %v2483
        %3155 = vmatprep.subr.bf16.mxu0 0
        %3156 = vmatpush1.bf16.msra.mxu0 %v2484
        %3157 = vmatprep.mubr.bf16.mxu0 %v1214
        %3158 = vmatmul.mubr.bf16.gmra.mrb[0].mxu0 %v1200
        %v3159 = vpop.f32.mrb[0].mxu0
        %v3160 = vadd.f32 %v3120, %v3159
        %v3161 = vpop.f32.mrb[0].mxu0
        %v3162 = vpop.f32.mrb[0].mxu0
        %v3163 = vpop.f32.mrb[0].mxu0
        %3164 = vdwg.mxu0
        %3165 = vmatprep.subr.bf16.mxu0 0
        %3166 = vmatpush1.bf16.msra.mxu0 %v2485
        %3167 = vmatprep.subr.bf16.mxu0 0
        %3168 = vmatpush1.bf16.msra.mxu0 %v2486
        %3169 = vmatprep.subr.bf16.mxu0 0
        %3170 = vmatpush1.bf16.msra.mxu0 %v2487
        %3171 = vmatprep.subr.bf16.mxu0 0
        %3172 = vmatpush1.bf16.msra.mxu0 %v2488
        %3173 = vmatprep.subr.bf16.mxu0 0
        %3174 = vmatpush1.bf16.msra.mxu0 %v2489
        %3175 = vmatprep.subr.bf16.mxu0 0
        %3176 = vmatpush1.bf16.msra.mxu0 %v2490
        %3177 = vmatprep.subr.bf16.mxu0 0
        %3178 = vmatpush1.bf16.msra.mxu0 %v2491
        %3179 = vmatprep.subr.bf16.mxu0 0
        %3180 = vmatpush1.bf16.msra.mxu0 %v2492
        %3181 = vmatprep.subr.bf16.mxu0 0
        %3182 = vmatpush1.bf16.msra.mxu0 %v2493
        %3183 = vmatprep.subr.bf16.mxu0 0
        %3184 = vmatpush1.bf16.msra.mxu0 %v2494
        %3185 = vmatprep.subr.bf16.mxu0 0
        %3186 = vmatpush1.bf16.msra.mxu0 %v2495
        %3187 = vmatprep.subr.bf16.mxu0 0
        %3188 = vmatpush1.bf16.msra.mxu0 %v2496
        %3189 = vmatprep.subr.bf16.mxu0 0
        %3190 = vmatpush1.bf16.msra.mxu0 %v2497
        %3191 = vmatprep.subr.bf16.mxu0 0
        %3192 = vmatpush1.bf16.msra.mxu0 %v2498
        %3193 = vmatprep.subr.bf16.mxu0 0
        %3194 = vmatpush1.bf16.msra.mxu0 %v2499
        %3195 = vmatprep.subr.bf16.mxu0 0
        %3196 = vmatpush1.bf16.msra.mxu0 %v2500
        %3197 = vmatprep.mubr.bf16.mxu0 %v1218
        %3198 = vmatmul.mubr.bf16.gmra.mrb[0].mxu0 %v1216
        %v3199 = vpop.f32.mrb[0].mxu0
        %v3200 = vadd.f32 %v3160, %v3199
        %v3201 = vpop.f32.mrb[0].mxu0
        %v3202 = vpop.f32.mrb[0].mxu0
        %v3203 = vpop.f32.mrb[0].mxu0
        %3204 = vdwg.mxu0
        %3205 = vmatprep.subr.bf16.mxu0 0
        %3206 = vmatpush1.bf16.msra.mxu0 %v2501
        %3207 = vmatprep.subr.bf16.mxu0 0
        %3208 = vmatpush1.bf16.msra.mxu0 %v2502
        %3209 = vmatprep.subr.bf16.mxu0 0
        %3210 = vmatpush1.bf16.msra.mxu0 %v2503
        %3211 = vmatprep.subr.bf16.mxu0 0
        %3212 = vmatpush1.bf16.msra.mxu0 %v2504
        %3213 = vmatprep.subr.bf16.mxu0 0
        %3214 = vmatpush1.bf16.msra.mxu0 %v2505
        %3215 = vmatprep.subr.bf16.mxu0 0
        %3216 = vmatpush1.bf16.msra.mxu0 %v2506
        %3217 = vmatprep.subr.bf16.mxu0 0
        %3218 = vmatpush1.bf16.msra.mxu0 %v2507
        %3219 = vmatprep.subr.bf16.mxu0 0
        %3220 = vmatpush1.bf16.msra.mxu0 %v2508
        %3221 = vmatprep.subr.bf16.mxu0 0
        %3222 = vmatpush1.bf16.msra.mxu0 %v2509
        %3223 = vmatprep.subr.bf16.mxu0 0
        %3224 = vmatpush1.bf16.msra.mxu0 %v2510
        %3225 = vmatprep.subr.bf16.mxu0 0
        %3226 = vmatpush1.bf16.msra.mxu0 %v2511
        %3227 = vmatprep.subr.bf16.mxu0 0
        %3228 = vmatpush1.bf16.msra.mxu0 %v2512
        %3229 = vmatprep.subr.bf16.mxu0 0
        %3230 = vmatpush1.bf16.msra.mxu0 %v2513
        %3231 = vmatprep.subr.bf16.mxu0 0
        %3232 = vmatpush1.bf16.msra.mxu0 %v2514
        %3233 = vmatprep.subr.bf16.mxu0 0
        %3234 = vmatpush1.bf16.msra.mxu0 %v2515
        %3235 = vmatprep.subr.bf16.mxu0 0
        %3236 = vmatpush1.bf16.msra.mxu0 %v2516
        %3237 = vmatprep.mubr.bf16.mxu0 %v1256
        %3238 = vmatmul.mubr.bf16.gmra.mrb[0].mxu0 %v1242
        %v3239 = vpop.f32.mrb[0].mxu0
        %v3240 = vadd.f32 %v3200, %v3239
        %v3241 = vpop.f32.mrb[0].mxu0
        %v3242 = vpop.f32.mrb[0].mxu0
        %v3243 = vpop.f32.mrb[0].mxu0
        %3244 = vdwg.mxu0
        %3245 = vmatprep.subr.bf16.mxu0 0
        %3246 = vmatpush1.bf16.msra.mxu0 %v2517
        %3247 = vmatprep.subr.bf16.mxu0 0
        %3248 = vmatpush1.bf16.msra.mxu0 %v2518
        %3249 = vmatprep.subr.bf16.mxu0 0
        %3250 = vmatpush1.bf16.msra.mxu0 %v2519
        %3251 = vmatprep.subr.bf16.mxu0 0
        %3252 = vmatpush1.bf16.msra.mxu0 %v2520
        %3253 = vmatprep.subr.bf16.mxu0 0
        %3254 = vmatpush1.bf16.msra.mxu0 %v2521
        %3255 = vmatprep.subr.bf16.mxu0 0
        %3256 = vmatpush1.bf16.msra.mxu0 %v2522
        %3257 = vmatprep.subr.bf16.mxu0 0
        %3258 = vmatpush1.bf16.msra.mxu0 %v2523
        %3259 = vmatprep.subr.bf16.mxu0 0
        %3260 = vmatpush1.bf16.msra.mxu0 %v2524
        %3261 = vmatprep.subr.bf16.mxu0 0
        %3262 = vmatpush1.bf16.msra.mxu0 %v2525
        %3263 = vmatprep.subr.bf16.mxu0 0
        %3264 = vmatpush1.bf16.msra.mxu0 %v2526
        %3265 = vmatprep.subr.bf16.mxu0 0
        %3266 = vmatpush1.bf16.msra.mxu0 %v2527
        %3267 = vmatprep.subr.bf16.mxu0 0
        %3268 = vmatpush1.bf16.msra.mxu0 %v2528
        %3269 = vmatprep.subr.bf16.mxu0 0
        %3270 = vmatpush1.bf16.msra.mxu0 %v2529
        %3271 = vmatprep.subr.bf16.mxu0 0
        %3272 = vmatpush1.bf16.msra.mxu0 %v2530
        %3273 = vmatprep.subr.bf16.mxu0 0
        %3274 = vmatpush1.bf16.msra.mxu0 %v2531
        %3275 = vmatprep.subr.bf16.mxu0 0
        %3276 = vmatpush1.bf16.msra.mxu0 %v2532
        %3277 = vmatprep.mubr.bf16.mxu0 %v1266
        %3278 = vmatmul.mubr.bf16.gmra.mrb[0].mxu0 %v1264
        %v3279 = vpop.f32.mrb[0].mxu0
        %v3280 = vadd.f32 %v3240, %v3279
        %v3281 = vpop.f32.mrb[0].mxu0
        %v3282 = vpop.f32.mrb[0].mxu0
        %v3283 = vpop.f32.mrb[0].mxu0
        %3284 = vdwg.mxu0
        %3285 = vmatprep.subr.bf16.mxu0 0
        %3286 = vmatpush1.bf16.msra.mxu0 %v2533
        %3287 = vmatprep.subr.bf16.mxu0 0
        %3288 = vmatpush1.bf16.msra.mxu0 %v2534
        %3289 = vmatprep.subr.bf16.mxu0 0
        %3290 = vmatpush1.bf16.msra.mxu0 %v2535
        %3291 = vmatprep.subr.bf16.mxu0 0
        %3292 = vmatpush1.bf16.msra.mxu0 %v2536
        %3293 = vmatprep.subr.bf16.mxu0 0
        %3294 = vmatpush1.bf16.msra.mxu0 %v2537
        %3295 = vmatprep.subr.bf16.mxu0 0
        %3296 = vmatpush1.bf16.msra.mxu0 %v2538
        %3297 = vmatprep.subr.bf16.mxu0 0
        %3298 = vmatpush1.bf16.msra.mxu0 %v2539
        %3299 = vmatprep.subr.bf16.mxu0 0
        %3300 = vmatpush1.bf16.msra.mxu0 %v2540
        %3301 = vmatprep.subr.bf16.mxu0 0
        %3302 = vmatpush1.bf16.msra.mxu0 %v2541
        %3303 = vmatprep.subr.bf16.mxu0 0
        %3304 = vmatpush1.bf16.msra.mxu0 %v2542
        %3305 = vmatprep.subr.bf16.mxu0 0
        %3306 = vmatpush1.bf16.msra.mxu0 %v2543
        %3307 = vmatprep.subr.bf16.mxu0 0
        %3308 = vmatpush1.bf16.msra.mxu0 %v2544
        %3309 = vmatprep.subr.bf16.mxu0 0
        %3310 = vmatpush1.bf16.msra.mxu0 %v2545
        %3311 = vmatprep.subr.bf16.mxu0 0
        %3312 = vmatpush1.bf16.msra.mxu0 %v2546
        %3313 = vmatprep.subr.bf16.mxu0 0
        %3314 = vmatpush1.bf16.msra.mxu0 %v2547
        %3315 = vmatprep.subr.bf16.mxu0 0
        %3316 = vmatpush1.bf16.msra.mxu0 %v2548
        %3317 = vmatprep.mubr.bf16.mxu0 %v1263
        %3318 = vmatmul.mubr.bf16.gmra.mrb[0].mxu0 %v1249
        %v3319 = vpop.f32.mrb[0].mxu0
        %v3320 = vadd.f32 %v3280, %v3319
        %v3321 = vpop.f32.mrb[0].mxu0
        %v3322 = vpop.f32.mrb[0].mxu0
        %v3323 = vpop.f32.mrb[0].mxu0
        %3324 = vdwg.mxu0
        %3325 = vmatprep.subr.bf16.mxu0 0
        %3326 = vmatpush1.bf16.msra.mxu0 %v2549
        %3327 = vmatprep.subr.bf16.mxu0 0
        %3328 = vmatpush1.bf16.msra.mxu0 %v2550
        %3329 = vmatprep.subr.bf16.mxu0 0
        %3330 = vmatpush1.bf16.msra.mxu0 %v2551
        %3331 = vmatprep.subr.bf16.mxu0 0
        %3332 = vmatpush1.bf16.msra.mxu0 %v2552
        %3333 = vmatprep.subr.bf16.mxu0 0
        %3334 = vmatpush1.bf16.msra.mxu0 %v2553
        %3335 = vmatprep.subr.bf16.mxu0 0
        %3336 = vmatpush1.bf16.msra.mxu0 %v2554
        %3337 = vmatprep.subr.bf16.mxu0 0
        %3338 = vmatpush1.bf16.msra.mxu0 %v2555
        %3339 = vmatprep.subr.bf16.mxu0 0
        %3340 = vmatpush1.bf16.msra.mxu0 %v2556
        %3341 = vmatprep.subr.bf16.mxu0 0
        %3342 = vmatpush1.bf16.msra.mxu0 %v2557
        %3343 = vmatprep.subr.bf16.mxu0 0
        %3344 = vmatpush1.bf16.msra.mxu0 %v2558
        %3345 = vmatprep.subr.bf16.mxu0 0
        %3346 = vmatpush1.bf16.msra.mxu0 %v2559
        %3347 = vmatprep.subr.bf16.mxu0 0
        %3348 = vmatpush1.bf16.msra.mxu0 %v2560
        %3349 = vmatprep.subr.bf16.mxu0 0
        %3350 = vmatpush1.bf16.msra.mxu0 %v2561
        %3351 = vmatprep.subr.bf16.mxu0 0
        %3352 = vmatpush1.bf16.msra.mxu0 %v2562
        %3353 = vmatprep.subr.bf16.mxu0 0
        %3354 = vmatpush1.bf16.msra.mxu0 %v2563
        %3355 = vmatprep.subr.bf16.mxu0 0
        %3356 = vmatpush1.bf16.msra.mxu0 %v2564
        %3357 = vmatprep.mubr.bf16.mxu0 %v1267
        %3358 = vmatmul.mubr.bf16.gmra.mrb[0].mxu0 %v1265
        %v3359 = vpop.f32.mrb[0].mxu0
        %v3360 = vadd.f32 %v3320, %v3359
        %v3361 = vpop.f32.mrb[0].mxu0
        %v3362 = vpop.f32.mrb[0].mxu0
        %v3363 = vpop.f32.mrb[0].mxu0
        %3364 = vdwg.mxu0
        %3365 = vmatprep.subr.bf16.mxu0 0
        %3366 = vmatpush1.bf16.msra.mxu0 %v2565
        %3367 = vmatprep.subr.bf16.mxu0 0
        %3368 = vmatpush1.bf16.msra.mxu0 %v2566
        %3369 = vmatprep.subr.bf16.mxu0 0
        %3370 = vmatpush1.bf16.msra.mxu0 %v2567
        %3371 = vmatprep.subr.bf16.mxu0 0
        %3372 = vmatpush1.bf16.msra.mxu0 %v2568
        %3373 = vmatprep.subr.bf16.mxu0 0
        %3374 = vmatpush1.bf16.msra.mxu0 %v2569
        %3375 = vmatprep.subr.bf16.mxu0 0
        %3376 = vmatpush1.bf16.msra.mxu0 %v2570
        %3377 = vmatprep.subr.bf16.mxu0 0
        %3378 = vmatpush1.bf16.msra.mxu0 %v2571
        %3379 = vmatprep.subr.bf16.mxu0 0
        %3380 = vmatpush1.bf16.msra.mxu0 %v2572
        %3381 = vmatprep.subr.bf16.mxu0 0
        %3382 = vmatpush1.bf16.msra.mxu0 %v2573
        %3383 = vmatprep.subr.bf16.mxu0 0
        %3384 = vmatpush1.bf16.msra.mxu0 %v2574
        %3385 = vmatprep.subr.bf16.mxu0 0
        %3386 = vmatpush1.bf16.msra.mxu0 %v2575
        %3387 = vmatprep.subr.bf16.mxu0 0
        %3388 = vmatpush1.bf16.msra.mxu0 %v2576
        %3389 = vmatprep.subr.bf16.mxu0 0
        %3390 = vmatpush1.bf16.msra.mxu0 %v2577
        %3391 = vmatprep.subr.bf16.mxu0 0
        %3392 = vmatpush1.bf16.msra.mxu0 %v2578
        %3393 = vmatprep.subr.bf16.mxu0 0
        %3394 = vmatpush1.bf16.msra.mxu0 %v2579
        %3395 = vmatprep.subr.bf16.mxu0 0
        %3396 = vmatpush1.bf16.msra.mxu0 %v2580
        %3397 = vmatprep.mubr.bf16.mxu0 %v1305
        %3398 = vmatmul.mubr.bf16.gmra.mrb[0].mxu0 %v1291
        %v3399 = vpop.f32.mrb[0].mxu0
        %v3400 = vadd.f32 %v3360, %v3399
        %v3401 = vpop.f32.mrb[0].mxu0
        %v3402 = vpop.f32.mrb[0].mxu0
        %v3403 = vpop.f32.mrb[0].mxu0
        %3404 = vdwg.mxu0
        %3405 = vmatprep.subr.bf16.mxu0 0
        %3406 = vmatpush1.bf16.msra.mxu0 %v2581
        %3407 = vmatprep.subr.bf16.mxu0 0
        %3408 = vmatpush1.bf16.msra.mxu0 %v2582
        %3409 = vmatprep.subr.bf16.mxu0 0
        %3410 = vmatpush1.bf16.msra.mxu0 %v2583
        %3411 = vmatprep.subr.bf16.mxu0 0
        %3412 = vmatpush1.bf16.msra.mxu0 %v2584
        %3413 = vmatprep.subr.bf16.mxu0 0
        %3414 = vmatpush1.bf16.msra.mxu0 %v2585
        %3415 = vmatprep.subr.bf16.mxu0 0
        %3416 = vmatpush1.bf16.msra.mxu0 %v2586
        %3417 = vmatprep.subr.bf16.mxu0 0
        %3418 = vmatpush1.bf16.msra.mxu0 %v2587
        %3419 = vmatprep.subr.bf16.mxu0 0
        %3420 = vmatpush1.bf16.msra.mxu0 %v2588
        %3421 = vmatprep.subr.bf16.mxu0 0
        %3422 = vmatpush1.bf16.msra.mxu0 %v2589
        %3423 = vmatprep.subr.bf16.mxu0 0
        %3424 = vmatpush1.bf16.msra.mxu0 %v2590
        %3425 = vmatprep.subr.bf16.mxu0 0
        %3426 = vmatpush1.bf16.msra.mxu0 %v2591
        %3427 = vmatprep.subr.bf16.mxu0 0
        %3428 = vmatpush1.bf16.msra.mxu0 %v2592
        %3429 = vmatprep.subr.bf16.mxu0 0
        %3430 = vmatpush1.bf16.msra.mxu0 %v2593
        %3431 = vmatprep.subr.bf16.mxu0 0
        %3432 = vmatpush1.bf16.msra.mxu0 %v2594
        %3433 = vmatprep.subr.bf16.mxu0 0
        %3434 = vmatpush1.bf16.msra.mxu0 %v2595
        %3435 = vmatprep.subr.bf16.mxu0 0
        %3436 = vmatpush1.bf16.msra.mxu0 %v2596
        %3437 = vmatprep.mubr.bf16.mxu0 %v1315
        %3438 = vmatmul.mubr.bf16.gmra.mrb[0].mxu0 %v1313
        %v3439 = vpop.f32.mrb[0].mxu0
        %v3440 = vadd.f32 %v3400, %v3439
        %v3441 = vpop.f32.mrb[0].mxu0
        %v3442 = vpop.f32.mrb[0].mxu0
        %v3443 = vpop.f32.mrb[0].mxu0
        %3444 = vdwg.mxu0
        %3445 = vmatprep.subr.bf16.mxu0 0
        %3446 = vmatpush1.bf16.msra.mxu0 %v2597
        %3447 = vmatprep.subr.bf16.mxu0 0
        %3448 = vmatpush1.bf16.msra.mxu0 %v2598
        %3449 = vmatprep.subr.bf16.mxu0 0
        %3450 = vmatpush1.bf16.msra.mxu0 %v2599
        %3451 = vmatprep.subr.bf16.mxu0 0
        %3452 = vmatpush1.bf16.msra.mxu0 %v2600
        %3453 = vmatprep.subr.bf16.mxu0 0
        %3454 = vmatpush1.bf16.msra.mxu0 %v2601
        %3455 = vmatprep.subr.bf16.mxu0 0
        %3456 = vmatpush1.bf16.msra.mxu0 %v2602
        %3457 = vmatprep.subr.bf16.mxu0 0
        %3458 = vmatpush1.bf16.msra.mxu0 %v2603
        %3459 = vmatprep.subr.bf16.mxu0 0
        %3460 = vmatpush1.bf16.msra.mxu0 %v2604
        %3461 = vmatprep.subr.bf16.mxu0 0
        %3462 = vmatpush1.bf16.msra.mxu0 %v2605
        %3463 = vmatprep.subr.bf16.mxu0 0
        %3464 = vmatpush1.bf16.msra.mxu0 %v2606
        %3465 = vmatprep.subr.bf16.mxu0 0
        %3466 = vmatpush1.bf16.msra.mxu0 %v2607
        %3467 = vmatprep.subr.bf16.mxu0 0
        %3468 = vmatpush1.bf16.msra.mxu0 %v2608
        %3469 = vmatprep.subr.bf16.mxu0 0
        %3470 = vmatpush1.bf16.msra.mxu0 %v2609
        %3471 = vmatprep.subr.bf16.mxu0 0
        %3472 = vmatpush1.bf16.msra.mxu0 %v2610
        %3473 = vmatprep.subr.bf16.mxu0 0
        %3474 = vmatpush1.bf16.msra.mxu0 %v2611
        %3475 = vmatprep.subr.bf16.mxu0 0
        %3476 = vmatpush1.bf16.msra.mxu0 %v2612
        %3477 = vmatprep.mubr.bf16.mxu0 %v1312
        %3478 = vmatmul.mubr.bf16.gmra.mrb[0].mxu0 %v1298
        %v3479 = vpop.f32.mrb[0].mxu0
        %v3480 = vadd.f32 %v3440, %v3479
        %v3481 = vpop.f32.mrb[0].mxu0
        %v3482 = vpop.f32.mrb[0].mxu0
        %v3483 = vpop.f32.mrb[0].mxu0
        %3484 = vdwg.mxu0
        %3485 = vmatprep.subr.bf16.mxu0 0
        %3486 = vmatpush1.bf16.msra.mxu0 %v2613
        %3487 = vmatprep.subr.bf16.mxu0 0
        %3488 = vmatpush1.bf16.msra.mxu0 %v2614
        %3489 = vmatprep.subr.bf16.mxu0 0
        %3490 = vmatpush1.bf16.msra.mxu0 %v2615
        %3491 = vmatprep.subr.bf16.mxu0 0
        %3492 = vmatpush1.bf16.msra.mxu0 %v2616
        %3493 = vmatprep.subr.bf16.mxu0 0
        %3494 = vmatpush1.bf16.msra.mxu0 %v2617
        %3495 = vmatprep.subr.bf16.mxu0 0
        %3496 = vmatpush1.bf16.msra.mxu0 %v2618
        %3497 = vmatprep.subr.bf16.mxu0 0
        %3498 = vmatpush1.bf16.msra.mxu0 %v2619
        %3499 = vmatprep.subr.bf16.mxu0 0
        %3500 = vmatpush1.bf16.msra.mxu0 %v2620
        %3501 = vmatprep.subr.bf16.mxu0 0
        %3502 = vmatpush1.bf16.msra.mxu0 %v2621
        %3503 = vmatprep.subr.bf16.mxu0 0
        %3504 = vmatpush1.bf16.msra.mxu0 %v2622
        %3505 = vmatprep.subr.bf16.mxu0 0
        %3506 = vmatpush1.bf16.msra.mxu0 %v2623
        %3507 = vmatprep.subr.bf16.mxu0 0
        %3508 = vmatpush1.bf16.msra.mxu0 %v2624
        %3509 = vmatprep.subr.bf16.mxu0 0
        %3510 = vmatpush1.bf16.msra.mxu0 %v2625
        %3511 = vmatprep.subr.bf16.mxu0 0
        %3512 = vmatpush1.bf16.msra.mxu0 %v2626
        %3513 = vmatprep.subr.bf16.mxu0 0
        %3514 = vmatpush1.bf16.msra.mxu0 %v2627
        %3515 = vmatprep.subr.bf16.mxu0 0
        %3516 = vmatpush1.bf16.msra.mxu0 %v2628
        %3517 = vmatprep.mubr.bf16.mxu0 %v1316
        %3518 = vmatmul.mubr.bf16.gmra.mrb[0].mxu0 %v1314
        %v3519 = vpop.f32.mrb[0].mxu0
        %v3520 = vadd.f32 %v3480, %v3519
        %v3521 = vpop.f32.mrb[0].mxu0
        %v3522 = vpop.f32.mrb[0].mxu0
        %v3523 = vpop.f32.mrb[0].mxu0
        %3524 = vdwg.mxu0
        %3525 = vst [vmem:[%s583] sm:$0x3] %v3520
        %s3526 = sld [smem:[#allocation7]]
        %v3527 = vstv %s3526
        %v3528 = vmul.f32 %v3520, %v3527
        %v3529 = vld [vmem:[#allocation12] sm:$0xff]
        %v3530 = vld [vmem:[%s518] sm:$0xf]
        %v3531 = vld [vmem:[%s518 + $0x4] sm:$0xf]
        %v3532 = vld [vmem:[%s518 + $0x8] sm:$0xf]
        %v3533 = vld [vmem:[%s518 + $0xc] sm:$0xf]
        %v3534 = vld [vmem:[%s518 + $0x10] sm:$0xf]
        %v3535 = vld [vmem:[%s518 + $0x14] sm:$0xf]
        %v3536 = vld [vmem:[%s518 + $0x18] sm:$0xf]
        %v3537 = vld [vmem:[%s518 + $0x1c] sm:$0xf]
        %v3538 = vld [vmem:[%s518 + $0x20] sm:$0xf]
        %v3539 = vld [vmem:[%s518 + $0x24] sm:$0xf]
        %v3540 = vld [vmem:[%s518 + $0x28] sm:$0xf]
        %v3541 = vld [vmem:[%s518 + $0x2c] sm:$0xf]
        %v3542 = vld [vmem:[%s518 + $0x30] sm:$0xf]
        %v3543 = vld [vmem:[%s518 + $0x34] sm:$0xf]
        %v3544 = vld [vmem:[%s518 + $0x38] sm:$0xf]
        %v3545 = vld [vmem:[%s518 + $0x3c] sm:$0xf]
        %v3546 = vld [vmem:[%s518 + $0x40] sm:$0xf]
        %v3547 = vld [vmem:[%s518 + $0x44] sm:$0xf]
        %v3548 = vld [vmem:[%s518 + $0x48] sm:$0xf]
        %v3549 = vld [vmem:[%s518 + $0x4c] sm:$0xf]
        %v3550 = vld [vmem:[%s518 + $0x50] sm:$0xf]
        %v3551 = vld [vmem:[%s518 + $0x54] sm:$0xf]
        %v3552 = vld [vmem:[%s518 + $0x58] sm:$0xf]
        %v3553 = vld [vmem:[%s518 + $0x5c] sm:$0xf]
        %v3554 = vld [vmem:[%s518 + $0x60] sm:$0xf]
        %v3555 = vld [vmem:[%s518 + $0x64] sm:$0xf]
        %v3556 = vld [vmem:[%s518 + $0x68] sm:$0xf]
        %v3557 = vld [vmem:[%s518 + $0x6c] sm:$0xf]
        %v3558 = vld [vmem:[%s518 + $0x70] sm:$0xf]
        %v3559 = vld [vmem:[%s518 + $0x74] sm:$0xf]
        %v3560 = vld [vmem:[%s518 + $0x78] sm:$0xf]
        %v3561 = vld [vmem:[%s518 + $0x7c] sm:$0xf]
        %v3562 = vld [vmem:[%s518 + $0x80] sm:$0xf]
        %v3563 = vld [vmem:[%s518 + $0x84] sm:$0xf]
        %v3564 = vld [vmem:[%s518 + $0x88] sm:$0xf]
        %v3565 = vld [vmem:[%s518 + $0x8c] sm:$0xf]
        %v3566 = vld [vmem:[%s518 + $0x90] sm:$0xf]
        %v3567 = vld [vmem:[%s518 + $0x94] sm:$0xf]
        %v3568 = vld [vmem:[%s518 + $0x98] sm:$0xf]
        %v3569 = vld [vmem:[%s518 + $0x9c] sm:$0xf]
        %v3570 = vld [vmem:[%s518 + $0xa0] sm:$0xf]
        %v3571 = vld [vmem:[%s518 + $0xa4] sm:$0xf]
        %v3572 = vld [vmem:[%s518 + $0xa8] sm:$0xf]
        %v3573 = vld [vmem:[%s518 + $0xac] sm:$0xf]
        %v3574 = vld [vmem:[%s518 + $0xb0] sm:$0xf]
        %v3575 = vld [vmem:[%s518 + $0xb4] sm:$0xf]
        %v3576 = vld [vmem:[%s518 + $0xb8] sm:$0xf]
        %v3577 = vld [vmem:[%s518 + $0xbc] sm:$0xf]
        %v3578 = vld [vmem:[%s518 + $0xc0] sm:$0xf]
        %v3579 = vld [vmem:[%s518 + $0xc4] sm:$0xf]
        %v3580 = vld [vmem:[%s518 + $0xc8] sm:$0xf]
        %v3581 = vld [vmem:[%s518 + $0xcc] sm:$0xf]
        %v3582 = vld [vmem:[%s518 + $0xd0] sm:$0xf]
        %v3583 = vld [vmem:[%s518 + $0xd4] sm:$0xf]
        %v3584 = vld [vmem:[%s518 + $0xd8] sm:$0xf]
        %v3585 = vld [vmem:[%s518 + $0xdc] sm:$0xf]
        %v3586 = vld [vmem:[%s518 + $0xe0] sm:$0xf]
        %v3587 = vld [vmem:[%s518 + $0xe4] sm:$0xf]
        %v3588 = vld [vmem:[%s518 + $0xe8] sm:$0xf]
        %v3589 = vld [vmem:[%s518 + $0xec] sm:$0xf]
        %v3590 = vld [vmem:[%s518 + $0xf0] sm:$0xf]
        %v3591 = vld [vmem:[%s518 + $0xf4] sm:$0xf]
        %v3592 = vld [vmem:[%s518 + $0xf8] sm:$0xf]
        %v3593 = vld [vmem:[%s518 + $0xfc] sm:$0xf]
        %v3594 = vld [vmem:[%s518 + $0x100] sm:$0xf]
        %v3595 = vld [vmem:[%s518 + $0x104] sm:$0xf]
        %v3596 = vld [vmem:[%s518 + $0x108] sm:$0xf]
        %v3597 = vld [vmem:[%s518 + $0x10c] sm:$0xf]
        %v3598 = vld [vmem:[%s518 + $0x110] sm:$0xf]
        %v3599 = vld [vmem:[%s518 + $0x114] sm:$0xf]
        %v3600 = vld [vmem:[%s518 + $0x118] sm:$0xf]
        %v3601 = vld [vmem:[%s518 + $0x11c] sm:$0xf]
        %v3602 = vld [vmem:[%s518 + $0x120] sm:$0xf]
        %v3603 = vld [vmem:[%s518 + $0x124] sm:$0xf]
        %v3604 = vld [vmem:[%s518 + $0x128] sm:$0xf]
        %v3605 = vld [vmem:[%s518 + $0x12c] sm:$0xf]
        %v3606 = vld [vmem:[%s518 + $0x130] sm:$0xf]
        %v3607 = vld [vmem:[%s518 + $0x134] sm:$0xf]
        %v3608 = vld [vmem:[%s518 + $0x138] sm:$0xf]
        %v3609 = vld [vmem:[%s518 + $0x13c] sm:$0xf]
        %v3610 = vld [vmem:[%s518 + $0x140] sm:$0xf]
        %v3611 = vld [vmem:[%s518 + $0x144] sm:$0xf]
        %v3612 = vld [vmem:[%s518 + $0x148] sm:$0xf]
        %v3613 = vld [vmem:[%s518 + $0x14c] sm:$0xf]
        %v3614 = vld [vmem:[%s518 + $0x150] sm:$0xf]
        %v3615 = vld [vmem:[%s518 + $0x154] sm:$0xf]
        %v3616 = vld [vmem:[%s518 + $0x158] sm:$0xf]
        %v3617 = vld [vmem:[%s518 + $0x15c] sm:$0xf]
        %v3618 = vld [vmem:[%s518 + $0x160] sm:$0xf]
        %v3619 = vld [vmem:[%s518 + $0x164] sm:$0xf]
        %v3620 = vld [vmem:[%s518 + $0x168] sm:$0xf]
        %v3621 = vld [vmem:[%s518 + $0x16c] sm:$0xf]
        %v3622 = vld [vmem:[%s518 + $0x170] sm:$0xf]
        %v3623 = vld [vmem:[%s518 + $0x174] sm:$0xf]
        %v3624 = vld [vmem:[%s518 + $0x178] sm:$0xf]
        %v3625 = vld [vmem:[%s518 + $0x17c] sm:$0xf]
        %v3626 = vld [vmem:[%s518 + $0x180] sm:$0xf]
        %v3627 = vld [vmem:[%s518 + $0x184] sm:$0xf]
        %v3628 = vld [vmem:[%s518 + $0x188] sm:$0xf]
        %v3629 = vld [vmem:[%s518 + $0x18c] sm:$0xf]
        %v3630 = vld [vmem:[%s518 + $0x190] sm:$0xf]
        %v3631 = vld [vmem:[%s518 + $0x194] sm:$0xf]
        %v3632 = vld [vmem:[%s518 + $0x198] sm:$0xf]
        %v3633 = vld [vmem:[%s518 + $0x19c] sm:$0xf]
        %v3634 = vld [vmem:[%s518 + $0x1a0] sm:$0xf]
        %v3635 = vld [vmem:[%s518 + $0x1a4] sm:$0xf]
        %v3636 = vld [vmem:[%s518 + $0x1a8] sm:$0xf]
        %v3637 = vld [vmem:[%s518 + $0x1ac] sm:$0xf]
        %v3638 = vld [vmem:[%s518 + $0x1b0] sm:$0xf]
        %v3639 = vld [vmem:[%s518 + $0x1b4] sm:$0xf]
        %v3640 = vld [vmem:[%s518 + $0x1b8] sm:$0xf]
        %v3641 = vld [vmem:[%s518 + $0x1bc] sm:$0xf]
        %v3642 = vld [vmem:[%s518 + $0x1c0] sm:$0xf]
        %v3643 = vld [vmem:[%s518 + $0x1c4] sm:$0xf]
        %v3644 = vld [vmem:[%s518 + $0x1c8] sm:$0xf]
        %v3645 = vld [vmem:[%s518 + $0x1cc] sm:$0xf]
        %v3646 = vld [vmem:[%s518 + $0x1d0] sm:$0xf]
        %v3647 = vld [vmem:[%s518 + $0x1d4] sm:$0xf]
        %v3648 = vld [vmem:[%s518 + $0x1d8] sm:$0xf]
        %v3649 = vld [vmem:[%s518 + $0x1dc] sm:$0xf]
        %v3650 = vld [vmem:[%s518 + $0x1e0] sm:$0xf]
        %v3651 = vld [vmem:[%s518 + $0x1e4] sm:$0xf]
        %v3652 = vld [vmem:[%s518 + $0x1e8] sm:$0xf]
        %v3653 = vld [vmem:[%s518 + $0x1ec] sm:$0xf]
        %v3654 = vld [vmem:[%s518 + $0x1f0] sm:$0xf]
        %v3655 = vld [vmem:[%s518 + $0x1f4] sm:$0xf]
        %v3656 = vld [vmem:[%s518 + $0x1f8] sm:$0xf]
        %v3657 = vld [vmem:[%s518 + $0x1fc] sm:$0xf]
        %s3658 = sld [smem:[#allocation3 + $0x1]]
        %v3659 = vstv %s3658
        %v3661 = vcombine.high %v3529, %v3529
        %v3663 = vunpack.c.l.s4 1966171168
        %v3664 = vunpack.c.0.s8 %v3663
        %v3665 = vlaneseq
        %v3666 = vshrl.u32 %v3665, 7
        %v3667 = vsub.s32 %v3664, %v3666
        %v3668 = vrot.slane %v3529, %v3667
        %v3670 = vunpack.c.l.s4 1966171168
        %v3671 = vunpack.c.0.s8 %v3670
        %v3672 = vlaneseq
        %v3673 = vshrl.u32 %v3672, 7
        %v3674 = vsub.s32 %v3671, %v3673
        %v3675 = vrot.slane %v3661, %v3674
        %v3676 = vcombine.high %v3668, %v3668
        %v3677 = vcombine.high %v3675, %v3675
        %v3679 = vunpack.c.l.s4 1966171168
        %v3680 = vunpack.c.0.s8 %v3679
        %v3681 = vlaneseq
        %v3682 = vshrl.u32 %v3681, 7
        %v3683 = vsub.s32 %v3680, %v3682
        %v3684 = vrot.slane %v3668, %v3683
        %v3686 = vunpack.c.l.s4 1966171168
        %v3687 = vunpack.c.0.s8 %v3686
        %v3688 = vlaneseq
        %v3689 = vshrl.u32 %v3688, 7
        %v3690 = vsub.s32 %v3687, %v3689
        %v3691 = vrot.slane %v3675, %v3690
        %v3693 = vunpack.c.l.s4 1966171168
        %v3694 = vunpack.c.0.s8 %v3693
        %v3695 = vlaneseq
        %v3696 = vshrl.u32 %v3695, 7
        %v3697 = vsub.s32 %v3694, %v3696
        %v3698 = vrot.slane %v3676, %v3697
        %v3700 = vunpack.c.l.s4 1966171168
        %v3701 = vunpack.c.0.s8 %v3700
        %v3702 = vlaneseq
        %v3703 = vshrl.u32 %v3702, 7
        %v3704 = vsub.s32 %v3701, %v3703
        %v3705 = vrot.slane %v3677, %v3704
        %v3706 = vcombine.high %v3684, %v3684
        %v3707 = vcombine.high %v3691, %v3691
        %v3708 = vcombine.high %v3698, %v3698
        %v3709 = vcombine.high %v3705, %v3705
        %v3846 = vunpack.c.l.b16 %v3530
        %v3847 = vunpack.c.l.b16 %v3531
        %v3848 = vunpack.c.l.b16 %v3532
        %v3849 = vunpack.c.l.b16 %v3533
        %v3850 = vunpack.c.l.b16 %v3534
        %v3851 = vunpack.c.l.b16 %v3535
        %v3852 = vunpack.c.l.b16 %v3536
        %v3853 = vunpack.c.l.b16 %v3537
        %v3854 = vunpack.c.l.b16 %v3538
        %v3855 = vunpack.c.l.b16 %v3539
        %v3856 = vunpack.c.l.b16 %v3540
        %v3857 = vunpack.c.l.b16 %v3541
        %v3858 = vunpack.c.l.b16 %v3542
        %v3859 = vunpack.c.l.b16 %v3543
        %v3860 = vunpack.c.l.b16 %v3544
        %v3861 = vunpack.c.l.b16 %v3545
        %v3862 = vunpack.c.l.b16 %v3546
        %v3863 = vunpack.c.l.b16 %v3547
        %v3864 = vunpack.c.l.b16 %v3548
        %v3865 = vunpack.c.l.b16 %v3549
        %v3866 = vunpack.c.l.b16 %v3550
        %v3867 = vunpack.c.l.b16 %v3551
        %v3868 = vunpack.c.l.b16 %v3552
        %v3869 = vunpack.c.l.b16 %v3553
        %v3870 = vunpack.c.l.b16 %v3554
        %v3871 = vunpack.c.l.b16 %v3555
        %v3872 = vunpack.c.l.b16 %v3556
        %v3873 = vunpack.c.l.b16 %v3557
        %v3874 = vunpack.c.l.b16 %v3558
        %v3875 = vunpack.c.l.b16 %v3559
        %v3876 = vunpack.c.l.b16 %v3560
        %v3877 = vunpack.c.l.b16 %v3561
        %v3878 = vunpack.c.l.b16 %v3562
        %v3879 = vunpack.c.l.b16 %v3563
        %v3880 = vunpack.c.l.b16 %v3564
        %v3881 = vunpack.c.l.b16 %v3565
        %v3882 = vunpack.c.l.b16 %v3566
        %v3883 = vunpack.c.l.b16 %v3567
        %v3884 = vunpack.c.l.b16 %v3568
        %v3885 = vunpack.c.l.b16 %v3569
        %v3886 = vunpack.c.l.b16 %v3570
        %v3887 = vunpack.c.l.b16 %v3571
        %v3888 = vunpack.c.l.b16 %v3572
        %v3889 = vunpack.c.l.b16 %v3573
        %v3890 = vunpack.c.l.b16 %v3574
        %v3891 = vunpack.c.l.b16 %v3575
        %v3892 = vunpack.c.l.b16 %v3576
        %v3893 = vunpack.c.l.b16 %v3577
        %v3894 = vunpack.c.l.b16 %v3578
        %v3895 = vunpack.c.l.b16 %v3579
        %v3896 = vunpack.c.l.b16 %v3580
        %v3897 = vunpack.c.l.b16 %v3581
        %v3898 = vunpack.c.l.b16 %v3582
        %v3899 = vunpack.c.l.b16 %v3583
        %v3900 = vunpack.c.l.b16 %v3584
        %v3901 = vunpack.c.l.b16 %v3585
        %v3902 = vunpack.c.l.b16 %v3586
        %v3903 = vunpack.c.l.b16 %v3587
        %v3904 = vunpack.c.l.b16 %v3588
        %v3905 = vunpack.c.l.b16 %v3589
        %v3906 = vunpack.c.l.b16 %v3590
        %v3907 = vunpack.c.l.b16 %v3591
        %v3908 = vunpack.c.l.b16 %v3592
        %v3909 = vunpack.c.l.b16 %v3593
        %v3910 = vunpack.c.l.b16 %v3594
        %v3911 = vunpack.c.l.b16 %v3595
        %v3912 = vunpack.c.l.b16 %v3596
        %v3913 = vunpack.c.l.b16 %v3597
        %v3914 = vunpack.c.l.b16 %v3598
        %v3915 = vunpack.c.l.b16 %v3599
        %v3916 = vunpack.c.l.b16 %v3600
        %v3917 = vunpack.c.l.b16 %v3601
        %v3918 = vunpack.c.l.b16 %v3602
        %v3919 = vunpack.c.l.b16 %v3603
        %v3920 = vunpack.c.l.b16 %v3604
        %v3921 = vunpack.c.l.b16 %v3605
        %v3922 = vunpack.c.l.b16 %v3606
        %v3923 = vunpack.c.l.b16 %v3607
        %v3924 = vunpack.c.l.b16 %v3608
        %v3925 = vunpack.c.l.b16 %v3609
        %v3926 = vunpack.c.l.b16 %v3610
        %v3927 = vunpack.c.l.b16 %v3611
        %v3928 = vunpack.c.l.b16 %v3612
        %v3929 = vunpack.c.l.b16 %v3613
        %v3930 = vunpack.c.l.b16 %v3614
        %v3931 = vunpack.c.l.b16 %v3615
        %v3932 = vunpack.c.l.b16 %v3616
        %v3933 = vunpack.c.l.b16 %v3617
        %v3934 = vunpack.c.l.b16 %v3618
        %v3935 = vunpack.c.l.b16 %v3619
        %v3936 = vunpack.c.l.b16 %v3620
        %v3937 = vunpack.c.l.b16 %v3621
        %v3938 = vunpack.c.l.b16 %v3622
        %v3939 = vunpack.c.l.b16 %v3623
        %v3940 = vunpack.c.l.b16 %v3624
        %v3941 = vunpack.c.l.b16 %v3625
        %v3942 = vunpack.c.l.b16 %v3626
        %v3943 = vunpack.c.l.b16 %v3627
        %v3944 = vunpack.c.l.b16 %v3628
        %v3945 = vunpack.c.l.b16 %v3629
        %v3946 = vunpack.c.l.b16 %v3630
        %v3947 = vunpack.c.l.b16 %v3631
        %v3948 = vunpack.c.l.b16 %v3632
        %v3949 = vunpack.c.l.b16 %v3633
        %v3950 = vunpack.c.l.b16 %v3634
        %v3951 = vunpack.c.l.b16 %v3635
        %v3952 = vunpack.c.l.b16 %v3636
        %v3953 = vunpack.c.l.b16 %v3637
        %v3954 = vunpack.c.l.b16 %v3638
        %v3955 = vunpack.c.l.b16 %v3639
        %v3956 = vunpack.c.l.b16 %v3640
        %v3957 = vunpack.c.l.b16 %v3641
        %v3958 = vunpack.c.l.b16 %v3642
        %v3959 = vunpack.c.l.b16 %v3643
        %v3960 = vunpack.c.l.b16 %v3644
        %v3961 = vunpack.c.l.b16 %v3645
        %v3962 = vunpack.c.l.b16 %v3646
        %v3963 = vunpack.c.l.b16 %v3647
        %v3964 = vunpack.c.l.b16 %v3648
        %v3965 = vunpack.c.l.b16 %v3649
        %v3966 = vunpack.c.l.b16 %v3650
        %v3967 = vunpack.c.l.b16 %v3651
        %v3968 = vunpack.c.l.b16 %v3652
        %v3969 = vunpack.c.l.b16 %v3653
        %v3970 = vunpack.c.l.b16 %v3654
        %v3971 = vunpack.c.l.b16 %v3655
        %v3972 = vunpack.c.l.b16 %v3656
        %v3973 = vunpack.c.l.b16 %v3657
        %v3974 = vpack.c.b16 %v3847, %v3846
        %v3975 = vpack.c.b16 %v3849, %v3848
        %v3976 = vpack.c.b16 %v3851, %v3850
        %v3977 = vpack.c.b16 %v3853, %v3852
        %v3978 = vpack.c.b16 %v3855, %v3854
        %v3979 = vpack.c.b16 %v3857, %v3856
        %v3980 = vpack.c.b16 %v3859, %v3858
        %v3981 = vpack.c.b16 %v3861, %v3860
        %v3982 = vpack.c.b16 %v3863, %v3862
        %v3983 = vpack.c.b16 %v3865, %v3864
        %v3984 = vpack.c.b16 %v3867, %v3866
        %v3985 = vpack.c.b16 %v3869, %v3868
        %v3986 = vpack.c.b16 %v3871, %v3870
        %v3987 = vpack.c.b16 %v3873, %v3872
        %v3988 = vpack.c.b16 %v3875, %v3874
        %v3989 = vpack.c.b16 %v3877, %v3876
        %v3990 = vpack.c.b16 %v3879, %v3878
        %v3991 = vpack.c.b16 %v3881, %v3880
        %v3992 = vpack.c.b16 %v3883, %v3882
        %v3993 = vpack.c.b16 %v3885, %v3884
        %v3994 = vpack.c.b16 %v3887, %v3886
        %v3995 = vpack.c.b16 %v3889, %v3888
        %v3996 = vpack.c.b16 %v3891, %v3890
        %v3997 = vpack.c.b16 %v3893, %v3892
        %v3998 = vpack.c.b16 %v3895, %v3894
        %v3999 = vpack.c.b16 %v3897, %v3896
        %v4000 = vpack.c.b16 %v3899, %v3898
        %v4001 = vpack.c.b16 %v3901, %v3900
        %v4002 = vpack.c.b16 %v3903, %v3902
        %v4003 = vpack.c.b16 %v3905, %v3904
        %v4004 = vpack.c.b16 %v3907, %v3906
        %v4005 = vpack.c.b16 %v3909, %v3908
        %v4006 = vpack.c.b16 %v3911, %v3910
        %v4007 = vpack.c.b16 %v3913, %v3912
        %v4008 = vpack.c.b16 %v3915, %v3914
        %v4009 = vpack.c.b16 %v3917, %v3916
        %v4010 = vpack.c.b16 %v3919, %v3918
        %v4011 = vpack.c.b16 %v3921, %v3920
        %v4012 = vpack.c.b16 %v3923, %v3922
        %v4013 = vpack.c.b16 %v3925, %v3924
        %v4014 = vpack.c.b16 %v3927, %v3926
        %v4015 = vpack.c.b16 %v3929, %v3928
        %v4016 = vpack.c.b16 %v3931, %v3930
        %v4017 = vpack.c.b16 %v3933, %v3932
        %v4018 = vpack.c.b16 %v3935, %v3934
        %v4019 = vpack.c.b16 %v3937, %v3936
        %v4020 = vpack.c.b16 %v3939, %v3938
        %v4021 = vpack.c.b16 %v3941, %v3940
        %v4022 = vpack.c.b16 %v3943, %v3942
        %v4023 = vpack.c.b16 %v3945, %v3944
        %v4024 = vpack.c.b16 %v3947, %v3946
        %v4025 = vpack.c.b16 %v3949, %v3948
        %v4026 = vpack.c.b16 %v3951, %v3950
        %v4027 = vpack.c.b16 %v3953, %v3952
        %v4028 = vpack.c.b16 %v3955, %v3954
        %v4029 = vpack.c.b16 %v3957, %v3956
        %v4030 = vpack.c.b16 %v3959, %v3958
        %v4031 = vpack.c.b16 %v3961, %v3960
        %v4032 = vpack.c.b16 %v3963, %v3962
        %v4033 = vpack.c.b16 %v3965, %v3964
        %v4034 = vpack.c.b16 %v3967, %v3966
        %v4035 = vpack.c.b16 %v3969, %v3968
        %v4036 = vpack.c.b16 %v3971, %v3970
        %v4037 = vpack.c.b16 %v3973, %v3972
        %4102 = vmatprep.subr.bf16.mxu0 0
        %4103 = vmatpush1.bf16.msra.mxu0 %v3974
        %4104 = vmatprep.subr.bf16.mxu0 0
        %4105 = vmatpush1.bf16.msra.mxu0 %v3975
        %4106 = vmatprep.subr.bf16.mxu0 0
        %4107 = vmatpush1.bf16.msra.mxu0 %v3976
        %4108 = vmatprep.subr.bf16.mxu0 0
        %4109 = vmatpush1.bf16.msra.mxu0 %v3977
        %4110 = vmatprep.subr.bf16.mxu0 0
        %4111 = vmatpush1.bf16.msra.mxu0 %v3978
        %4112 = vmatprep.subr.bf16.mxu0 0
        %4113 = vmatpush1.bf16.msra.mxu0 %v3979
        %4114 = vmatprep.subr.bf16.mxu0 0
        %4115 = vmatpush1.bf16.msra.mxu0 %v3980
        %4116 = vmatprep.subr.bf16.mxu0 0
        %4117 = vmatpush1.bf16.msra.mxu0 %v3981
        %4118 = vmatprep.subr.bf16.mxu0 0
        %4119 = vmatpush1.bf16.msra.mxu0 %v3982
        %4120 = vmatprep.subr.bf16.mxu0 0
        %4121 = vmatpush1.bf16.msra.mxu0 %v3983
        %4122 = vmatprep.subr.bf16.mxu0 0
        %4123 = vmatpush1.bf16.msra.mxu0 %v3984
        %4124 = vmatprep.subr.bf16.mxu0 0
        %4125 = vmatpush1.bf16.msra.mxu0 %v3985
        %4126 = vmatprep.subr.bf16.mxu0 0
        %4127 = vmatpush1.bf16.msra.mxu0 %v3986
        %4128 = vmatprep.subr.bf16.mxu0 0
        %4129 = vmatpush1.bf16.msra.mxu0 %v3987
        %4130 = vmatprep.subr.bf16.mxu0 0
        %4131 = vmatpush1.bf16.msra.mxu0 %v3988
        %4132 = vmatprep.subr.bf16.mxu0 0
        %4133 = vmatpush1.bf16.msra.mxu0 %v3989
        %4134 = vmatprep.mubr.bf16.mxu0 %v3698
        %4135 = vmatmul.mubr.bf16.gmra.mrb[0].mxu0 %v3684
        %v4136 = vpop.f32.mrb[0].mxu0
        %v4137 = vadd.f32 %v3659, %v4136
        %v4138 = vpop.f32.mrb[0].mxu0
        %v4139 = vpop.f32.mrb[0].mxu0
        %v4140 = vpop.f32.mrb[0].mxu0
        %4141 = vdwg.mxu0
        %4142 = vmatprep.subr.bf16.mxu0 0
        %4143 = vmatpush1.bf16.msra.mxu0 %v3990
        %4144 = vmatprep.subr.bf16.mxu0 0
        %4145 = vmatpush1.bf16.msra.mxu0 %v3991
        %4146 = vmatprep.subr.bf16.mxu0 0
        %4147 = vmatpush1.bf16.msra.mxu0 %v3992
        %4148 = vmatprep.subr.bf16.mxu0 0
        %4149 = vmatpush1.bf16.msra.mxu0 %v3993
        %4150 = vmatprep.subr.bf16.mxu0 0
        %4151 = vmatpush1.bf16.msra.mxu0 %v3994
        %4152 = vmatprep.subr.bf16.mxu0 0
        %4153 = vmatpush1.bf16.msra.mxu0 %v3995
        %4154 = vmatprep.subr.bf16.mxu0 0
        %4155 = vmatpush1.bf16.msra.mxu0 %v3996
        %4156 = vmatprep.subr.bf16.mxu0 0
        %4157 = vmatpush1.bf16.msra.mxu0 %v3997
        %4158 = vmatprep.subr.bf16.mxu0 0
        %4159 = vmatpush1.bf16.msra.mxu0 %v3998
        %4160 = vmatprep.subr.bf16.mxu0 0
        %4161 = vmatpush1.bf16.msra.mxu0 %v3999
        %4162 = vmatprep.subr.bf16.mxu0 0
        %4163 = vmatpush1.bf16.msra.mxu0 %v4000
        %4164 = vmatprep.subr.bf16.mxu0 0
        %4165 = vmatpush1.bf16.msra.mxu0 %v4001
        %4166 = vmatprep.subr.bf16.mxu0 0
        %4167 = vmatpush1.bf16.msra.mxu0 %v4002
        %4168 = vmatprep.subr.bf16.mxu0 0
        %4169 = vmatpush1.bf16.msra.mxu0 %v4003
        %4170 = vmatprep.subr.bf16.mxu0 0
        %4171 = vmatpush1.bf16.msra.mxu0 %v4004
        %4172 = vmatprep.subr.bf16.mxu0 0
        %4173 = vmatpush1.bf16.msra.mxu0 %v4005
        %4174 = vmatprep.mubr.bf16.mxu0 %v3708
        %4175 = vmatmul.mubr.bf16.gmra.mrb[0].mxu0 %v3706
        %v4176 = vpop.f32.mrb[0].mxu0
        %v4177 = vadd.f32 %v4137, %v4176
        %v4178 = vpop.f32.mrb[0].mxu0
        %v4179 = vpop.f32.mrb[0].mxu0
        %v4180 = vpop.f32.mrb[0].mxu0
        %4181 = vdwg.mxu0
        %4182 = vmatprep.subr.bf16.mxu0 0
        %4183 = vmatpush1.bf16.msra.mxu0 %v4006
        %4184 = vmatprep.subr.bf16.mxu0 0
        %4185 = vmatpush1.bf16.msra.mxu0 %v4007
        %4186 = vmatprep.subr.bf16.mxu0 0
        %4187 = vmatpush1.bf16.msra.mxu0 %v4008
        %4188 = vmatprep.subr.bf16.mxu0 0
        %4189 = vmatpush1.bf16.msra.mxu0 %v4009
        %4190 = vmatprep.subr.bf16.mxu0 0
        %4191 = vmatpush1.bf16.msra.mxu0 %v4010
        %4192 = vmatprep.subr.bf16.mxu0 0
        %4193 = vmatpush1.bf16.msra.mxu0 %v4011
        %4194 = vmatprep.subr.bf16.mxu0 0
        %4195 = vmatpush1.bf16.msra.mxu0 %v4012
        %4196 = vmatprep.subr.bf16.mxu0 0
        %4197 = vmatpush1.bf16.msra.mxu0 %v4013
        %4198 = vmatprep.subr.bf16.mxu0 0
        %4199 = vmatpush1.bf16.msra.mxu0 %v4014
        %4200 = vmatprep.subr.bf16.mxu0 0
        %4201 = vmatpush1.bf16.msra.mxu0 %v4015
        %4202 = vmatprep.subr.bf16.mxu0 0
        %4203 = vmatpush1.bf16.msra.mxu0 %v4016
        %4204 = vmatprep.subr.bf16.mxu0 0
        %4205 = vmatpush1.bf16.msra.mxu0 %v4017
        %4206 = vmatprep.subr.bf16.mxu0 0
        %4207 = vmatpush1.bf16.msra.mxu0 %v4018
        %4208 = vmatprep.subr.bf16.mxu0 0
        %4209 = vmatpush1.bf16.msra.mxu0 %v4019
        %4210 = vmatprep.subr.bf16.mxu0 0
        %4211 = vmatpush1.bf16.msra.mxu0 %v4020
        %4212 = vmatprep.subr.bf16.mxu0 0
        %4213 = vmatpush1.bf16.msra.mxu0 %v4021
        %4214 = vmatprep.mubr.bf16.mxu0 %v3705
        %4215 = vmatmul.mubr.bf16.gmra.mrb[0].mxu0 %v3691
        %v4216 = vpop.f32.mrb[0].mxu0
        %v4217 = vadd.f32 %v4177, %v4216
        %v4218 = vpop.f32.mrb[0].mxu0
        %v4219 = vpop.f32.mrb[0].mxu0
        %v4220 = vpop.f32.mrb[0].mxu0
        %4221 = vdwg.mxu0
        %4222 = vmatprep.subr.bf16.mxu0 0
        %4223 = vmatpush1.bf16.msra.mxu0 %v4022
        %4224 = vmatprep.subr.bf16.mxu0 0
        %4225 = vmatpush1.bf16.msra.mxu0 %v4023
        %4226 = vmatprep.subr.bf16.mxu0 0
        %4227 = vmatpush1.bf16.msra.mxu0 %v4024
        %4228 = vmatprep.subr.bf16.mxu0 0
        %4229 = vmatpush1.bf16.msra.mxu0 %v4025
        %4230 = vmatprep.subr.bf16.mxu0 0
        %4231 = vmatpush1.bf16.msra.mxu0 %v4026
        %4232 = vmatprep.subr.bf16.mxu0 0
        %4233 = vmatpush1.bf16.msra.mxu0 %v4027
        %4234 = vmatprep.subr.bf16.mxu0 0
        %4235 = vmatpush1.bf16.msra.mxu0 %v4028
        %4236 = vmatprep.subr.bf16.mxu0 0
        %4237 = vmatpush1.bf16.msra.mxu0 %v4029
        %4238 = vmatprep.subr.bf16.mxu0 0
        %4239 = vmatpush1.bf16.msra.mxu0 %v4030
        %4240 = vmatprep.subr.bf16.mxu0 0
        %4241 = vmatpush1.bf16.msra.mxu0 %v4031
        %4242 = vmatprep.subr.bf16.mxu0 0
        %4243 = vmatpush1.bf16.msra.mxu0 %v4032
        %4244 = vmatprep.subr.bf16.mxu0 0
        %4245 = vmatpush1.bf16.msra.mxu0 %v4033
        %4246 = vmatprep.subr.bf16.mxu0 0
        %4247 = vmatpush1.bf16.msra.mxu0 %v4034
        %4248 = vmatprep.subr.bf16.mxu0 0
        %4249 = vmatpush1.bf16.msra.mxu0 %v4035
        %4250 = vmatprep.subr.bf16.mxu0 0
        %4251 = vmatpush1.bf16.msra.mxu0 %v4036
        %4252 = vmatprep.subr.bf16.mxu0 0
        %4253 = vmatpush1.bf16.msra.mxu0 %v4037
        %4254 = vmatprep.mubr.bf16.mxu0 %v3709
        %4255 = vmatmul.mubr.bf16.gmra.mrb[0].mxu0 %v3707
        %v4256 = vpop.f32.mrb[0].mxu0
        %v4257 = vadd.f32 %v4217, %v4256
        %v4258 = vpop.f32.mrb[0].mxu0
        %v4259 = vpop.f32.mrb[0].mxu0
        %v4260 = vpop.f32.mrb[0].mxu0
        %4261 = vdwg.mxu0
        %4262 = vst [vmem:[%s590] sm:$0x3] %v4257
        %s4263 = sld [smem:[#allocation7 + $0x1]]
        %v4264 = vstv %s4263
        %v4265 = vmul.f32 %v4257, %v4264
        %v4266 = vadd.f32 %v3528, %v4265
        %v4267 = vld [vmem:[#allocation15] sm:$0x3]
        %v4268 = vld [vmem:[%s531] sm:$0xf]
        %v4269 = vld [vmem:[%s531 + $0x4] sm:$0xf]
        %v4270 = vld [vmem:[%s531 + $0x8] sm:$0xf]
        %v4271 = vld [vmem:[%s531 + $0xc] sm:$0xf]
        %v4272 = vld [vmem:[%s531 + $0x10] sm:$0xf]
        %v4273 = vld [vmem:[%s531 + $0x14] sm:$0xf]
        %v4274 = vld [vmem:[%s531 + $0x18] sm:$0xf]
        %v4275 = vld [vmem:[%s531 + $0x1c] sm:$0xf]
        %v4276 = vld [vmem:[%s531 + $0x20] sm:$0xf]
        %v4277 = vld [vmem:[%s531 + $0x24] sm:$0xf]
        %v4278 = vld [vmem:[%s531 + $0x28] sm:$0xf]
        %v4279 = vld [vmem:[%s531 + $0x2c] sm:$0xf]
        %v4280 = vld [vmem:[%s531 + $0x30] sm:$0xf]
        %v4281 = vld [vmem:[%s531 + $0x34] sm:$0xf]
        %v4282 = vld [vmem:[%s531 + $0x38] sm:$0xf]
        %v4283 = vld [vmem:[%s531 + $0x3c] sm:$0xf]
        %v4284 = vld [vmem:[%s531 + $0x40] sm:$0xf]
        %v4285 = vld [vmem:[%s531 + $0x44] sm:$0xf]
        %v4286 = vld [vmem:[%s531 + $0x48] sm:$0xf]
        %v4287 = vld [vmem:[%s531 + $0x4c] sm:$0xf]
        %v4288 = vld [vmem:[%s531 + $0x50] sm:$0xf]
        %v4289 = vld [vmem:[%s531 + $0x54] sm:$0xf]
        %v4290 = vld [vmem:[%s531 + $0x58] sm:$0xf]
        %v4291 = vld [vmem:[%s531 + $0x5c] sm:$0xf]
        %v4292 = vld [vmem:[%s531 + $0x60] sm:$0xf]
        %v4293 = vld [vmem:[%s531 + $0x64] sm:$0xf]
        %v4294 = vld [vmem:[%s531 + $0x68] sm:$0xf]
        %v4295 = vld [vmem:[%s531 + $0x6c] sm:$0xf]
        %v4296 = vld [vmem:[%s531 + $0x70] sm:$0xf]
        %v4297 = vld [vmem:[%s531 + $0x74] sm:$0xf]
        %v4298 = vld [vmem:[%s531 + $0x78] sm:$0xf]
        %v4299 = vld [vmem:[%s531 + $0x7c] sm:$0xf]
        %s4300 = sld [smem:[#allocation3 + $0x2]]
        %v4301 = vstv %s4300
        %v4304 = vunpack.c.l.s4 1966171168
        %v4305 = vunpack.c.0.s8 %v4304
        %v4306 = vlaneseq
        %v4307 = vshrl.u32 %v4306, 7
        %v4308 = vsub.s32 %v4305, %v4307
        %v4309 = vrot.slane %v4267, %v4308
        %v4310 = vcombine.high %v4309, %v4309
        %v4312 = vunpack.c.l.s4 1966171168
        %v4313 = vunpack.c.0.s8 %v4312
        %v4314 = vlaneseq
        %v4315 = vshrl.u32 %v4314, 7
        %v4316 = vsub.s32 %v4313, %v4315
        %v4317 = vrot.slane %v4309, %v4316
        %v4319 = vunpack.c.l.s4 1966171168
        %v4320 = vunpack.c.0.s8 %v4319
        %v4321 = vlaneseq
        %v4322 = vshrl.u32 %v4321, 7
        %v4323 = vsub.s32 %v4320, %v4322
        %v4324 = vrot.slane %v4310, %v4323
        %v4359 = vunpack.c.l.b16 %v4268
        %v4360 = vunpack.c.l.b16 %v4269
        %v4361 = vunpack.c.l.b16 %v4270
        %v4362 = vunpack.c.l.b16 %v4271
        %v4363 = vunpack.c.l.b16 %v4272
        %v4364 = vunpack.c.l.b16 %v4273
        %v4365 = vunpack.c.l.b16 %v4274
        %v4366 = vunpack.c.l.b16 %v4275
        %v4367 = vunpack.c.l.b16 %v4276
        %v4368 = vunpack.c.l.b16 %v4277
        %v4369 = vunpack.c.l.b16 %v4278
        %v4370 = vunpack.c.l.b16 %v4279
        %v4371 = vunpack.c.l.b16 %v4280
        %v4372 = vunpack.c.l.b16 %v4281
        %v4373 = vunpack.c.l.b16 %v4282
        %v4374 = vunpack.c.l.b16 %v4283
        %v4375 = vunpack.c.l.b16 %v4284
        %v4376 = vunpack.c.l.b16 %v4285
        %v4377 = vunpack.c.l.b16 %v4286
        %v4378 = vunpack.c.l.b16 %v4287
        %v4379 = vunpack.c.l.b16 %v4288
        %v4380 = vunpack.c.l.b16 %v4289
        %v4381 = vunpack.c.l.b16 %v4290
        %v4382 = vunpack.c.l.b16 %v4291
        %v4383 = vunpack.c.l.b16 %v4292
        %v4384 = vunpack.c.l.b16 %v4293
        %v4385 = vunpack.c.l.b16 %v4294
        %v4386 = vunpack.c.l.b16 %v4295
        %v4387 = vunpack.c.l.b16 %v4296
        %v4388 = vunpack.c.l.b16 %v4297
        %v4389 = vunpack.c.l.b16 %v4298
        %v4390 = vunpack.c.l.b16 %v4299
        %v4391 = vpack.c.b16 %v4360, %v4359
        %v4392 = vpack.c.b16 %v4362, %v4361
        %v4393 = vpack.c.b16 %v4364, %v4363
        %v4394 = vpack.c.b16 %v4366, %v4365
        %v4395 = vpack.c.b16 %v4368, %v4367
        %v4396 = vpack.c.b16 %v4370, %v4369
        %v4397 = vpack.c.b16 %v4372, %v4371
        %v4398 = vpack.c.b16 %v4374, %v4373
        %v4399 = vpack.c.b16 %v4376, %v4375
        %v4400 = vpack.c.b16 %v4378, %v4377
        %v4401 = vpack.c.b16 %v4380, %v4379
        %v4402 = vpack.c.b16 %v4382, %v4381
        %v4403 = vpack.c.b16 %v4384, %v4383
        %v4404 = vpack.c.b16 %v4386, %v4385
        %v4405 = vpack.c.b16 %v4388, %v4387
        %v4406 = vpack.c.b16 %v4390, %v4389
        %4423 = vmatprep.subr.bf16.mxu0 0
        %4424 = vmatpush1.bf16.msra.mxu0 %v4391
        %4425 = vmatprep.subr.bf16.mxu0 0
        %4426 = vmatpush1.bf16.msra.mxu0 %v4392
        %4427 = vmatprep.subr.bf16.mxu0 0
        %4428 = vmatpush1.bf16.msra.mxu0 %v4393
        %4429 = vmatprep.subr.bf16.mxu0 0
        %4430 = vmatpush1.bf16.msra.mxu0 %v4394
        %4431 = vmatprep.subr.bf16.mxu0 0
        %4432 = vmatpush1.bf16.msra.mxu0 %v4395
        %4433 = vmatprep.subr.bf16.mxu0 0
        %4434 = vmatpush1.bf16.msra.mxu0 %v4396
        %4435 = vmatprep.subr.bf16.mxu0 0
        %4436 = vmatpush1.bf16.msra.mxu0 %v4397
        %4437 = vmatprep.subr.bf16.mxu0 0
        %4438 = vmatpush1.bf16.msra.mxu0 %v4398
        %4439 = vmatprep.subr.bf16.mxu0 0
        %4440 = vmatpush1.bf16.msra.mxu0 %v4399
        %4441 = vmatprep.subr.bf16.mxu0 0
        %4442 = vmatpush1.bf16.msra.mxu0 %v4400
        %4443 = vmatprep.subr.bf16.mxu0 0
        %4444 = vmatpush1.bf16.msra.mxu0 %v4401
        %4445 = vmatprep.subr.bf16.mxu0 0
        %4446 = vmatpush1.bf16.msra.mxu0 %v4402
        %4447 = vmatprep.subr.bf16.mxu0 0
        %4448 = vmatpush1.bf16.msra.mxu0 %v4403
        %4449 = vmatprep.subr.bf16.mxu0 0
        %4450 = vmatpush1.bf16.msra.mxu0 %v4404
        %4451 = vmatprep.subr.bf16.mxu0 0
        %4452 = vmatpush1.bf16.msra.mxu0 %v4405
        %4453 = vmatprep.subr.bf16.mxu0 0
        %4454 = vmatpush1.bf16.msra.mxu0 %v4406
        %4455 = vmatprep.mubr.bf16.mxu0 %v4324
        %4456 = vmatmul.mubr.bf16.gmra.mrb[0].mxu0 %v4317
        %v4457 = vpop.f32.mrb[0].mxu0
        %v4458 = vadd.f32 %v4301, %v4457
        %v4459 = vpop.f32.mrb[0].mxu0
        %v4460 = vpop.f32.mrb[0].mxu0
        %v4461 = vpop.f32.mrb[0].mxu0
        %4462 = vdwg.mxu0
        %4463 = vst [vmem:[%s597] sm:$0x3] %v4458
        %s4464 = sld [smem:[#allocation7 + $0x2]]
        %v4465 = vstv %s4464
        %v4466 = vmul.f32 %v4458, %v4465
        %v4467 = vadd.f32 %v4266, %v4466
        %s4468 = sld [smem:[#allocation2]]
        %v4469 = vstv %s4468
        %v4470 = vadd.f32 %v4467, %v4469
        %4471 = vst [vmem:[%s576] sm:$0x3] %v4470
        %s4472 = sand.u32 %s258, 1
        %s4473 = scalar_lea.sflag [#allocation5], %s4472
        %s4474 = sand.u32 %s258, 1
        %s4475 = smul.addr %s4474, 2
        %s4476 = scalar_lea.vmem [#allocation18], %s4475
        %s4477 = sand.u32 %s46, 1
        %s4478 = scalar_lea.sflag [#allocation20], %s4477
        %s4479 = sand.u32 %s284, 1
        %s4480 = smul.addr %s4479, 2
        %s4481 = scalar_lea.vmem [#allocation19], %s4480
        %s4482 = sand.u32 %s46, 1
        %s4483 = scalar_lea.sflag [#allocation20], %s4482
        %s4484 = sand.u32 %s310, 1
        %s4485 = smul.addr %s4484, 2
        %s4486 = scalar_lea.vmem [#allocation21], %s4485
        %s4487 = sand.u32 %s336, 1
        %s4488 = scalar_lea.sflag [#allocation23], %s4487
        %s4489 = sand.u32 %s336, 1
        %s4490 = smul.addr %s4489, 2
        %s4491 = scalar_lea.vmem [#allocation22], %s4490
        // Predicated region
        $region89: #{tpu_custom_call.1} parent=55 // pred_check
          %p4492 = pneg %p268
        $region90: #{tpu_custom_call.1} parent=55 // pred_check_branch
          %4494 = sbr.rel (%p4492) target = $region92
        $region91: #{tpu_custom_call.1} parent=55 // pred_region
          %s4496 = ssub.s32 32, 32
          %4497 = vsyncadd %s4473, %s4496
          %s4498 = smul.addr %s46, 32
          %s4499 = scalar_lea.hbm %s9, %s4498
          %s4501 = sshll.u32 %s4476, 4
          %s4502 = int_to_ptr.vmem [resolvable:$true] %s4501
          %4504 = dma.vmem_to_hbm [thread:$0]  %s4502, 32, %s4499, %s4473
        $region92: #{tpu_custom_call.1} parent=55 // pred_fallthru
          _
        // Predicated region
        $region93: #{tpu_custom_call.1} parent=55 // pred_check
          %p4505 = pneg %p294
        $region94: #{tpu_custom_call.1} parent=55 // pred_check_branch
          %4507 = sbr.rel (%p4505) target = $region96
        $region95: #{tpu_custom_call.1} parent=55 // pred_region
          %s4509 = ssub.s32 32, 32
          %4510 = vsyncadd %s4478, %s4509
          %s4511 = smul.addr %s46, 32
          %s4512 = scalar_lea.hbm %s10, %s4511
          %s4514 = sshll.u32 %s4481, 4
          %s4515 = int_to_ptr.vmem [resolvable:$true] %s4514
          %4517 = dma.vmem_to_hbm [thread:$0]  %s4515, 32, %s4512, %s4478
        $region96: #{tpu_custom_call.1} parent=55 // pred_fallthru
          _
        // Predicated region
        $region97: #{tpu_custom_call.1} parent=55 // pred_check
          %p4518 = pneg %p320
        $region98: #{tpu_custom_call.1} parent=55 // pred_check_branch
          %4520 = sbr.rel (%p4518) target = $region100
        $region99: #{tpu_custom_call.1} parent=55 // pred_region
          %s4522 = ssub.s32 32, 32
          %4523 = vsyncadd %s4483, %s4522
          %s4524 = smul.addr %s46, 32
          %s4525 = scalar_lea.hbm %s11, %s4524
          %s4527 = sshll.u32 %s4486, 4
          %s4528 = int_to_ptr.vmem [resolvable:$true] %s4527
          %4530 = dma.vmem_to_hbm [thread:$0]  %s4528, 32, %s4525, %s4483
        $region100: #{tpu_custom_call.1} parent=55 // pred_fallthru
          _
        // Predicated region
        $region101: #{tpu_custom_call.1} parent=55 // pred_check
          %p4531 = pneg %p346
        $region102: #{tpu_custom_call.1} parent=55 // pred_check_branch
          %4533 = sbr.rel (%p4531) target = $region104
        $region103: #{tpu_custom_call.1} parent=55 // pred_region
          %s4535 = ssub.s32 32, 32
          %4536 = vsyncadd %s4488, %s4535
          %s4537 = smul.addr %s46, 32
          %s4538 = scalar_lea.hbm %s12, %s4537
          %s4540 = sshll.u32 %s4491, 4
          %s4541 = int_to_ptr.vmem [resolvable:$true] %s4540
          %4543 = dma.vmem_to_hbm [thread:$0]  %s4541, 32, %s4538, %s4488
        $region104: #{tpu_custom_call.1} parent=55 // pred_fallthru
          _
      $region56: #{tpu_custom_call.1} parent=5 // pred_fallthru
        _
      %p4544 = scmp.le.s32.totalorder 2, %s41
      // Predicated region
      $region105: #{tpu_custom_call.1} parent=5 // pred_check
        %p4545 = pneg %p4544
      $region106: #{tpu_custom_call.1} parent=5 // pred_check_branch
        %4547 = sbr.rel (%p4545) target = $region108
      $region107: #{tpu_custom_call.1} parent=5 // pred_region
        %s4548 = ssub.s32 %s41, 2
        // Predicated region
        $region109: #{tpu_custom_call.1} parent=107 // pred_check
          %p4549 = pneg %p274
        $region110: #{tpu_custom_call.1} parent=107 // pred_check_branch
          %4551 = sbr.rel (%p4549) target = $region112
        $region111: #{tpu_custom_call.1} parent=107 // pred_region
          %s4552 = sand.u32 %s259, 1
          %s4553 = scalar_lea.sflag [#allocation5], %s4552
          %s4554 = sand.u32 %s259, 1
          %s4555 = smul.addr %s4554, 2
          %s4556 = scalar_lea.vmem [#allocation18], %s4555
          %4557 = dma.done %s4553, 32
        $region112: #{tpu_custom_call.1} parent=107 // pred_fallthru
          _
        // Predicated region
        $region113: #{tpu_custom_call.1} parent=107 // pred_check
          %p4558 = pneg %p300
        $region114: #{tpu_custom_call.1} parent=107 // pred_check_branch
          %4560 = sbr.rel (%p4558) target = $region116
        $region115: #{tpu_custom_call.1} parent=107 // pred_region
          %s4561 = sand.u32 %s47, 1
          %s4562 = scalar_lea.sflag [#allocation20], %s4561
          %s4563 = sand.u32 %s285, 1
          %s4564 = smul.addr %s4563, 2
          %s4565 = scalar_lea.vmem [#allocation19], %s4564
          %4566 = dma.done %s4562, 32
        $region116: #{tpu_custom_call.1} parent=107 // pred_fallthru
          _
        // Predicated region
        $region117: #{tpu_custom_call.1} parent=107 // pred_check
          %p4567 = pneg %p326
        $region118: #{tpu_custom_call.1} parent=107 // pred_check_branch
          %4569 = sbr.rel (%p4567) target = $region120
        $region119: #{tpu_custom_call.1} parent=107 // pred_region
          %s4570 = sand.u32 %s47, 1
          %s4571 = scalar_lea.sflag [#allocation20], %s4570
          %s4572 = sand.u32 %s311, 1
          %s4573 = smul.addr %s4572, 2
          %s4574 = scalar_lea.vmem [#allocation21], %s4573
          %4575 = dma.done %s4571, 32
        $region120: #{tpu_custom_call.1} parent=107 // pred_fallthru
          _
        // Predicated region
        $region121: #{tpu_custom_call.1} parent=107 // pred_check
          %p4576 = pneg %p352
        $region122: #{tpu_custom_call.1} parent=107 // pred_check_branch
          %4578 = sbr.rel (%p4576) target = $region124
        $region123: #{tpu_custom_call.1} parent=107 // pred_region
          %s4579 = sand.u32 %s337, 1
          %s4580 = scalar_lea.sflag [#allocation23], %s4579
          %s4581 = sand.u32 %s337, 1
          %s4582 = smul.addr %s4581, 2
          %s4583 = scalar_lea.vmem [#allocation22], %s4582
          %4584 = dma.done %s4580, 32
        $region124: #{tpu_custom_call.1} parent=107 // pred_fallthru
          _
      $region108: #{tpu_custom_call.1} parent=5 // pred_fallthru
        _
    $region6: #{tpu_custom_call.1} parent=1 // loop_footer
      %s45 = sadd.s32 1, %s41
    $region7: #{tpu_custom_call.1} parent=1 // loop_footer_branch
      %40 = sbr.rel target = $region3
    $region8: #{tpu_custom_call.1} parent=1 // loop_exit
      _
    %4585 = vsyncpa [#allocation4], 1
    %s4586 = scalar_lea.sflag [#allocation4], 1
    %4587 = vsyncpa %s4586, 1
    %4588 = vsyncpa [#allocation11], 1
    %s4589 = scalar_lea.sflag [#allocation11], 1
    %4590 = vsyncpa %s4589, 1
    %4591 = vsyncpa [#allocation14], 1
    %s4592 = scalar_lea.sflag [#allocation14], 1
    %4593 = vsyncpa %s4592, 1
    %4594 = vsyncpa [#allocation17], 1
    %s4595 = scalar_lea.sflag [#allocation17], 1
    %4596 = vsyncpa %s4595, 1
    %4597 = vsyncpa [#allocation5], 1
    %s4598 = scalar_lea.sflag [#allocation5], 1
    %4599 = vsyncpa %s4598, 1
    %4600 = vsyncpa [#allocation20], 1
    %s4601 = scalar_lea.sflag [#allocation20], 1
    %4602 = vsyncpa %s4601, 1
    %4603 = vsyncpa [#allocation23], 1
    %s4604 = scalar_lea.sflag [#allocation23], 1
    %4605 = vsyncpa %s4604, 1
    %4606 = vsyncpa [#allocation6], 1
    %s4607 = scalar_lea.sflag [#allocation6], 1
    %4608 = vsyncpa %s4607, 1
    %4609 = vsyncpa [#allocation8], 1

</llo_original>
